<compile_context>
chip_gen: v6e
topology: v6e:2x2x1
jax: 0.10.0
libtpu: 0.0.40
codegen_flags: <defaults>
</compile_context>

<pallas_src>
import jax
import jax.numpy as jnp
from jax.experimental import pallas as pl
from jax.experimental.pallas import tpu as pltpu


# ----------------------------------------------------------------------------
# helpers
# ----------------------------------------------------------------------------
def _round_up(x, m):
    return (x + m - 1) // m * m


def _vmem_limit_bytes(frac=0.8, fallback=128 * 1024 * 1024):
    """Generation-aware scoped-VMEM budget (~80% of physical capacity)."""
    try:
        cap = pltpu.get_tpu_info().vmem_capacity_bytes
    except Exception:
        cap = fallback
    return max(32 * 1024 * 1024, int(cap * frac))


def _pad_gate_cols(w, H, Hp):
    """Pad each gate's H-wide column block of a (..., 4H) array to Hp."""
    if Hp == H:
        return w
    lead = w.shape[:-1]
    w4 = w.reshape(*lead, 4, H)
    w4 = jnp.pad(w4, [(0, 0)] * len(lead) + [(0, 0), (0, Hp - H)])
    return w4.reshape(*lead, 4 * Hp)


# ----------------------------------------------------------------------------
# Kernel 1: LSTM recurrence (batch-parallel, time-chunked)
# ----------------------------------------------------------------------------
def lstm_chunk_kernel(x_ref, h0_ref, c0_ref, wih_ref, whh_ref, bg_ref,
                      hseq_ref, h_n_ref, c_n_ref,
                      gates_ref):
    """One grid step == one (batch block, time chunk).

    x_ref:     (Bb, T, E)    embedded inputs for this chunk (mxu dtype)
    h0/c0_ref: (Bb, Hp)      initial state (consumed only at chunk 0), f32
    wih_ref:   (E, 4Hp)      input->gates weights (pre-transposed, gate-padded)
    whh_ref:   (Hp, 4Hp)     hidden->gates weights
    bg_ref:    (1, 4Hp)      b_ih + b_hh (gate-padded), f32
    hseq_ref:  (Bb, T, Hp)   hidden states for this chunk (mxu dtype)
    h_n/c_n:   (Bb, Hp)      resident output blocks; double as the state carry
    gates_ref: (Bb, T, 4Hp)  VMEM scratch for the hoisted input projection, f32
    """
    c_idx = pl.program_id(1)
    Bb, T, E = x_ref.shape
    Hp = h_n_ref.shape[1]

    # ---- hoisted input projection + bias: one big MXU matmul per chunk ----
    x2d = x_ref[...].reshape(Bb * T, E)
    gates_ref[...] = (
        jnp.dot(x2d, wih_ref[...], preferred_element_type=jnp.float32)
        + bg_ref[...]
    ).reshape(Bb, T, 4 * Hp)

    # ---- state carry lives in the resident (constant-index) output blocks -
    @pl.when(c_idx == 0)
    def _():
        h_n_ref[...] = h0_ref[...]
        c_n_ref[...] = c0_ref[...]

    # ---- sequential recurrence: only (Bb,Hp)@(Hp,4Hp) on the critical path.
    def step(t, carry):
        h, c = carry
        g = gates_ref[:, pl.ds(t, 1), :].reshape(Bb, 4 * Hp) + jnp.dot(
            h.astype(whh_ref.dtype), whh_ref[...],
            preferred_element_type=jnp.float32)
        # PyTorch gate order: input, forget, cell(g), output.  Hp is a
        # multiple of 128, so every slice is lane-aligned (no XLU shuffles).
        i_g = jax.nn.sigmoid(g[:, 0 * Hp:1 * Hp])
        f_g = jax.nn.sigmoid(g[:, 1 * Hp:2 * Hp])
        g_g = jnp.tanh(g[:, 2 * Hp:3 * Hp])
        o_g = jax.nn.sigmoid(g[:, 3 * Hp:4 * Hp])
        c = f_g * c + i_g * g_g
        h = o_g * jnp.tanh(c)
        hseq_ref[:, pl.ds(t, 1), :] = h.astype(hseq_ref.dtype)[:, None, :]
        return (h, c)

    h, c = jax.lax.fori_loop(0, T, step, (h_n_ref[...], c_n_ref[...]),
                             unroll=(T <= 16))
    h_n_ref[...] = h
    c_n_ref[...] = c


# ----------------------------------------------------------------------------
# Kernel 2: dense head, standard tiled matmul (vocab streamed, never resident)
# ----------------------------------------------------------------------------
def dense_head_kernel(h_ref, wd_ref, bd_ref, out_ref):
    out_ref[...] = (
        jnp.dot(h_ref[...], wd_ref[...], preferred_element_type=jnp.float32)
        + bd_ref[...]
    ).astype(out_ref.dtype)


# ----------------------------------------------------------------------------
# Forward wrapper == RNNModule.forward
# ----------------------------------------------------------------------------
def rnn_forward(x_tokens, prev_state, params, *,
                t_chunk=None, b_block=None,
                mxu_dtype=jnp.bfloat16,           # bf16-native MXU on all gens
                logits_dtype=jnp.float32,         # set bf16 to halve writeback
                return_padded_logits=False):
    """Equivalent of RNNModule.forward.

    x_tokens:   (B, S) int32 token ids
    prev_state: (h0, c0), each (1, B, H) float32
    returns:    logits (B, S, V) logits_dtype, (h_n, c_n) each (1, B, H) f32
    """
    emb_table = params["embedding"]          # (V, E)
    wih_t = params["wih_t"]                  # (E, 4H)
    whh_t = params["whh_t"]                  # (H, 4H)
    b_gates = params["b_gates"]              # (1, 4H)
    wd_t = params["wd_t"]                    # (H, V)
    bd = params["bd"]                        # (1, V)

    B, S = x_tokens.shape
    E = emb_table.shape[1]
    H = whh_t.shape[0]
    V = wd_t.shape[1]
    Hp = _round_up(H, 128)                   # lane-aligned gate blocks

    # ---- batch blocking (parallel grid axis; feeds v7x's 2 TensorCores) ----
    if b_block is None:
        b_block = B // 2 if (B % 16 == 0) else B
    assert B % b_block == 0
    assert b_block % 8 == 0 or b_block == B, "batch block must be 8-aligned"

    # ---- time chunking: size Bb*T to fill the MXU M dimension -------------
    if t_chunk is None:
        t_chunk = S
        for cand in (8, 16, 32, 64, 128, 256):
            if S % cand == 0 and b_block * cand >= 256:
                t_chunk = cand
                break
    assert S % t_chunk == 0, "t_chunk must divide S"
    assert t_chunk % 8 == 0 or t_chunk == S, "partial chunks must be 8-aligned"
    n_chunks = S // t_chunk

    vmem_limit = _vmem_limit_bytes()

    # ---- embedding gather (plain-JAX glue), cast MXU operands once --------
    # TODO(synk): fuse the gather into the kernel via scalar prefetch.
    embed = emb_table[x_tokens].astype(mxu_dtype)            # (B, S, E)

    # ---- per-gate Hp padding of the recurrent weights (cheap, done per call
    # here; in production prepare once).  Padded lanes stay zero. -----------
    wih_p = _pad_gate_cols(wih_t, H, Hp).astype(mxu_dtype)           # (E,4Hp)
    whh_p = _pad_gate_cols(jnp.pad(whh_t, ((0, Hp - H), (0, 0))),
                           H, Hp).astype(mxu_dtype)                  # (Hp,4Hp)
    bg_p = _pad_gate_cols(b_gates, H, Hp)                            # (1,4Hp)
    h0 = jnp.pad(prev_state[0][0], ((0, 0), (0, Hp - H)))            # (B,Hp)
    c0 = jnp.pad(prev_state[1][0], ((0, 0), (0, Hp - H)))            # (B,Hp)

    # =========================== LSTM kernel ===============================
    const = lambda b, c: (0, 0)
    bat = lambda b, c: (b, 0)
    hseq, h_n, c_n = pl.pallas_call(
        lstm_chunk_kernel,
        grid_spec=pltpu.PrefetchScalarGridSpec(
            num_scalar_prefetch=0,
            grid=(B // b_block, n_chunks),
            in_specs=[
                pl.BlockSpec((b_block, t_chunk, E), lambda b, c: (b, c, 0)),
                pl.BlockSpec((b_block, Hp), bat),            # h0
                pl.BlockSpec((b_block, Hp), bat),            # c0
                pl.BlockSpec((E, 4 * Hp), const),            # W_ih^T (padded)
                pl.BlockSpec((Hp, 4 * Hp), const),           # W_hh^T (padded)
                pl.BlockSpec((1, 4 * Hp), const),            # b_ih + b_hh
            ],
            out_specs=[
                pl.BlockSpec((b_block, t_chunk, Hp), lambda b, c: (b, c, 0)),
                pl.BlockSpec((b_block, Hp), bat),            # h_n (carry)
                pl.BlockSpec((b_block, Hp), bat),            # c_n (carry)
            ],
            scratch_shapes=[
                pltpu.VMEM((b_block, t_chunk, 4 * Hp), jnp.float32),
            ],
        ),
        out_shape=(
            jax.ShapeDtypeStruct((B, S, Hp), mxu_dtype),
            jax.ShapeDtypeStruct((B, Hp), jnp.float32),
            jax.ShapeDtypeStruct((B, Hp), jnp.float32),
        ),
        compiler_params=pltpu.CompilerParams(
            # batch axis parallel (megacore), time axis sequential.
            dimension_semantics=("parallel", "arbitrary"),
            vmem_limit_bytes=vmem_limit,
        ),
    )(embed, h0, c0, wih_p, whh_p, bg_p)

    # =========================== dense head ================================
    M = B * S
    # M tile: fill the MXU M dimension, must divide M (or take M whole).
    if M <= 512:
        tm = M
    else:
        tm = M
        for cand in (512, 256, 128, 64, 32, 16, 8):
            if M % cand == 0:
                tm = cand
                break
    # vocab tiling: lane-dense tiles; only pad when we actually tile.
    if V % 128 == 0:
        Vp = V
        tn = 512 if V % 512 == 0 else (256 if V % 256 == 0 else 128)
    elif V <= 2048:
        Vp, tn = V, V                       # single full-extent block, no pad
    else:
        Vp = _round_up(V, 128)
        tn = 512 if Vp % 512 == 0 else (256 if Vp % 256 == 0 else 128)

    wd_p = wd_t if (Vp == V) else jnp.pad(wd_t, ((0, 0), (0, Vp - V)))
    bd_p = bd if (Vp == V) else jnp.pad(bd, ((0, 0), (0, Vp - V)))
    wd_p = jnp.pad(wd_p, ((0, Hp - H), (0, 0))).astype(mxu_dtype)    # (Hp,Vp)

    h2d = hseq.reshape(M, Hp)                                        # free

    logits2d = pl.pallas_call(
        dense_head_kernel,
        grid_spec=pltpu.PrefetchScalarGridSpec(
            num_scalar_prefetch=0,
            grid=(M // tm, Vp // tn),
            in_specs=[
                pl.BlockSpec((tm, Hp), lambda m, n: (m, 0)),
                pl.BlockSpec((Hp, tn), lambda m, n: (0, n)),   # wd streamed
                pl.BlockSpec((1, tn), lambda m, n: (0, n)),
            ],
            out_specs=pl.BlockSpec((tm, tn), lambda m, n: (m, n)),
        ),
        out_shape=jax.ShapeDtypeStruct((M, Vp), logits_dtype),
        compiler_params=pltpu.CompilerParams(
            dimension_semantics=("parallel", "parallel"),
            vmem_limit_bytes=vmem_limit,
        ),
    )(h2d, wd_p, bd_p)

    logits = logits2d.reshape(B, S, Vp)
    if Vp != V and not return_padded_logits:
        # TODO(synk): prefer return_padded_logits=True and mask the padded
        # columns in the loss -- avoids an extra full HBM pass at large vocab.
        logits = logits[:, :, :V]

    h_out = h_n[:, :H][None]                 # tiny slices of the padded state
    c_out = c_n[:, :H][None]
    return logits, (h_out, c_out)


# ----------------------------------------------------------------------------
# Pure-JAX reference (matches PyTorch nn.LSTM(batch_first=True) + Linear)
# ----------------------------------------------------------------------------
def reference_forward(x_tokens, prev_state, params):
    emb = params["embedding"][x_tokens]             # (B, S, E)
    H = params["whh_t"].shape[0]
    h = prev_state[0][0]
    c = prev_state[1][0]
    outs = []
    for t in range(x_tokens.shape[1]):
        x_t = emb[:, t, :]
        gates = x_t @ params["wih_t"] + h @ params["whh_t"] + params["b_gates"]
        i_g = jax.nn.sigmoid(gates[:, 0 * H:1 * H])
        f_g = jax.nn.sigmoid(gates[:, 1 * H:2 * H])
        g_g = jnp.tanh(gates[:, 2 * H:3 * H])
        o_g = jax.nn.sigmoid(gates[:, 3 * H:4 * H])
        c = f_g * c + i_g * g_g
        h = o_g * jnp.tanh(c)
        outs.append(h @ params["wd_t"] + params["bd"])
    logits = jnp.stack(outs, axis=1)
    return logits, (h[None], c[None])


def init_params(key, n_vocab, embedding_size, lstm_size):
    ks = jax.random.split(key, 7)
    scale = 0.1
    return {
        "embedding": scale * jax.random.normal(
            ks[0], (n_vocab, embedding_size), jnp.float32),
        # Stored pre-transposed: (in, 4H) so kernels do x @ W directly.
        "wih_t": scale * jax.random.normal(
            ks[1], (embedding_size, 4 * lstm_size), jnp.float32),
        "whh_t": scale * jax.random.normal(
            ks[2], (lstm_size, 4 * lstm_size), jnp.float32),
        # b_ih + b_hh folded into a single bias row.
        "b_gates": scale * jax.random.normal(
            ks[3], (1, 4 * lstm_size), jnp.float32)
        + scale * jax.random.normal(ks[4], (1, 4 * lstm_size), jnp.float32),
        "wd_t": scale * jax.random.normal(
            ks[5], (lstm_size, n_vocab), jnp.float32),
        "bd": scale * jax.random.normal(ks[6], (1, n_vocab), jnp.float32),
    }


if __name__ == "__main__":
    # Small shapes consistent with the module's forward.
    n_vocab = 50
    seq_size = 16          # two 8-step chunks: exercises the chunked carry
    embedding_size = 32
    lstm_size = 32
    batch_size = 8         # fills the 8 sublanes of the (B, Hp) state blocks

    key = jax.random.PRNGKey(0)
    k_param, k_tok = jax.random.split(key)

    params = init_params(k_param, n_vocab, embedding_size, lstm_size)

    x = jax.random.randint(k_tok, (batch_size, seq_size), 0, n_vocab,
                           dtype=jnp.int32)
    # zero_state(batch_size)
    prev_state = (jnp.zeros((1, batch_size, lstm_size), jnp.float32),
                  jnp.zeros((1, batch_size, lstm_size), jnp.float32))

    ref_logits, (ref_h, ref_c) = reference_forward(x, prev_state, params)

    # ---- exact-path check: f32 MXU operands, tight tolerance ---------------
    logits, (h_n, c_n) = rnn_forward(x, prev_state, params, t_chunk=8,
                                     mxu_dtype=jnp.float32)
    jax.block_until_ready((logits, h_n, c_n))
    assert logits.shape == (batch_size, seq_size, n_vocab)
    assert jnp.allclose(logits, ref_logits, atol=1e-4, rtol=1e-4)
    assert jnp.allclose(h_n, ref_h, atol=1e-4, rtol=1e-4)
    assert jnp.allclose(c_n, ref_c, atol=1e-4, rtol=1e-4)

    # ---- default fast path: bf16 MXU operands, loose tolerance expected ----
    logits_bf, (h_bf, c_bf) = rnn_forward(x, prev_state, params, t_chunk=8)
    jax.block_until_ready((logits_bf, h_bf, c_bf))
    assert logits_bf.shape == (batch_size, seq_size, n_vocab)
    assert jnp.allclose(logits_bf.astype(jnp.float32), ref_logits,
                        atol=1e-1, rtol=1e-1)

    print("KERNEL_OK")
</pallas_src>

<mosaic_0001>
module attributes {stable_mosaic.version = 11 : i64} {
  func.func @lstm_chunk_kernel(%arg0: i32, %arg1: i32, %arg2: memref<8x8x32xf32, #tpu.memory_space<vmem>>, %arg3: memref<8x128xf32, #tpu.memory_space<vmem>>, %arg4: memref<8x128xf32, #tpu.memory_space<vmem>>, %arg5: memref<32x512xf32, #tpu.memory_space<vmem>>, %arg6: memref<128x512xf32, #tpu.memory_space<vmem>>, %arg7: memref<1x512xf32, #tpu.memory_space<vmem>>, %arg8: memref<8x8x128xf32, #tpu.memory_space<vmem>>, %arg9: memref<8x128xf32, #tpu.memory_space<vmem>>, %arg10: memref<8x128xf32, #tpu.memory_space<vmem>>, %arg11: memref<8x8x512xf32, #tpu.memory_space<vmem>>) attributes {dimension_semantics = [#tpu.dimension_semantics<parallel>, #tpu.dimension_semantics<arbitrary>], iteration_bounds = array<i64: 1, 2>, scalar_prefetch = 0 : i64, scratch_operands = 1 : i64, tpu.core_type = #tpu.core_type<tc>, window_params = [{transform_indices = @transform_0, window_bounds = array<i64: 8, 8, 32>}, {transform_indices = @transform_1, window_bounds = array<i64: 8, 128>}, {transform_indices = @transform_2, window_bounds = array<i64: 8, 128>}, {pipeline_mode = #tpu.pipeline_mode<synchronous>, transform_indices = @transform_3, window_bounds = array<i64: 32, 512>}, {pipeline_mode = #tpu.pipeline_mode<synchronous>, transform_indices = @transform_4, window_bounds = array<i64: 128, 512>}, {pipeline_mode = #tpu.pipeline_mode<synchronous>, transform_indices = @transform_5, window_bounds = array<i64: 1, 512>}, {transform_indices = @transform_6, window_bounds = array<i64: 8, 8, 128>}, {transform_indices = @transform_7, window_bounds = array<i64: 8, 128>}, {transform_indices = @transform_8, window_bounds = array<i64: 8, 128>}]} {
    %c0 = arith.constant 0 : index
    %c0_0 = arith.constant 0 : index
    %c0_1 = arith.constant 0 : index
    %0 = vector.load %arg2[%c0, %c0_0, %c0_1] : memref<8x8x32xf32, #tpu.memory_space<vmem>>, vector<8x8x32xf32>
    %1 = vector.shape_cast %0 : vector<8x8x32xf32> to vector<64x32xf32>
    %c0_2 = arith.constant 0 : index
    %c0_3 = arith.constant 0 : index
    %2 = vector.load %arg5[%c0_2, %c0_3] : memref<32x512xf32, #tpu.memory_space<vmem>>, vector<32x512xf32>
    %cst = arith.constant dense<0.000000e+00> : vector<64x512xf32>
    %3 = tpu.matmul %1, %2, %cst {dimension_numbers = #tpu.dot_dimension_numbers<[1], [0], [0], [1], [0, 0, 1, 1], [], []>} : vector<64x32xf32>, vector<32x512xf32>, vector<64x512xf32> -> vector<64x512xf32>
    %c0_4 = arith.constant 0 : index
    %c0_5 = arith.constant 0 : index
    %4 = vector.load %arg7[%c0_4, %c0_5] : memref<1x512xf32, #tpu.memory_space<vmem>>, vector<1x512xf32>
    %5 = vector.broadcast %4 : vector<1x512xf32> to vector<64x512xf32>
    %6 = arith.addf %3, %5 : vector<64x512xf32>
    %7 = vector.shape_cast %6 : vector<64x512xf32> to vector<8x8x512xf32>
    %c0_6 = arith.constant 0 : index
    %c0_7 = arith.constant 0 : index
    %c0_8 = arith.constant 0 : index
    %8 = vector.load %arg11[%c0_6, %c0_7, %c0_8] : memref<8x8x512xf32, #tpu.memory_space<vmem>>, vector<8x8x512xf32>
    tpu.vector_store %arg11[%c0_6, %c0_7, %c0_8], %7 {strides = array<i32>} : memref<8x8x512xf32, #tpu.memory_space<vmem>>, vector<8x8x512xf32>,
    %c0_i32 = arith.constant 0 : i32
    %9 = arith.cmpi eq, %arg1, %c0_i32 : i32
    %10 = arith.extui %9 : i1 to i32
    %c0_i32_9 = arith.constant 0 : i32
    %11 = arith.cmpi ne, %10, %c0_i32_9 : i32
    scf.if %11 {
      %c0_99 = arith.constant 0 : index
      %c0_100 = arith.constant 0 : index
      %288 = vector.load %arg3[%c0_99, %c0_100] : memref<8x128xf32, #tpu.memory_space<vmem>>, vector<8x128xf32>
      %c0_101 = arith.constant 0 : index
      %c0_102 = arith.constant 0 : index
      %289 = vector.load %arg9[%c0_101, %c0_102] : memref<8x128xf32, #tpu.memory_space<vmem>>, vector<8x128xf32>
      tpu.vector_store %arg9[%c0_101, %c0_102], %288 {strides = array<i32>} : memref<8x128xf32, #tpu.memory_space<vmem>>, vector<8x128xf32>,
      %c0_103 = arith.constant 0 : index
      %c0_104 = arith.constant 0 : index
      %290 = vector.load %arg4[%c0_103, %c0_104] : memref<8x128xf32, #tpu.memory_space<vmem>>, vector<8x128xf32>
      %c0_105 = arith.constant 0 : index
      %c0_106 = arith.constant 0 : index
      %291 = vector.load %arg10[%c0_105, %c0_106] : memref<8x128xf32, #tpu.memory_space<vmem>>, vector<8x128xf32>
      tpu.vector_store %arg10[%c0_105, %c0_106], %290 {strides = array<i32>} : memref<8x128xf32, #tpu.memory_space<vmem>>, vector<8x128xf32>,
    } else {
    }
    %c0_10 = arith.constant 0 : index
    %c0_11 = arith.constant 0 : index
    %12 = vector.load %arg9[%c0_10, %c0_11] : memref<8x128xf32, #tpu.memory_space<vmem>>, vector<8x128xf32>
    %c0_12 = arith.constant 0 : index
    %c0_13 = arith.constant 0 : index
    %13 = vector.load %arg10[%c0_12, %c0_13] : memref<8x128xf32, #tpu.memory_space<vmem>>, vector<8x128xf32>
    %c0_i32_14 = arith.constant 0 : i32
    %c0_15 = arith.constant 0 : index
    %14 = arith.index_cast %c0_i32_14 : i32 to index
    %c0_16 = arith.constant 0 : index
    %15 = vector.load %arg11[%c0_15, %14, %c0_16] : memref<8x8x512xf32, #tpu.memory_space<vmem>>, vector<8x1x512xf32>
    %16 = vector.shape_cast %15 : vector<8x1x512xf32> to vector<8x512xf32>
    %c0_17 = arith.constant 0 : index
    %c0_18 = arith.constant 0 : index
    %17 = vector.load %arg6[%c0_17, %c0_18] : memref<128x512xf32, #tpu.memory_space<vmem>>, vector<128x512xf32>
    %cst_19 = arith.constant dense<0.000000e+00> : vector<8x512xf32>
    %18 = tpu.matmul %12, %17, %cst_19 {dimension_numbers = #tpu.dot_dimension_numbers<[1], [0], [0], [1], [0, 0, 1, 1], [], []>} : vector<8x128xf32>, vector<128x512xf32>, vector<8x512xf32> -> vector<8x512xf32>
    %19 = arith.addf %16, %18 : vector<8x512xf32>
    %20 = vector.extract_strided_slice %19 {offsets = [0, 0], sizes = [8, 128], strides = [1, 1]} : vector<8x512xf32> to vector<8x128xf32>
    %21 = arith.negf %20 : vector<8x128xf32>
    %22 = math.exp %21 : vector<8x128xf32>
    %cst_20 = arith.constant 1.000000e+00 : f32
    %23 = vector.broadcast %cst_20 : f32 to vector<8x128xf32>
    %24 = arith.addf %23, %22 : vector<8x128xf32>
    %25 = arith.divf %23, %24 : vector<8x128xf32>
    %26 = vector.extract_strided_slice %19 {offsets = [0, 128], sizes = [8, 128], strides = [1, 1]} : vector<8x512xf32> to vector<8x128xf32>
    %27 = arith.negf %26 : vector<8x128xf32>
    %28 = math.exp %27 : vector<8x128xf32>
    %cst_21 = arith.constant 1.000000e+00 : f32
    %29 = vector.broadcast %cst_21 : f32 to vector<8x128xf32>
    %30 = arith.addf %29, %28 : vector<8x128xf32>
    %31 = arith.divf %29, %30 : vector<8x128xf32>
    %32 = vector.extract_strided_slice %19 {offsets = [0, 256], sizes = [8, 128], strides = [1, 1]} : vector<8x512xf32> to vector<8x128xf32>
    %33 = math.tanh %32 : vector<8x128xf32>
    %34 = vector.extract_strided_slice %19 {offsets = [0, 384], sizes = [8, 128], strides = [1, 1]} : vector<8x512xf32> to vector<8x128xf32>
    %35 = arith.negf %34 : vector<8x128xf32>
    %36 = math.exp %35 : vector<8x128xf32>
    %cst_22 = arith.constant 1.000000e+00 : f32
    %37 = vector.broadcast %cst_22 : f32 to vector<8x128xf32>
    %38 = arith.addf %37, %36 : vector<8x128xf32>
    %39 = arith.divf %37, %38 : vector<8x128xf32>
    %40 = arith.mulf %31, %13 : vector<8x128xf32>
    %41 = arith.mulf %25, %33 : vector<8x128xf32>
    %42 = arith.addf %40, %41 : vector<8x128xf32>
    %43 = math.tanh %42 : vector<8x128xf32>
    %44 = arith.mulf %39, %43 : vector<8x128xf32>
    %45 = vector.shape_cast %44 : vector<8x128xf32> to vector<8x1x128xf32>
    %c0_23 = arith.constant 0 : index
    %46 = arith.index_cast %c0_i32_14 : i32 to index
    %c0_24 = arith.constant 0 : index
    %47 = vector.load %arg8[%c0_23, %46, %c0_24] : memref<8x8x128xf32, #tpu.memory_space<vmem>>, vector<8x1x128xf32>
    tpu.vector_store %arg8[%c0_23, %46, %c0_24], %45 {strides = array<i32>} : memref<8x8x128xf32, #tpu.memory_space<vmem>>, vector<8x1x128xf32>,
    %c1_i32 = arith.constant 1 : i32
    %c0_25 = arith.constant 0 : index
    %48 = arith.index_cast %c1_i32 : i32 to index
    %c0_26 = arith.constant 0 : index
    %49 = vector.load %arg11[%c0_25, %48, %c0_26] : memref<8x8x512xf32, #tpu.memory_space<vmem>>, vector<8x1x512xf32>
    %50 = vector.shape_cast %49 : vector<8x1x512xf32> to vector<8x512xf32>
    %c0_27 = arith.constant 0 : index
    %c0_28 = arith.constant 0 : index
    %51 = vector.load %arg6[%c0_27, %c0_28] : memref<128x512xf32, #tpu.memory_space<vmem>>, vector<128x512xf32>
    %cst_29 = arith.constant dense<0.000000e+00> : vector<8x512xf32>
    %52 = tpu.matmul %44, %51, %cst_29 {dimension_numbers = #tpu.dot_dimension_numbers<[1], [0], [0], [1], [0, 0, 1, 1], [], []>} : vector<8x128xf32>, vector<128x512xf32>, vector<8x512xf32> -> vector<8x512xf32>
    %53 = arith.addf %50, %52 : vector<8x512xf32>
    %54 = vector.extract_strided_slice %53 {offsets = [0, 0], sizes = [8, 128], strides = [1, 1]} : vector<8x512xf32> to vector<8x128xf32>
    %55 = arith.negf %54 : vector<8x128xf32>
    %56 = math.exp %55 : vector<8x128xf32>
    %cst_30 = arith.constant 1.000000e+00 : f32
    %57 = vector.broadcast %cst_30 : f32 to vector<8x128xf32>
    %58 = arith.addf %57, %56 : vector<8x128xf32>
    %59 = arith.divf %57, %58 : vector<8x128xf32>
    %60 = vector.extract_strided_slice %53 {offsets = [0, 128], sizes = [8, 128], strides = [1, 1]} : vector<8x512xf32> to vector<8x128xf32>
    %61 = arith.negf %60 : vector<8x128xf32>
    %62 = math.exp %61 : vector<8x128xf32>
    %cst_31 = arith.constant 1.000000e+00 : f32
    %63 = vector.broadcast %cst_31 : f32 to vector<8x128xf32>
    %64 = arith.addf %63, %62 : vector<8x128xf32>
    %65 = arith.divf %63, %64 : vector<8x128xf32>
    %66 = vector.extract_strided_slice %53 {offsets = [0, 256], sizes = [8, 128], strides = [1, 1]} : vector<8x512xf32> to vector<8x128xf32>
    %67 = math.tanh %66 : vector<8x128xf32>
    %68 = vector.extract_strided_slice %53 {offsets = [0, 384], sizes = [8, 128], strides = [1, 1]} : vector<8x512xf32> to vector<8x128xf32>
    %69 = arith.negf %68 : vector<8x128xf32>
    %70 = math.exp %69 : vector<8x128xf32>
    %cst_32 = arith.constant 1.000000e+00 : f32
    %71 = vector.broadcast %cst_32 : f32 to vector<8x128xf32>
    %72 = arith.addf %71, %70 : vector<8x128xf32>
    %73 = arith.divf %71, %72 : vector<8x128xf32>
    %74 = arith.mulf %65, %42 : vector<8x128xf32>
    %75 = arith.mulf %59, %67 : vector<8x128xf32>
    %76 = arith.addf %74, %75 : vector<8x128xf32>
    %77 = math.tanh %76 : vector<8x128xf32>
    %78 = arith.mulf %73, %77 : vector<8x128xf32>
    %79 = vector.shape_cast %78 : vector<8x128xf32> to vector<8x1x128xf32>
    %c0_33 = arith.constant 0 : index
    %80 = arith.index_cast %c1_i32 : i32 to index
    %c0_34 = arith.constant 0 : index
    %81 = vector.load %arg8[%c0_33, %80, %c0_34] : memref<8x8x128xf32, #tpu.memory_space<vmem>>, vector<8x1x128xf32>
    tpu.vector_store %arg8[%c0_33, %80, %c0_34], %79 {strides = array<i32>} : memref<8x8x128xf32, #tpu.memory_space<vmem>>, vector<8x1x128xf32>,
    %c2_i32 = arith.constant 2 : i32
    %c0_35 = arith.constant 0 : index
    %82 = arith.index_cast %c2_i32 : i32 to index
    %c0_36 = arith.constant 0 : index
    %83 = vector.load %arg11[%c0_35, %82, %c0_36] : memref<8x8x512xf32, #tpu.memory_space<vmem>>, vector<8x1x512xf32>
    %84 = vector.shape_cast %83 : vector<8x1x512xf32> to vector<8x512xf32>
    %c0_37 = arith.constant 0 : index
    %c0_38 = arith.constant 0 : index
    %85 = vector.load %arg6[%c0_37, %c0_38] : memref<128x512xf32, #tpu.memory_space<vmem>>, vector<128x512xf32>
    %cst_39 = arith.constant dense<0.000000e+00> : vector<8x512xf32>
    %86 = tpu.matmul %78, %85, %cst_39 {dimension_numbers = #tpu.dot_dimension_numbers<[1], [0], [0], [1], [0, 0, 1, 1], [], []>} : vector<8x128xf32>, vector<128x512xf32>, vector<8x512xf32> -> vector<8x512xf32>
    %87 = arith.addf %84, %86 : vector<8x512xf32>
    %88 = vector.extract_strided_slice %87 {offsets = [0, 0], sizes = [8, 128], strides = [1, 1]} : vector<8x512xf32> to vector<8x128xf32>
    %89 = arith.negf %88 : vector<8x128xf32>
    %90 = math.exp %89 : vector<8x128xf32>
    %cst_40 = arith.constant 1.000000e+00 : f32
    %91 = vector.broadcast %cst_40 : f32 to vector<8x128xf32>
    %92 = arith.addf %91, %90 : vector<8x128xf32>
    %93 = arith.divf %91, %92 : vector<8x128xf32>
    %94 = vector.extract_strided_slice %87 {offsets = [0, 128], sizes = [8, 128], strides = [1, 1]} : vector<8x512xf32> to vector<8x128xf32>
    %95 = arith.negf %94 : vector<8x128xf32>
    %96 = math.exp %95 : vector<8x128xf32>
    %cst_41 = arith.constant 1.000000e+00 : f32
    %97 = vector.broadcast %cst_41 : f32 to vector<8x128xf32>
    %98 = arith.addf %97, %96 : vector<8x128xf32>
    %99 = arith.divf %97, %98 : vector<8x128xf32>
    %100 = vector.extract_strided_slice %87 {offsets = [0, 256], sizes = [8, 128], strides = [1, 1]} : vector<8x512xf32> to vector<8x128xf32>
    %101 = math.tanh %100 : vector<8x128xf32>
    %102 = vector.extract_strided_slice %87 {offsets = [0, 384], sizes = [8, 128], strides = [1, 1]} : vector<8x512xf32> to vector<8x128xf32>
    %103 = arith.negf %102 : vector<8x128xf32>
    %104 = math.exp %103 : vector<8x128xf32>
    %cst_42 = arith.constant 1.000000e+00 : f32
    %105 = vector.broadcast %cst_42 : f32 to vector<8x128xf32>
    %106 = arith.addf %105, %104 : vector<8x128xf32>
    %107 = arith.divf %105, %106 : vector<8x128xf32>
    %108 = arith.mulf %99, %76 : vector<8x128xf32>
    %109 = arith.mulf %93, %101 : vector<8x128xf32>
    %110 = arith.addf %108, %109 : vector<8x128xf32>
    %111 = math.tanh %110 : vector<8x128xf32>
    %112 = arith.mulf %107, %111 : vector<8x128xf32>
    %113 = vector.shape_cast %112 : vector<8x128xf32> to vector<8x1x128xf32>
    %c0_43 = arith.constant 0 : index
    %114 = arith.index_cast %c2_i32 : i32 to index
    %c0_44 = arith.constant 0 : index
    %115 = vector.load %arg8[%c0_43, %114, %c0_44] : memref<8x8x128xf32, #tpu.memory_space<vmem>>, vector<8x1x128xf32>
    tpu.vector_store %arg8[%c0_43, %114, %c0_44], %113 {strides = array<i32>} : memref<8x8x128xf32, #tpu.memory_space<vmem>>, vector<8x1x128xf32>,
    %c3_i32 = arith.constant 3 : i32
    %c0_45 = arith.constant 0 : index
    %116 = arith.index_cast %c3_i32 : i32 to index
    %c0_46 = arith.constant 0 : index
    %117 = vector.load %arg11[%c0_45, %116, %c0_46] : memref<8x8x512xf32, #tpu.memory_space<vmem>>, vector<8x1x512xf32>
    %118 = vector.shape_cast %117 : vector<8x1x512xf32> to vector<8x512xf32>
    %c0_47 = arith.constant 0 : index
    %c0_48 = arith.constant 0 : index
    %119 = vector.load %arg6[%c0_47, %c0_48] : memref<128x512xf32, #tpu.memory_space<vmem>>, vector<128x512xf32>
    %cst_49 = arith.constant dense<0.000000e+00> : vector<8x512xf32>
    %120 = tpu.matmul %112, %119, %cst_49 {dimension_numbers = #tpu.dot_dimension_numbers<[1], [0], [0], [1], [0, 0, 1, 1], [], []>} : vector<8x128xf32>, vector<128x512xf32>, vector<8x512xf32> -> vector<8x512xf32>
    %121 = arith.addf %118, %120 : vector<8x512xf32>
    %122 = vector.extract_strided_slice %121 {offsets = [0, 0], sizes = [8, 128], strides = [1, 1]} : vector<8x512xf32> to vector<8x128xf32>
    %123 = arith.negf %122 : vector<8x128xf32>
    %124 = math.exp %123 : vector<8x128xf32>
    %cst_50 = arith.constant 1.000000e+00 : f32
    %125 = vector.broadcast %cst_50 : f32 to vector<8x128xf32>
    %126 = arith.addf %125, %124 : vector<8x128xf32>
    %127 = arith.divf %125, %126 : vector<8x128xf32>
    %128 = vector.extract_strided_slice %121 {offsets = [0, 128], sizes = [8, 128], strides = [1, 1]} : vector<8x512xf32> to vector<8x128xf32>
    %129 = arith.negf %128 : vector<8x128xf32>
    %130 = math.exp %129 : vector<8x128xf32>
    %cst_51 = arith.constant 1.000000e+00 : f32
    %131 = vector.broadcast %cst_51 : f32 to vector<8x128xf32>
    %132 = arith.addf %131, %130 : vector<8x128xf32>
    %133 = arith.divf %131, %132 : vector<8x128xf32>
    %134 = vector.extract_strided_slice %121 {offsets = [0, 256], sizes = [8, 128], strides = [1, 1]} : vector<8x512xf32> to vector<8x128xf32>
    %135 = math.tanh %134 : vector<8x128xf32>
    %136 = vector.extract_strided_slice %121 {offsets = [0, 384], sizes = [8, 128], strides = [1, 1]} : vector<8x512xf32> to vector<8x128xf32>
    %137 = arith.negf %136 : vector<8x128xf32>
    %138 = math.exp %137 : vector<8x128xf32>
    %cst_52 = arith.constant 1.000000e+00 : f32
    %139 = vector.broadcast %cst_52 : f32 to vector<8x128xf32>
    %140 = arith.addf %139, %138 : vector<8x128xf32>
    %141 = arith.divf %139, %140 : vector<8x128xf32>
    %142 = arith.mulf %133, %110 : vector<8x128xf32>
    %143 = arith.mulf %127, %135 : vector<8x128xf32>
    %144 = arith.addf %142, %143 : vector<8x128xf32>
    %145 = math.tanh %144 : vector<8x128xf32>
    %146 = arith.mulf %141, %145 : vector<8x128xf32>
    %147 = vector.shape_cast %146 : vector<8x128xf32> to vector<8x1x128xf32>
    %c0_53 = arith.constant 0 : index
    %148 = arith.index_cast %c3_i32 : i32 to index
    %c0_54 = arith.constant 0 : index
    %149 = vector.load %arg8[%c0_53, %148, %c0_54] : memref<8x8x128xf32, #tpu.memory_space<vmem>>, vector<8x1x128xf32>
    tpu.vector_store %arg8[%c0_53, %148, %c0_54], %147 {strides = array<i32>} : memref<8x8x128xf32, #tpu.memory_space<vmem>>, vector<8x1x128xf32>,
    %c4_i32 = arith.constant 4 : i32
    %c0_55 = arith.constant 0 : index
    %150 = arith.index_cast %c4_i32 : i32 to index
    %c0_56 = arith.constant 0 : index
    %151 = vector.load %arg11[%c0_55, %150, %c0_56] : memref<8x8x512xf32, #tpu.memory_space<vmem>>, vector<8x1x512xf32>
    %152 = vector.shape_cast %151 : vector<8x1x512xf32> to vector<8x512xf32>
    %c0_57 = arith.constant 0 : index
    %c0_58 = arith.constant 0 : index
    %153 = vector.load %arg6[%c0_57, %c0_58] : memref<128x512xf32, #tpu.memory_space<vmem>>, vector<128x512xf32>
    %cst_59 = arith.constant dense<0.000000e+00> : vector<8x512xf32>
    %154 = tpu.matmul %146, %153, %cst_59 {dimension_numbers = #tpu.dot_dimension_numbers<[1], [0], [0], [1], [0, 0, 1, 1], [], []>} : vector<8x128xf32>, vector<128x512xf32>, vector<8x512xf32> -> vector<8x512xf32>
    %155 = arith.addf %152, %154 : vector<8x512xf32>
    %156 = vector.extract_strided_slice %155 {offsets = [0, 0], sizes = [8, 128], strides = [1, 1]} : vector<8x512xf32> to vector<8x128xf32>
    %157 = arith.negf %156 : vector<8x128xf32>
    %158 = math.exp %157 : vector<8x128xf32>
    %cst_60 = arith.constant 1.000000e+00 : f32
    %159 = vector.broadcast %cst_60 : f32 to vector<8x128xf32>
    %160 = arith.addf %159, %158 : vector<8x128xf32>
    %161 = arith.divf %159, %160 : vector<8x128xf32>
    %162 = vector.extract_strided_slice %155 {offsets = [0, 128], sizes = [8, 128], strides = [1, 1]} : vector<8x512xf32> to vector<8x128xf32>
    %163 = arith.negf %162 : vector<8x128xf32>
    %164 = math.exp %163 : vector<8x128xf32>
    %cst_61 = arith.constant 1.000000e+00 : f32
    %165 = vector.broadcast %cst_61 : f32 to vector<8x128xf32>
    %166 = arith.addf %165, %164 : vector<8x128xf32>
    %167 = arith.divf %165, %166 : vector<8x128xf32>
    %168 = vector.extract_strided_slice %155 {offsets = [0, 256], sizes = [8, 128], strides = [1, 1]} : vector<8x512xf32> to vector<8x128xf32>
    %169 = math.tanh %168 : vector<8x128xf32>
    %170 = vector.extract_strided_slice %155 {offsets = [0, 384], sizes = [8, 128], strides = [1, 1]} : vector<8x512xf32> to vector<8x128xf32>
    %171 = arith.negf %170 : vector<8x128xf32>
    %172 = math.exp %171 : vector<8x128xf32>
    %cst_62 = arith.constant 1.000000e+00 : f32
    %173 = vector.broadcast %cst_62 : f32 to vector<8x128xf32>
    %174 = arith.addf %173, %172 : vector<8x128xf32>
    %175 = arith.divf %173, %174 : vector<8x128xf32>
    %176 = arith.mulf %167, %144 : vector<8x128xf32>
    %177 = arith.mulf %161, %169 : vector<8x128xf32>
    %178 = arith.addf %176, %177 : vector<8x128xf32>
    %179 = math.tanh %178 : vector<8x128xf32>
    %180 = arith.mulf %175, %179 : vector<8x128xf32>
    %181 = vector.shape_cast %180 : vector<8x128xf32> to vector<8x1x128xf32>
    %c0_63 = arith.constant 0 : index
    %182 = arith.index_cast %c4_i32 : i32 to index
    %c0_64 = arith.constant 0 : index
    %183 = vector.load %arg8[%c0_63, %182, %c0_64] : memref<8x8x128xf32, #tpu.memory_space<vmem>>, vector<8x1x128xf32>
    tpu.vector_store %arg8[%c0_63, %182, %c0_64], %181 {strides = array<i32>} : memref<8x8x128xf32, #tpu.memory_space<vmem>>, vector<8x1x128xf32>,
    %c5_i32 = arith.constant 5 : i32
    %c0_65 = arith.constant 0 : index
    %184 = arith.index_cast %c5_i32 : i32 to index
    %c0_66 = arith.constant 0 : index
    %185 = vector.load %arg11[%c0_65, %184, %c0_66] : memref<8x8x512xf32, #tpu.memory_space<vmem>>, vector<8x1x512xf32>
    %186 = vector.shape_cast %185 : vector<8x1x512xf32> to vector<8x512xf32>
    %c0_67 = arith.constant 0 : index
    %c0_68 = arith.constant 0 : index
    %187 = vector.load %arg6[%c0_67, %c0_68] : memref<128x512xf32, #tpu.memory_space<vmem>>, vector<128x512xf32>
    %cst_69 = arith.constant dense<0.000000e+00> : vector<8x512xf32>
    %188 = tpu.matmul %180, %187, %cst_69 {dimension_numbers = #tpu.dot_dimension_numbers<[1], [0], [0], [1], [0, 0, 1, 1], [], []>} : vector<8x128xf32>, vector<128x512xf32>, vector<8x512xf32> -> vector<8x512xf32>
    %189 = arith.addf %186, %188 : vector<8x512xf32>
    %190 = vector.extract_strided_slice %189 {offsets = [0, 0], sizes = [8, 128], strides = [1, 1]} : vector<8x512xf32> to vector<8x128xf32>
    %191 = arith.negf %190 : vector<8x128xf32>
    %192 = math.exp %191 : vector<8x128xf32>
    %cst_70 = arith.constant 1.000000e+00 : f32
    %193 = vector.broadcast %cst_70 : f32 to vector<8x128xf32>
    %194 = arith.addf %193, %192 : vector<8x128xf32>
    %195 = arith.divf %193, %194 : vector<8x128xf32>
    %196 = vector.extract_strided_slice %189 {offsets = [0, 128], sizes = [8, 128], strides = [1, 1]} : vector<8x512xf32> to vector<8x128xf32>
    %197 = arith.negf %196 : vector<8x128xf32>
    %198 = math.exp %197 : vector<8x128xf32>
    %cst_71 = arith.constant 1.000000e+00 : f32
    %199 = vector.broadcast %cst_71 : f32 to vector<8x128xf32>
    %200 = arith.addf %199, %198 : vector<8x128xf32>
    %201 = arith.divf %199, %200 : vector<8x128xf32>
    %202 = vector.extract_strided_slice %189 {offsets = [0, 256], sizes = [8, 128], strides = [1, 1]} : vector<8x512xf32> to vector<8x128xf32>
    %203 = math.tanh %202 : vector<8x128xf32>
    %204 = vector.extract_strided_slice %189 {offsets = [0, 384], sizes = [8, 128], strides = [1, 1]} : vector<8x512xf32> to vector<8x128xf32>
    %205 = arith.negf %204 : vector<8x128xf32>
    %206 = math.exp %205 : vector<8x128xf32>
    %cst_72 = arith.constant 1.000000e+00 : f32
    %207 = vector.broadcast %cst_72 : f32 to vector<8x128xf32>
    %208 = arith.addf %207, %206 : vector<8x128xf32>
    %209 = arith.divf %207, %208 : vector<8x128xf32>
    %210 = arith.mulf %201, %178 : vector<8x128xf32>
    %211 = arith.mulf %195, %203 : vector<8x128xf32>
    %212 = arith.addf %210, %211 : vector<8x128xf32>
    %213 = math.tanh %212 : vector<8x128xf32>
    %214 = arith.mulf %209, %213 : vector<8x128xf32>
    %215 = vector.shape_cast %214 : vector<8x128xf32> to vector<8x1x128xf32>
    %c0_73 = arith.constant 0 : index
    %216 = arith.index_cast %c5_i32 : i32 to index
    %c0_74 = arith.constant 0 : index
    %217 = vector.load %arg8[%c0_73, %216, %c0_74] : memref<8x8x128xf32, #tpu.memory_space<vmem>>, vector<8x1x128xf32>
    tpu.vector_store %arg8[%c0_73, %216, %c0_74], %215 {strides = array<i32>} : memref<8x8x128xf32, #tpu.memory_space<vmem>>, vector<8x1x128xf32>,
    %c6_i32 = arith.constant 6 : i32
    %c0_75 = arith.constant 0 : index
    %218 = arith.index_cast %c6_i32 : i32 to index
    %c0_76 = arith.constant 0 : index
    %219 = vector.load %arg11[%c0_75, %218, %c0_76] : memref<8x8x512xf32, #tpu.memory_space<vmem>>, vector<8x1x512xf32>
    %220 = vector.shape_cast %219 : vector<8x1x512xf32> to vector<8x512xf32>
    %c0_77 = arith.constant 0 : index
    %c0_78 = arith.constant 0 : index
    %221 = vector.load %arg6[%c0_77, %c0_78] : memref<128x512xf32, #tpu.memory_space<vmem>>, vector<128x512xf32>
    %cst_79 = arith.constant dense<0.000000e+00> : vector<8x512xf32>
    %222 = tpu.matmul %214, %221, %cst_79 {dimension_numbers = #tpu.dot_dimension_numbers<[1], [0], [0], [1], [0, 0, 1, 1], [], []>} : vector<8x128xf32>, vector<128x512xf32>, vector<8x512xf32> -> vector<8x512xf32>
    %223 = arith.addf %220, %222 : vector<8x512xf32>
    %224 = vector.extract_strided_slice %223 {offsets = [0, 0], sizes = [8, 128], strides = [1, 1]} : vector<8x512xf32> to vector<8x128xf32>
    %225 = arith.negf %224 : vector<8x128xf32>
    %226 = math.exp %225 : vector<8x128xf32>
    %cst_80 = arith.constant 1.000000e+00 : f32
    %227 = vector.broadcast %cst_80 : f32 to vector<8x128xf32>
    %228 = arith.addf %227, %226 : vector<8x128xf32>
    %229 = arith.divf %227, %228 : vector<8x128xf32>
    %230 = vector.extract_strided_slice %223 {offsets = [0, 128], sizes = [8, 128], strides = [1, 1]} : vector<8x512xf32> to vector<8x128xf32>
    %231 = arith.negf %230 : vector<8x128xf32>
    %232 = math.exp %231 : vector<8x128xf32>
    %cst_81 = arith.constant 1.000000e+00 : f32
    %233 = vector.broadcast %cst_81 : f32 to vector<8x128xf32>
    %234 = arith.addf %233, %232 : vector<8x128xf32>
    %235 = arith.divf %233, %234 : vector<8x128xf32>
    %236 = vector.extract_strided_slice %223 {offsets = [0, 256], sizes = [8, 128], strides = [1, 1]} : vector<8x512xf32> to vector<8x128xf32>
    %237 = math.tanh %236 : vector<8x128xf32>
    %238 = vector.extract_strided_slice %223 {offsets = [0, 384], sizes = [8, 128], strides = [1, 1]} : vector<8x512xf32> to vector<8x128xf32>
    %239 = arith.negf %238 : vector<8x128xf32>
    %240 = math.exp %239 : vector<8x128xf32>
    %cst_82 = arith.constant 1.000000e+00 : f32
    %241 = vector.broadcast %cst_82 : f32 to vector<8x128xf32>
    %242 = arith.addf %241, %240 : vector<8x128xf32>
    %243 = arith.divf %241, %242 : vector<8x128xf32>
    %244 = arith.mulf %235, %212 : vector<8x128xf32>
    %245 = arith.mulf %229, %237 : vector<8x128xf32>
    %246 = arith.addf %244, %245 : vector<8x128xf32>
    %247 = math.tanh %246 : vector<8x128xf32>
    %248 = arith.mulf %243, %247 : vector<8x128xf32>
    %249 = vector.shape_cast %248 : vector<8x128xf32> to vector<8x1x128xf32>
    %c0_83 = arith.constant 0 : index
    %250 = arith.index_cast %c6_i32 : i32 to index
    %c0_84 = arith.constant 0 : index
    %251 = vector.load %arg8[%c0_83, %250, %c0_84] : memref<8x8x128xf32, #tpu.memory_space<vmem>>, vector<8x1x128xf32>
    tpu.vector_store %arg8[%c0_83, %250, %c0_84], %249 {strides = array<i32>} : memref<8x8x128xf32, #tpu.memory_space<vmem>>, vector<8x1x128xf32>,
    %c7_i32 = arith.constant 7 : i32
    %c0_85 = arith.constant 0 : index
    %252 = arith.index_cast %c7_i32 : i32 to index
    %c0_86 = arith.constant 0 : index
    %253 = vector.load %arg11[%c0_85, %252, %c0_86] : memref<8x8x512xf32, #tpu.memory_space<vmem>>, vector<8x1x512xf32>
    %254 = vector.shape_cast %253 : vector<8x1x512xf32> to vector<8x512xf32>
    %c0_87 = arith.constant 0 : index
    %c0_88 = arith.constant 0 : index
    %255 = vector.load %arg6[%c0_87, %c0_88] : memref<128x512xf32, #tpu.memory_space<vmem>>, vector<128x512xf32>
    %cst_89 = arith.constant dense<0.000000e+00> : vector<8x512xf32>
    %256 = tpu.matmul %248, %255, %cst_89 {dimension_numbers = #tpu.dot_dimension_numbers<[1], [0], [0], [1], [0, 0, 1, 1], [], []>} : vector<8x128xf32>, vector<128x512xf32>, vector<8x512xf32> -> vector<8x512xf32>
    %257 = arith.addf %254, %256 : vector<8x512xf32>
    %258 = vector.extract_strided_slice %257 {offsets = [0, 0], sizes = [8, 128], strides = [1, 1]} : vector<8x512xf32> to vector<8x128xf32>
    %259 = arith.negf %258 : vector<8x128xf32>
    %260 = math.exp %259 : vector<8x128xf32>
    %cst_90 = arith.constant 1.000000e+00 : f32
    %261 = vector.broadcast %cst_90 : f32 to vector<8x128xf32>
    %262 = arith.addf %261, %260 : vector<8x128xf32>
    %263 = arith.divf %261, %262 : vector<8x128xf32>
    %264 = vector.extract_strided_slice %257 {offsets = [0, 128], sizes = [8, 128], strides = [1, 1]} : vector<8x512xf32> to vector<8x128xf32>
    %265 = arith.negf %264 : vector<8x128xf32>
    %266 = math.exp %265 : vector<8x128xf32>
    %cst_91 = arith.constant 1.000000e+00 : f32
    %267 = vector.broadcast %cst_91 : f32 to vector<8x128xf32>
    %268 = arith.addf %267, %266 : vector<8x128xf32>
    %269 = arith.divf %267, %268 : vector<8x128xf32>
    %270 = vector.extract_strided_slice %257 {offsets = [0, 256], sizes = [8, 128], strides = [1, 1]} : vector<8x512xf32> to vector<8x128xf32>
    %271 = math.tanh %270 : vector<8x128xf32>
    %272 = vector.extract_strided_slice %257 {offsets = [0, 384], sizes = [8, 128], strides = [1, 1]} : vector<8x512xf32> to vector<8x128xf32>
    %273 = arith.negf %272 : vector<8x128xf32>
    %274 = math.exp %273 : vector<8x128xf32>
    %cst_92 = arith.constant 1.000000e+00 : f32
    %275 = vector.broadcast %cst_92 : f32 to vector<8x128xf32>
    %276 = arith.addf %275, %274 : vector<8x128xf32>
    %277 = arith.divf %275, %276 : vector<8x128xf32>
    %278 = arith.mulf %269, %246 : vector<8x128xf32>
    %279 = arith.mulf %263, %271 : vector<8x128xf32>
    %280 = arith.addf %278, %279 : vector<8x128xf32>
    %281 = math.tanh %280 : vector<8x128xf32>
    %282 = arith.mulf %277, %281 : vector<8x128xf32>
    %283 = vector.shape_cast %282 : vector<8x128xf32> to vector<8x1x128xf32>
    %c0_93 = arith.constant 0 : index
    %284 = arith.index_cast %c7_i32 : i32 to index
    %c0_94 = arith.constant 0 : index
    %285 = vector.load %arg8[%c0_93, %284, %c0_94] : memref<8x8x128xf32, #tpu.memory_space<vmem>>, vector<8x1x128xf32>
    tpu.vector_store %arg8[%c0_93, %284, %c0_94], %283 {strides = array<i32>} : memref<8x8x128xf32, #tpu.memory_space<vmem>>, vector<8x1x128xf32>,
    %c8_i32 = arith.constant 8 : i32
    %c0_95 = arith.constant 0 : index
    %c0_96 = arith.constant 0 : index
    %286 = vector.load %arg9[%c0_95, %c0_96] : memref<8x128xf32, #tpu.memory_space<vmem>>, vector<8x128xf32>
    tpu.vector_store %arg9[%c0_95, %c0_96], %282 {strides = array<i32>} : memref<8x128xf32, #tpu.memory_space<vmem>>, vector<8x128xf32>,
    %c0_97 = arith.constant 0 : index
    %c0_98 = arith.constant 0 : index
    %287 = vector.load %arg10[%c0_97, %c0_98] : memref<8x128xf32, #tpu.memory_space<vmem>>, vector<8x128xf32>
    tpu.vector_store %arg10[%c0_97, %c0_98], %280 {strides = array<i32>} : memref<8x128xf32, #tpu.memory_space<vmem>>, vector<8x128xf32>,
    return
  }
  func.func @transform_0(%arg0: i32, %arg1: i32) -> (i32, i32, i32) {
    %c0_i32 = arith.constant 0 : i32
    %c0_i32_0 = arith.constant 0 : i32
    return %arg0, %arg1, %c0_i32 : i32, i32, i32
  }
  func.func @transform_1(%arg0: i32, %arg1: i32) -> (i32, i32) {
    %c0_i32 = arith.constant 0 : i32
    %c0_i32_0 = arith.constant 0 : i32
    return %arg0, %c0_i32 : i32, i32
  }
  func.func @transform_2(%arg0: i32, %arg1: i32) -> (i32, i32) {
    %c0_i32 = arith.constant 0 : i32
    %c0_i32_0 = arith.constant 0 : i32
    return %arg0, %c0_i32 : i32, i32
  }
  func.func @transform_3(%arg0: i32, %arg1: i32) -> (i32, i32) {
    %c0_i32 = arith.constant 0 : i32
    %c0_i32_0 = arith.constant 0 : i32
    %c0_i32_1 = arith.constant 0 : i32
    return %c0_i32, %c0_i32_0 : i32, i32
  }
  func.func @transform_4(%arg0: i32, %arg1: i32) -> (i32, i32) {
    %c0_i32 = arith.constant 0 : i32
    %c0_i32_0 = arith.constant 0 : i32
    %c0_i32_1 = arith.constant 0 : i32
    return %c0_i32, %c0_i32_0 : i32, i32
  }
  func.func @transform_5(%arg0: i32, %arg1: i32) -> (i32, i32) {
    %c0_i32 = arith.constant 0 : i32
    %c0_i32_0 = arith.constant 0 : i32
    %c0_i32_1 = arith.constant 0 : i32
    return %c0_i32, %c0_i32_0 : i32, i32
  }
  func.func @transform_6(%arg0: i32, %arg1: i32) -> (i32, i32, i32) {
    %c0_i32 = arith.constant 0 : i32
    %c0_i32_0 = arith.constant 0 : i32
    return %arg0, %arg1, %c0_i32 : i32, i32, i32
  }
  func.func @transform_7(%arg0: i32, %arg1: i32) -> (i32, i32) {
    %c0_i32 = arith.constant 0 : i32
    %c0_i32_0 = arith.constant 0 : i32
    return %arg0, %c0_i32 : i32, i32
  }
  func.func @transform_8(%arg0: i32, %arg1: i32) -> (i32, i32) {
    %c0_i32 = arith.constant 0 : i32
    %c0_i32_0 = arith.constant 0 : i32
    return %arg0, %c0_i32 : i32, i32
  }
}

</mosaic_0001>

<llo_original>
// kernel: tpu_custom_call.1
$region0: #{tpu_custom_call.1}
  #allocation0 [shape = 'u32[]', space=smem, size = 0x4, offset = 0x4, fixed_abs, tag = 'smem constant byte address 0x4 - core index']
  #allocation1 [shape = 'u32[144,128]{1,0:T(1,128)}', space=vmem, size = 0x12000, scoped, tag = 'internal scratch']
  #allocation2 [shape = 'f32[8,8,512]{2,1,0:T(8,128)}', space=vmem, size = 0x20000, scoped, tag = 'scratch operand']
  %s0 = inlined_call_operand.hbm [shape: f32[8,16,32], index: 0, kind: input, shape index: {}]
  %s1 = inlined_call_operand.hbm [shape: f32[8,128], index: 1, kind: input, shape index: {}]
  %s2 = inlined_call_operand.hbm [shape: f32[8,128], index: 2, kind: input, shape index: {}]
  %s3 = inlined_call_operand.hbm [shape: f32[32,512], index: 3, kind: input, shape index: {}]
  %s4 = inlined_call_operand.hbm [shape: f32[128,512], index: 4, kind: input, shape index: {}]
  %s5 = inlined_call_operand.vmem [shape: f32[1,512], index: 5, kind: input, shape index: {}]
  %s6 = inlined_call_operand.hbm [shape: f32[8,16,128], index: 6, kind: output, shape index: {0}]
  %s7 = inlined_call_operand.hbm [shape: f32[8,128], index: 7, kind: output, shape index: {1}]
  %s8 = inlined_call_operand.hbm [shape: f32[8,128], index: 8, kind: output, shape index: {2}]
  %9 = xla_tuple %s6, %s7, %s8
  %s10 = sld [smem:[#allocation0]]
  $region97: #{tpu_custom_call.1} parent=0
    _
  %s12 = ssub.s32 1, %s10
  %s13 = scalar_select 0, %s12, %s10
  $region1: #{tpu_custom_call.1} parent=0
    #allocation3 [shape = 'u8[65536]{0}', space=vmem, size = 0x10000, scoped, tag = 'input window, operand 0']
    #allocation4 [shape = 's32[2]{0}', space=sflag, size = 0x8, scoped, tag = 'scoped memory for tpu_custom_call.1']
    #allocation5 [shape = 's32[2]{0}', space=sflag, size = 0x8, scoped, tag = 'scoped memory for tpu_custom_call.1']
    #allocation6 [shape = 'u8[4096]{0}', space=vmem, size = 0x1000, scoped, tag = 'input window, operand 1, single buffered']
    #allocation7 [shape = 's32[1]{0}', space=sflag, size = 0x4, scoped, tag = 'scoped memory for tpu_custom_call.1']
    #allocation8 [shape = 'u8[4096]{0}', space=vmem, size = 0x1000, scoped, tag = 'input window, operand 2, single buffered']
    #allocation9 [shape = 'u8[65536]{0}', space=vmem, size = 0x10000, scoped, tag = 'input window, operand 3, single buffered']
    #allocation10 [shape = 's32[1]{0}', space=sflag, size = 0x4, scoped, tag = 'scoped memory for tpu_custom_call.1']
    #allocation11 [shape = 'u8[262144]{0}', space=vmem, size = 0x40000, scoped, tag = 'input window, operand 4, single buffered']
    #allocation12 [shape = 'u8[65536]{0}', space=vmem, size = 0x10000, scoped, tag = 'output window, operand 0']
    #allocation13 [shape = 'u8[4096]{0}', space=vmem, size = 0x1000, scoped, tag = 'output window, operand 1, single buffered']
    #allocation14 [shape = 's32[1]{0}', space=sflag, size = 0x4, scoped, tag = 'scoped memory for tpu_custom_call.1']
    #allocation15 [shape = 'u8[4096]{0}', space=vmem, size = 0x1000, scoped, tag = 'output window, operand 2, single buffered']
    %14 = vsyncpa [#allocation4], 0
    %s15 = scalar_lea.sflag [#allocation4], 1
    %16 = vsyncpa %s15, 0
    %17 = vsyncpa [#allocation7], 0
    %18 = vsyncpa [#allocation10], 0
    %19 = vsyncpa [#allocation5], 0
    %s20 = scalar_lea.sflag [#allocation5], 1
    %21 = vsyncpa %s20, 0
    %22 = vsyncpa [#allocation14], 0
    loop: start=0, step=1, limit=4
    $region2: #{tpu_custom_call.1} parent=1 // loop_pre_header
      _
    $region3: #{tpu_custom_call.1} parent=1 // loop_header
      %s24 = sphi 0, %s28
      %p25 = scmp.ge.s32.totalorder %s24, 4
      %s31 = sphi 0, %s43
      %s32 = sphi 0, %s39
      %s33 = sphi 0, %s31
      %s34 = sphi 0, %s32
      %s35 = sphi 0, %s33
      %s36 = sphi 0, %s34
      %s48 = sphi 0, %s50
      %s51 = sphi 0, %s48
      %s52 = sphi 0, %s51
      %s68 = sphi 0, %s52
      %s74 = sphi 0, %s76
      %s77 = sphi 0, %s74
      %s78 = sphi 0, %s77
      %s94 = sphi 0, %s78
      %s100 = sphi 0, %s102
      %s103 = sphi 0, %s100
      %s104 = sphi 0, %s103
      %s120 = sphi 0, %s104
      %s124 = sphi 0, %s124
      %s126 = sphi 0, %s124
      %s127 = sphi 0, %s126
      %s141 = sphi 0, %s127
      %s145 = sphi 0, %s145
      %s147 = sphi 0, %s145
      %s148 = sphi 0, %s147
      %s162 = sphi 0, %s148
      %s166 = sphi 0, %s166
      %s168 = sphi 0, %s166
      %s169 = sphi 0, %s168
      %s183 = sphi 0, %s169
      %s191 = sphi 0, %s193
      %s194 = sphi 0, %s191
      %s195 = sphi 0, %s194
      %s211 = sphi 0, %s195
      %s217 = sphi 0, %s219
      %s220 = sphi 0, %s217
      %s221 = sphi 0, %s220
      %s237 = sphi 0, %s221
      %s243 = sphi 0, %s245
      %s246 = sphi 0, %s243
      %s247 = sphi 0, %s246
      %s263 = sphi 0, %s247
    $region4: #{tpu_custom_call.1} parent=1 // loop_header_branch
      %27 = sbr.rel (%p25) target = $region8
    $region5: #{tpu_custom_call.1} parent=1 // loop_body
      %s29 = ssub.s32 %s24, 1
      %s30 = ssub.s32 %s24, 2
      %s37 = sadd.s32 1, %s32
      %p38 = scmp.ge.s32.totalorder %s37, 2
      %s39 = scalar_select %p38, 0, %s37
      %s40 = sadd.s32 1, %s31
      %s41 = scalar_select %p38, %s40, %s31
      %p42 = scmp.ge.s32.totalorder %s41, 1
      %s43 = scalar_select %p42, 0, %s41
      %s44 = ssub.s32 %s31, %s43
      %s45 = ssub.s32 %s32, %s39
      %s46 = sor.u32 %s44, %s45
      %p47 = scmp.eq.s32.totalorder %s46, 0
      %s49 = sadd.s32 %s48, 1
      %s50 = scalar_select %p47, %s48, %s49
      %p53 = pneg %p47
      %p54 = scmp.eq.s32.totalorder %s24, 1
      %p55 = por %p53, %p54
      %p56 = scmp.ne.s32.totalorder %s48, %s51
      %p57 = scmp.eq.s32.totalorder %s24, 0
      %p58 = por %p56, %p57
      %p59 = scmp.ne.s32.totalorder %s48, %s51
      %p60 = scmp.eq.s32.totalorder %s29, 1
      %p61 = por %p59, %p60
      %p62 = scmp.ne.s32.totalorder %s51, %s52
      %p63 = scmp.eq.s32.totalorder %s29, 0
      %p64 = por %p62, %p63
      %p65 = scmp.ne.s32.totalorder %s51, %s52
      %p66 = scmp.eq.s32.totalorder %s30, 1
      %p67 = por %p65, %p66
      %p69 = scmp.ne.s32.totalorder %s52, %s68
      %p70 = scmp.eq.s32.totalorder %s30, 0
      %p71 = por %p69, %p70
      %s72 = ssub.s32 %s31, %s43
      %p73 = scmp.eq.s32.totalorder %s72, 0
      %s75 = sadd.s32 %s74, 1
      %s76 = scalar_select %p73, %s74, %s75
      %p79 = pneg %p73
      %p80 = scmp.eq.s32.totalorder %s24, 1
      %p81 = por %p79, %p80
      %p82 = scmp.ne.s32.totalorder %s74, %s77
      %p83 = scmp.eq.s32.totalorder %s24, 0
      %p84 = por %p82, %p83
      %p85 = scmp.ne.s32.totalorder %s74, %s77
      %p86 = scmp.eq.s32.totalorder %s29, 1
      %p87 = por %p85, %p86
      %p88 = scmp.ne.s32.totalorder %s77, %s78
      %p89 = scmp.eq.s32.totalorder %s29, 0
      %p90 = por %p88, %p89
      %p91 = scmp.ne.s32.totalorder %s77, %s78
      %p92 = scmp.eq.s32.totalorder %s30, 1
      %p93 = por %p91, %p92
      %p95 = scmp.ne.s32.totalorder %s78, %s94
      %p96 = scmp.eq.s32.totalorder %s30, 0
      %p97 = por %p95, %p96
      %s98 = ssub.s32 %s31, %s43
      %p99 = scmp.eq.s32.totalorder %s98, 0
      %s101 = sadd.s32 %s100, 1
      %s102 = scalar_select %p99, %s100, %s101
      %p105 = pneg %p99
      %p106 = scmp.eq.s32.totalorder %s24, 1
      %p107 = por %p105, %p106
      %p108 = scmp.ne.s32.totalorder %s100, %s103
      %p109 = scmp.eq.s32.totalorder %s24, 0
      %p110 = por %p108, %p109
      %p111 = scmp.ne.s32.totalorder %s100, %s103
      %p112 = scmp.eq.s32.totalorder %s29, 1
      %p113 = por %p111, %p112
      %p114 = scmp.ne.s32.totalorder %s103, %s104
      %p115 = scmp.eq.s32.totalorder %s29, 0
      %p116 = por %p114, %p115
      %p117 = scmp.ne.s32.totalorder %s103, %s104
      %p118 = scmp.eq.s32.totalorder %s30, 1
      %p119 = por %p117, %p118
      %p121 = scmp.ne.s32.totalorder %s104, %s120
      %p122 = scmp.eq.s32.totalorder %s30, 0
      %p123 = por %p121, %p122
      %s125 = sadd.s32 %s124, 1
      %p128 = scmp.eq.s32.totalorder %s24, 1
      %p129 = scmp.ne.s32.totalorder %s124, %s126
      %p130 = scmp.eq.s32.totalorder %s24, 0
      %p131 = por %p129, %p130
      %p132 = scmp.ne.s32.totalorder %s124, %s126
      %p133 = scmp.eq.s32.totalorder %s29, 1
      %p134 = por %p132, %p133
      %p135 = scmp.ne.s32.totalorder %s126, %s127
      %p136 = scmp.eq.s32.totalorder %s29, 0
      %p137 = por %p135, %p136
      %p138 = scmp.ne.s32.totalorder %s126, %s127
      %p139 = scmp.eq.s32.totalorder %s30, 1
      %p140 = por %p138, %p139
      %p142 = scmp.ne.s32.totalorder %s127, %s141
      %p143 = scmp.eq.s32.totalorder %s30, 0
      %p144 = por %p142, %p143
      %s146 = sadd.s32 %s145, 1
      %p149 = scmp.eq.s32.totalorder %s24, 1
      %p150 = scmp.ne.s32.totalorder %s145, %s147
      %p151 = scmp.eq.s32.totalorder %s24, 0
      %p152 = por %p150, %p151
      %p153 = scmp.ne.s32.totalorder %s145, %s147
      %p154 = scmp.eq.s32.totalorder %s29, 1
      %p155 = por %p153, %p154
      %p156 = scmp.ne.s32.totalorder %s147, %s148
      %p157 = scmp.eq.s32.totalorder %s29, 0
      %p158 = por %p156, %p157
      %p159 = scmp.ne.s32.totalorder %s147, %s148
      %p160 = scmp.eq.s32.totalorder %s30, 1
      %p161 = por %p159, %p160
      %p163 = scmp.ne.s32.totalorder %s148, %s162
      %p164 = scmp.eq.s32.totalorder %s30, 0
      %p165 = por %p163, %p164
      %s167 = sadd.s32 %s166, 1
      %p170 = scmp.eq.s32.totalorder %s24, 1
      %p171 = scmp.ne.s32.totalorder %s166, %s168
      %p172 = scmp.eq.s32.totalorder %s24, 0
      %p173 = por %p171, %p172
      %p174 = scmp.ne.s32.totalorder %s166, %s168
      %p175 = scmp.eq.s32.totalorder %s29, 1
      %p176 = por %p174, %p175
      %p177 = scmp.ne.s32.totalorder %s168, %s169
      %p178 = scmp.eq.s32.totalorder %s29, 0
      %p179 = por %p177, %p178
      %p180 = scmp.ne.s32.totalorder %s168, %s169
      %p181 = scmp.eq.s32.totalorder %s30, 1
      %p182 = por %p180, %p181
      %p184 = scmp.ne.s32.totalorder %s169, %s183
      %p185 = scmp.eq.s32.totalorder %s30, 0
      %p186 = por %p184, %p185
      %s187 = ssub.s32 %s31, %s43
      %s188 = ssub.s32 %s32, %s39
      %s189 = sor.u32 %s187, %s188
      %p190 = scmp.eq.s32.totalorder %s189, 0
      %s192 = sadd.s32 %s191, 1
      %s193 = scalar_select %p190, %s191, %s192
      %p196 = pneg %p190
      %p197 = scmp.eq.s32.totalorder %s24, 1
      %p198 = por %p196, %p197
      %p199 = scmp.ne.s32.totalorder %s191, %s194
      %p200 = scmp.eq.s32.totalorder %s24, 0
      %p201 = por %p199, %p200
      %p202 = scmp.ne.s32.totalorder %s191, %s194
      %p203 = scmp.eq.s32.totalorder %s29, 1
      %p204 = por %p202, %p203
      %p205 = scmp.ne.s32.totalorder %s194, %s195
      %p206 = scmp.eq.s32.totalorder %s29, 0
      %p207 = por %p205, %p206
      %p208 = scmp.ne.s32.totalorder %s194, %s195
      %p209 = scmp.eq.s32.totalorder %s30, 1
      %p210 = por %p208, %p209
      %p212 = scmp.ne.s32.totalorder %s195, %s211
      %p213 = scmp.eq.s32.totalorder %s30, 0
      %p214 = por %p212, %p213
      %s215 = ssub.s32 %s31, %s43
      %p216 = scmp.eq.s32.totalorder %s215, 0
      %s218 = sadd.s32 %s217, 1
      %s219 = scalar_select %p216, %s217, %s218
      %p222 = pneg %p216
      %p223 = scmp.eq.s32.totalorder %s24, 1
      %p224 = por %p222, %p223
      %p225 = scmp.ne.s32.totalorder %s217, %s220
      %p226 = scmp.eq.s32.totalorder %s24, 0
      %p227 = por %p225, %p226
      %p228 = scmp.ne.s32.totalorder %s217, %s220
      %p229 = scmp.eq.s32.totalorder %s29, 1
      %p230 = por %p228, %p229
      %p231 = scmp.ne.s32.totalorder %s220, %s221
      %p232 = scmp.eq.s32.totalorder %s29, 0
      %p233 = por %p231, %p232
      %p234 = scmp.ne.s32.totalorder %s220, %s221
      %p235 = scmp.eq.s32.totalorder %s30, 1
      %p236 = por %p234, %p235
      %p238 = scmp.ne.s32.totalorder %s221, %s237
      %p239 = scmp.eq.s32.totalorder %s30, 0
      %p240 = por %p238, %p239
      %s241 = ssub.s32 %s31, %s43
      %p242 = scmp.eq.s32.totalorder %s241, 0
      %s244 = sadd.s32 %s243, 1
      %s245 = scalar_select %p242, %s243, %s244
      %p248 = pneg %p242
      %p249 = scmp.eq.s32.totalorder %s24, 1
      %p250 = por %p248, %p249
      %p251 = scmp.ne.s32.totalorder %s243, %s246
      %p252 = scmp.eq.s32.totalorder %s24, 0
      %p253 = por %p251, %p252
      %p254 = scmp.ne.s32.totalorder %s243, %s246
      %p255 = scmp.eq.s32.totalorder %s29, 1
      %p256 = por %p254, %p255
      %p257 = scmp.ne.s32.totalorder %s246, %s247
      %p258 = scmp.eq.s32.totalorder %s29, 0
      %p259 = por %p257, %p258
      %p260 = scmp.ne.s32.totalorder %s246, %s247
      %p261 = scmp.eq.s32.totalorder %s30, 1
      %p262 = por %p260, %p261
      %p264 = scmp.ne.s32.totalorder %s247, %s263
      %p265 = scmp.eq.s32.totalorder %s30, 0
      %p266 = por %p264, %p265
      %p267 = scmp.le.s32.totalorder 1, %s24
      %p268 = scmp.lt.s32.totalorder %s24, 3
      %p269 = pnand %p267, %p268
      %p270 = pneg %p269
      // Predicated region
      $region9: #{tpu_custom_call.1} parent=5 // pred_check
        _
      $region10: #{tpu_custom_call.1} parent=5 // pred_check_branch
        %272 = sbr.rel (%p269) target = $region12
      $region11: #{tpu_custom_call.1} parent=5 // pred_region
        %s273 = ssub.s32 %s24, 1
        // Predicated region
        $region13: #{tpu_custom_call.1} parent=11 // pred_check
          %p274 = pneg %p90
        $region14: #{tpu_custom_call.1} parent=11 // pred_check_branch
          %276 = sbr.rel (%p274) target = $region16
        $region15: #{tpu_custom_call.1} parent=11 // pred_region
          %s278 = ssub.s32 128, 128
          %279 = vsyncadd [#allocation7], %s278
          %s280 = smul.addr %s33, 128
          %s281 = scalar_lea.hbm %s1, %s280
          %s283 = sshll.u32 [#allocation6], 4
          %s284 = int_to_ptr.vmem [resolvable:$true] %s283
          %286 = dma.hbm_to_vmem [thread:$0]  %s281, 128, %s284, [#allocation7]
        $region16: #{tpu_custom_call.1} parent=11 // pred_fallthru
          _
        // Predicated region
        $region17: #{tpu_custom_call.1} parent=11 // pred_check
          %p287 = pneg %p116
        $region18: #{tpu_custom_call.1} parent=11 // pred_check_branch
          %289 = sbr.rel (%p287) target = $region20
        $region19: #{tpu_custom_call.1} parent=11 // pred_region
          %s291 = ssub.s32 128, 128
          %292 = vsyncadd [#allocation7], %s291
          %s293 = smul.addr %s33, 128
          %s294 = scalar_lea.hbm %s2, %s293
          %s296 = sshll.u32 [#allocation8], 4
          %s297 = int_to_ptr.vmem [resolvable:$true] %s296
          %299 = dma.hbm_to_vmem [thread:$0]  %s294, 128, %s297, [#allocation7]
        $region20: #{tpu_custom_call.1} parent=11 // pred_fallthru
          _
        // Predicated region
        $region21: #{tpu_custom_call.1} parent=11 // pred_check
          %p300 = pneg %p137
        $region22: #{tpu_custom_call.1} parent=11 // pred_check_branch
          %302 = sbr.rel (%p300) target = $region24
        $region23: #{tpu_custom_call.1} parent=11 // pred_region
          %s304 = ssub.s32 2048, 2048
          %305 = vsyncadd [#allocation10], %s304
          %s306 = sshll.u32 [#allocation9], 4
          %s307 = int_to_ptr.vmem [resolvable:$true] %s306
          %312 = dma.hbm_to_vmem [thread:$0]  %s3, 2048, %s307, [#allocation10], 512, 512, 32
        $region24: #{tpu_custom_call.1} parent=11 // pred_fallthru
          _
        // Predicated region
        $region25: #{tpu_custom_call.1} parent=11 // pred_check
          %p313 = pneg %p158
        $region26: #{tpu_custom_call.1} parent=11 // pred_check_branch
          %315 = sbr.rel (%p313) target = $region28
        $region27: #{tpu_custom_call.1} parent=11 // pred_region
          %s317 = ssub.s32 8192, 8192
          %318 = vsyncadd [#allocation10], %s317
          %s319 = sshll.u32 [#allocation11], 4
          %s320 = int_to_ptr.vmem [resolvable:$true] %s319
          %325 = dma.hbm_to_vmem [thread:$0]  %s4, 8192, %s320, [#allocation10], 512, 512, 32
        $region28: #{tpu_custom_call.1} parent=11 // pred_fallthru
          _
        // Predicated region
        $region29: #{tpu_custom_call.1} parent=11 // pred_check
          %p326 = pneg %p179
        $region30: #{tpu_custom_call.1} parent=11 // pred_check_branch
          %328 = sbr.rel (%p326) target = $region32
        $region31: #{tpu_custom_call.1} parent=11 // pred_region
          _
        $region32: #{tpu_custom_call.1} parent=11 // pred_fallthru
          _
      $region12: #{tpu_custom_call.1} parent=5 // pred_fallthru
        _
      %p329 = scmp.lt.s32.totalorder %s24, 2
      // Predicated region
      $region33: #{tpu_custom_call.1} parent=5 // pred_check
        %p330 = pneg %p329
      $region34: #{tpu_custom_call.1} parent=5 // pred_check_branch
        %332 = sbr.rel (%p330) target = $region36
      $region35: #{tpu_custom_call.1} parent=5 // pred_region
        // Predicated region
        $region37: #{tpu_custom_call.1} parent=35 // pred_check
          %p333 = pneg %p58
        $region38: #{tpu_custom_call.1} parent=35 // pred_check_branch
          %335 = sbr.rel (%p333) target = $region40
        $region39: #{tpu_custom_call.1} parent=35 // pred_region
          %s336 = sand.u32 %s48, 1
          %s337 = scalar_lea.sflag [#allocation4], %s336
          %s338 = sand.u32 %s48, 1
          %s339 = smul.addr %s338, 64
          %s340 = scalar_lea.vmem [#allocation3], %s339
          %s341 = smul.u32 8, %s31
          %s343 = ssub.s32 1024, 1024
          %344 = vsyncadd %s337, %s343
          %s345 = smul.addr %s341, 2
          %s346 = sadd.s32 %s32, %s345
          %s347 = smul.addr %s346, 128
          %s348 = scalar_lea.hbm %s0, %s347
          %s349 = sshll.u32 %s340, 4
          %s350 = int_to_ptr.vmem [resolvable:$true] %s349
          %355 = dma.hbm_to_vmem [thread:$0]  %s348, 1024, %s350, %s337, 256, 128, 8
        $region40: #{tpu_custom_call.1} parent=35 // pred_fallthru
          _
      $region36: #{tpu_custom_call.1} parent=5 // pred_fallthru
        _
      %p356 = scmp.le.s32.totalorder 1, %s24
      %p357 = scmp.lt.s32.totalorder %s24, 3
      %p358 = pnand %p356, %p357
      %p359 = pneg %p358
      // Predicated region
      $region41: #{tpu_custom_call.1} parent=5 // pred_check
        _
      $region42: #{tpu_custom_call.1} parent=5 // pred_check_branch
        %361 = sbr.rel (%p358) target = $region44
      $region43: #{tpu_custom_call.1} parent=5 // pred_region
        %s362 = ssub.s32 %s24, 1
        %s363 = sand.u32 %s51, 1
        %s364 = scalar_lea.sflag [#allocation4], %s363
        %s365 = sand.u32 %s51, 1
        %s366 = smul.addr %s365, 64
        %s367 = scalar_lea.vmem [#allocation3], %s366
        // Predicated region
        $region45: #{tpu_custom_call.1} parent=43 // pred_check
          %p368 = pneg %p64
        $region46: #{tpu_custom_call.1} parent=43 // pred_check_branch
          %370 = sbr.rel (%p368) target = $region48
        $region47: #{tpu_custom_call.1} parent=43 // pred_region
          %371 = dma.done %s364, 1024
        $region48: #{tpu_custom_call.1} parent=43 // pred_fallthru
          _
        // Predicated region
        $region49: #{tpu_custom_call.1} parent=43 // pred_check
          %p372 = pneg %p90
        $region50: #{tpu_custom_call.1} parent=43 // pred_check_branch
          %374 = sbr.rel (%p372) target = $region52
        $region51: #{tpu_custom_call.1} parent=43 // pred_region
          %375 = dma.done [#allocation7], 128
        $region52: #{tpu_custom_call.1} parent=43 // pred_fallthru
          _
        // Predicated region
        $region53: #{tpu_custom_call.1} parent=43 // pred_check
          %p376 = pneg %p116
        $region54: #{tpu_custom_call.1} parent=43 // pred_check_branch
          %378 = sbr.rel (%p376) target = $region56
        $region55: #{tpu_custom_call.1} parent=43 // pred_region
          %379 = dma.done [#allocation7], 128
        $region56: #{tpu_custom_call.1} parent=43 // pred_fallthru
          _
        // Predicated region
        $region57: #{tpu_custom_call.1} parent=43 // pred_check
          %p380 = pneg %p137
        $region58: #{tpu_custom_call.1} parent=43 // pred_check_branch
          %382 = sbr.rel (%p380) target = $region60
        $region59: #{tpu_custom_call.1} parent=43 // pred_region
          %383 = dma.done [#allocation10], 2048
        $region60: #{tpu_custom_call.1} parent=43 // pred_fallthru
          _
        // Predicated region
        $region61: #{tpu_custom_call.1} parent=43 // pred_check
          %p384 = pneg %p158
        $region62: #{tpu_custom_call.1} parent=43 // pred_check_branch
          %386 = sbr.rel (%p384) target = $region64
        $region63: #{tpu_custom_call.1} parent=43 // pred_region
          %387 = dma.done [#allocation10], 8192
        $region64: #{tpu_custom_call.1} parent=43 // pred_fallthru
          _
        %s388 = sand.u32 %s51, 1
        %s389 = scalar_lea.sflag [#allocation4], %s388
        %s390 = sand.u32 %s51, 1
        %s391 = smul.addr %s390, 64
        %s392 = scalar_lea.vmem [#allocation3], %s391
        %p393 = pneg %p64
        %p394 = pneg %p61
        %p395 = pneg %p90
        %p396 = pneg %p87
        %p397 = pneg %p116
        %p398 = pneg %p113
        %p399 = pneg %p137
        %p400 = pneg %p134
        %p401 = pneg %p158
        %p402 = pneg %p155
        %p403 = pneg %p179
        %p404 = pneg %p176
        %p405 = pneg %p207
        %p406 = pneg %p204
        %s407 = sand.u32 %s194, 1
        %s408 = scalar_lea.sflag [#allocation5], %s407
        %s409 = sand.u32 %s194, 1
        %s410 = smul.addr %s409, 64
        %s411 = scalar_lea.vmem [#allocation12], %s410
        %p412 = pneg %p233
        %p413 = pneg %p230
        %p414 = pneg %p259
        %p415 = pneg %p256
        %s416 = smul.u32 8, %s33
        %s417 = smul.u32 8, %s33
        %v418 = vld [vmem:[%s367] sm:$0xff]
        %v419 = vld [vmem:[%s367 + $0x8] sm:$0xff]
        %v420 = vld [vmem:[%s367 + $0x10] sm:$0xff]
        %v421 = vld [vmem:[%s367 + $0x18] sm:$0xff]
        %v422 = vld [vmem:[%s367 + $0x20] sm:$0xff]
        %v423 = vld [vmem:[%s367 + $0x28] sm:$0xff]
        %v424 = vld [vmem:[%s367 + $0x30] sm:$0xff]
        %v425 = vld [vmem:[%s367 + $0x38] sm:$0xff]
        %v426 = vld [vmem:[#allocation9] sm:$0xff]
        %v427 = vld [vmem:[#allocation9 + $0x8] sm:$0xff]
        %v428 = vld [vmem:[#allocation9 + $0x10] sm:$0xff]
        %v429 = vld [vmem:[#allocation9 + $0x18] sm:$0xff]
        %v430 = vld [vmem:[#allocation9 + $0x20] sm:$0xff]
        %v431 = vld [vmem:[#allocation9 + $0x28] sm:$0xff]
        %v432 = vld [vmem:[#allocation9 + $0x30] sm:$0xff]
        %v433 = vld [vmem:[#allocation9 + $0x38] sm:$0xff]
        %v434 = vld [vmem:[#allocation9 + $0x40] sm:$0xff]
        %v435 = vld [vmem:[#allocation9 + $0x48] sm:$0xff]
        %v436 = vld [vmem:[#allocation9 + $0x50] sm:$0xff]
        %v437 = vld [vmem:[#allocation9 + $0x58] sm:$0xff]
        %v438 = vld [vmem:[#allocation9 + $0x60] sm:$0xff]
        %v439 = vld [vmem:[#allocation9 + $0x68] sm:$0xff]
        %v440 = vld [vmem:[#allocation9 + $0x70] sm:$0xff]
        %v441 = vld [vmem:[#allocation9 + $0x78] sm:$0xff]
        %v442 = vld [vmem:[%s5] sm:$0xf]
        %v444 = vlaneseq
        %v445 = vshrl.u32 %v444, 7
        %v446 = vsub.s32 0, %v445
        %v447 = vrot.slane %v442, %v446
        %v448 = vlaneseq
        %v449 = vshrl.u32 %v448, 7
        %v450 = vsub.s32 1, %v449
        %v451 = vrot.slane %v442, %v450
        %v452 = vlaneseq
        %v453 = vshrl.u32 %v452, 7
        %v454 = vsub.s32 2, %v453
        %v455 = vrot.slane %v442, %v454
        %v456 = vlaneseq
        %v457 = vshrl.u32 %v456, 7
        %v458 = vsub.s32 3, %v457
        %v459 = vrot.slane %v442, %v458
        %vm464 = vcmask 261120
        %v466 = vsel %vm464, %v418, 0
        %v469 = vsel %vm464, %v419, 0
        %v472 = vsel %vm464, %v420, 0
        %v475 = vsel %vm464, %v421, 0
        %v478 = vsel %vm464, %v422, 0
        %v481 = vsel %vm464, %v423, 0
        %v484 = vsel %vm464, %v424, 0
        %v487 = vsel %vm464, %v425, 0
        %489 = vmatprep.subr.mxu0 0.0
        %490 = vmatpush1.msra.mxu0 0.0
        %491 = vmatprep.subr.mxu0 0.0
        %492 = vmatpush1.msra.mxu0 0.0
        %493 = vmatprep.subr.mxu0 0.0
        %494 = vmatpush1.msra.mxu0 0.0
        %495 = vmatprep.subr.mxu0 0.0
        %496 = vmatpush1.msra.mxu0 0.0
        %497 = vmatprep.subr.mxu0 0.0
        %498 = vmatpush1.msra.mxu0 0.0
        %499 = vmatprep.subr.mxu0 0.0
        %500 = vmatpush1.msra.mxu0 0.0
        %501 = vmatprep.subr.mxu0 0.0
        %502 = vmatpush1.msra.mxu0 0.0
        %503 = vmatprep.subr.mxu0 0.0
        %504 = vmatpush1.msra.mxu0 0.0
        %505 = vmatprep.subr.mxu0 0.0
        %506 = vmatpush1.msra.mxu0 0.0
        %507 = vmatprep.subr.mxu0 0.0
        %508 = vmatpush1.msra.mxu0 0.0
        %509 = vmatprep.subr.mxu0 0.0
        %510 = vmatpush1.msra.mxu0 0.0
        %511 = vmatprep.subr.mxu0 0.0
        %512 = vmatpush1.msra.mxu0 0.0
        %513 = vmatprep.subr.mxu0 %v439
        %514 = vmatpush1.msra.mxu0 %v438
        %515 = vmatprep.subr.mxu0 %v435
        %516 = vmatpush1.msra.mxu0 %v434
        %517 = vmatprep.subr.mxu0 %v431
        %518 = vmatpush1.msra.mxu0 %v430
        %519 = vmatprep.subr.mxu0 %v427
        %520 = vmatpush1.msra.mxu0 %v426
        %521 = vmatprep.subr.mxu0 0.0
        %522 = vmatpush2.msra.mxu0 0.0
        %523 = vmatprep.subr.mxu0 0.0
        %524 = vmatpush2.msra.mxu0 0.0
        %525 = vmatprep.subr.mxu0 0.0
        %526 = vmatpush2.msra.mxu0 0.0
        %527 = vmatprep.subr.mxu0 0.0
        %528 = vmatpush2.msra.mxu0 0.0
        %529 = vmatprep.subr.mxu0 0.0
        %530 = vmatpush2.msra.mxu0 0.0
        %531 = vmatprep.subr.mxu0 0.0
        %532 = vmatpush2.msra.mxu0 0.0
        %533 = vmatprep.subr.mxu0 0.0
        %534 = vmatpush2.msra.mxu0 0.0
        %535 = vmatprep.subr.mxu0 0.0
        %536 = vmatpush2.msra.mxu0 0.0
        %537 = vmatprep.subr.mxu0 0.0
        %538 = vmatpush2.msra.mxu0 0.0
        %539 = vmatprep.subr.mxu0 0.0
        %540 = vmatpush2.msra.mxu0 0.0
        %541 = vmatprep.subr.mxu0 0.0
        %542 = vmatpush2.msra.mxu0 0.0
        %543 = vmatprep.subr.mxu0 0.0
        %544 = vmatpush2.msra.mxu0 0.0
        %545 = vmatprep.subr.mxu0 0.0
        %546 = vmatpush2.msra.mxu0 0.0
        %547 = vmatprep.subr.mxu0 0.0
        %548 = vmatpush2.msra.mxu0 0.0
        %549 = vmatprep.subr.mxu0 0.0
        %550 = vmatpush2.msra.mxu0 0.0
        %551 = vmatprep.subr.mxu0 0.0
        %552 = vmatpush2.msra.mxu0 0.0
        %553 = vmatprep.mubr.f32.mxu0 0.0
        %554 = vmatmul.mubr.f32.gmra.mxu0 %v466
        %v555 = vpop.f32.mrf.mxu0
        %v556 = vadd.f32 %v447, %v555
        %v557 = vpop.f32.mrf.mxu0
        %v558 = vadd.f32 %v451, %v557
        %559 = vmatprep.mubr.f32.mxu0 0.0
        %560 = vmatmul.mubr.f32.gmra.mxu0 %v469
        %v561 = vpop.f32.mrf.mxu0
        %v562 = vadd.f32 %v447, %v561
        %v563 = vpop.f32.mrf.mxu0
        %v564 = vadd.f32 %v451, %v563
        %565 = vmatprep.mubr.f32.mxu0 0.0
        %566 = vmatmul.mubr.f32.gmra.mxu0 %v472
        %v567 = vpop.f32.mrf.mxu0
        %v568 = vadd.f32 %v447, %v567
        %v569 = vpop.f32.mrf.mxu0
        %v570 = vadd.f32 %v451, %v569
        %571 = vmatprep.mubr.f32.mxu0 0.0
        %572 = vmatmul.mubr.f32.gmra.mxu0 %v475
        %v573 = vpop.f32.mrf.mxu0
        %v574 = vadd.f32 %v447, %v573
        %v575 = vpop.f32.mrf.mxu0
        %v576 = vadd.f32 %v451, %v575
        %577 = vmatprep.mubr.f32.mxu0 0.0
        %578 = vmatmul.mubr.f32.gmra.mxu0 %v478
        %v579 = vpop.f32.mrf.mxu0
        %v580 = vadd.f32 %v447, %v579
        %v581 = vpop.f32.mrf.mxu0
        %v582 = vadd.f32 %v451, %v581
        %583 = vmatprep.mubr.f32.mxu0 0.0
        %584 = vmatmul.mubr.f32.gmra.mxu0 %v481
        %v585 = vpop.f32.mrf.mxu0
        %v586 = vadd.f32 %v447, %v585
        %v587 = vpop.f32.mrf.mxu0
        %v588 = vadd.f32 %v451, %v587
        %589 = vmatprep.mubr.f32.mxu0 0.0
        %590 = vmatmul.mubr.f32.gmra.mxu0 %v484
        %v591 = vpop.f32.mrf.mxu0
        %v592 = vadd.f32 %v447, %v591
        %v593 = vpop.f32.mrf.mxu0
        %v594 = vadd.f32 %v451, %v593
        %595 = vmatprep.mubr.f32.mxu0 0.0
        %596 = vmatmul.mubr.f32.gmra.mxu0 %v487
        %v597 = vpop.f32.mrf.mxu0
        %v598 = vadd.f32 %v447, %v597
        %v599 = vpop.f32.mrf.mxu0
        %v600 = vadd.f32 %v451, %v599
        %601 = vdwg.mxu0
        %602 = vmatprep.subr.mxu0 0.0
        %603 = vmatpush1.msra.mxu0 0.0
        %604 = vmatprep.subr.mxu0 0.0
        %605 = vmatpush1.msra.mxu0 0.0
        %606 = vmatprep.subr.mxu0 0.0
        %607 = vmatpush1.msra.mxu0 0.0
        %608 = vmatprep.subr.mxu0 0.0
        %609 = vmatpush1.msra.mxu0 0.0
        %610 = vmatprep.subr.mxu0 0.0
        %611 = vmatpush1.msra.mxu0 0.0
        %612 = vmatprep.subr.mxu0 0.0
        %613 = vmatpush1.msra.mxu0 0.0
        %614 = vmatprep.subr.mxu0 0.0
        %615 = vmatpush1.msra.mxu0 0.0
        %616 = vmatprep.subr.mxu0 0.0
        %617 = vmatpush1.msra.mxu0 0.0
        %618 = vmatprep.subr.mxu0 0.0
        %619 = vmatpush1.msra.mxu0 0.0
        %620 = vmatprep.subr.mxu0 0.0
        %621 = vmatpush1.msra.mxu0 0.0
        %622 = vmatprep.subr.mxu0 0.0
        %623 = vmatpush1.msra.mxu0 0.0
        %624 = vmatprep.subr.mxu0 0.0
        %625 = vmatpush1.msra.mxu0 0.0
        %626 = vmatprep.subr.mxu0 %v441
        %627 = vmatpush1.msra.mxu0 %v440
        %628 = vmatprep.subr.mxu0 %v437
        %629 = vmatpush1.msra.mxu0 %v436
        %630 = vmatprep.subr.mxu0 %v433
        %631 = vmatpush1.msra.mxu0 %v432
        %632 = vmatprep.subr.mxu0 %v429
        %633 = vmatpush1.msra.mxu0 %v428
        %634 = vmatprep.subr.mxu0 0.0
        %635 = vmatpush2.msra.mxu0 0.0
        %636 = vmatprep.subr.mxu0 0.0
        %637 = vmatpush2.msra.mxu0 0.0
        %638 = vmatprep.subr.mxu0 0.0
        %639 = vmatpush2.msra.mxu0 0.0
        %640 = vmatprep.subr.mxu0 0.0
        %641 = vmatpush2.msra.mxu0 0.0
        %642 = vmatprep.subr.mxu0 0.0
        %643 = vmatpush2.msra.mxu0 0.0
        %644 = vmatprep.subr.mxu0 0.0
        %645 = vmatpush2.msra.mxu0 0.0
        %646 = vmatprep.subr.mxu0 0.0
        %647 = vmatpush2.msra.mxu0 0.0
        %648 = vmatprep.subr.mxu0 0.0
        %649 = vmatpush2.msra.mxu0 0.0
        %650 = vmatprep.subr.mxu0 0.0
        %651 = vmatpush2.msra.mxu0 0.0
        %652 = vmatprep.subr.mxu0 0.0
        %653 = vmatpush2.msra.mxu0 0.0
        %654 = vmatprep.subr.mxu0 0.0
        %655 = vmatpush2.msra.mxu0 0.0
        %656 = vmatprep.subr.mxu0 0.0
        %657 = vmatpush2.msra.mxu0 0.0
        %658 = vmatprep.subr.mxu0 0.0
        %659 = vmatpush2.msra.mxu0 0.0
        %660 = vmatprep.subr.mxu0 0.0
        %661 = vmatpush2.msra.mxu0 0.0
        %662 = vmatprep.subr.mxu0 0.0
        %663 = vmatpush2.msra.mxu0 0.0
        %664 = vmatprep.subr.mxu0 0.0
        %665 = vmatpush2.msra.mxu0 0.0
        %666 = vmatprep.mubr.f32.mxu0 0.0
        %667 = vmatmul.mubr.f32.gmra.mxu0 %v466
        %v668 = vpop.f32.mrf.mxu0
        %v669 = vadd.f32 %v455, %v668
        %v670 = vpop.f32.mrf.mxu0
        %v671 = vadd.f32 %v459, %v670
        %672 = vmatprep.mubr.f32.mxu0 0.0
        %673 = vmatmul.mubr.f32.gmra.mxu0 %v469
        %v674 = vpop.f32.mrf.mxu0
        %v675 = vadd.f32 %v455, %v674
        %v676 = vpop.f32.mrf.mxu0
        %v677 = vadd.f32 %v459, %v676
        %678 = vmatprep.mubr.f32.mxu0 0.0
        %679 = vmatmul.mubr.f32.gmra.mxu0 %v472
        %v680 = vpop.f32.mrf.mxu0
        %v681 = vadd.f32 %v455, %v680
        %v682 = vpop.f32.mrf.mxu0
        %v683 = vadd.f32 %v459, %v682
        %684 = vmatprep.mubr.f32.mxu0 0.0
        %685 = vmatmul.mubr.f32.gmra.mxu0 %v475
        %v686 = vpop.f32.mrf.mxu0
        %v687 = vadd.f32 %v455, %v686
        %v688 = vpop.f32.mrf.mxu0
        %v689 = vadd.f32 %v459, %v688
        %690 = vmatprep.mubr.f32.mxu0 0.0
        %691 = vmatmul.mubr.f32.gmra.mxu0 %v478
        %v692 = vpop.f32.mrf.mxu0
        %v693 = vadd.f32 %v455, %v692
        %v694 = vpop.f32.mrf.mxu0
        %v695 = vadd.f32 %v459, %v694
        %696 = vmatprep.mubr.f32.mxu0 0.0
        %697 = vmatmul.mubr.f32.gmra.mxu0 %v481
        %v698 = vpop.f32.mrf.mxu0
        %v699 = vadd.f32 %v455, %v698
        %v700 = vpop.f32.mrf.mxu0
        %v701 = vadd.f32 %v459, %v700
        %702 = vmatprep.mubr.f32.mxu0 0.0
        %703 = vmatmul.mubr.f32.gmra.mxu0 %v484
        %v704 = vpop.f32.mrf.mxu0
        %v705 = vadd.f32 %v455, %v704
        %v706 = vpop.f32.mrf.mxu0
        %v707 = vadd.f32 %v459, %v706
        %708 = vmatprep.mubr.f32.mxu0 0.0
        %709 = vmatmul.mubr.f32.gmra.mxu0 %v487
        %v710 = vpop.f32.mrf.mxu0
        %v711 = vadd.f32 %v455, %v710
        %v712 = vpop.f32.mrf.mxu0
        %v713 = vadd.f32 %v459, %v712
        %714 = vdwg.mxu0
        %715 = vst [vmem:[#allocation2] sm:$0xff] %v556
        %716 = vst [vmem:[#allocation2 + $0x8] sm:$0xff] %v558
        %717 = vst [vmem:[#allocation2 + $0x10] sm:$0xff] %v669
        %718 = vst [vmem:[#allocation2 + $0x18] sm:$0xff] %v671
        %719 = vst [vmem:[#allocation2 + $0x20] sm:$0xff] %v562
        %720 = vst [vmem:[#allocation2 + $0x28] sm:$0xff] %v564
        %721 = vst [vmem:[#allocation2 + $0x30] sm:$0xff] %v675
        %722 = vst [vmem:[#allocation2 + $0x38] sm:$0xff] %v677
        %723 = vst [vmem:[#allocation2 + $0x40] sm:$0xff] %v568
        %724 = vst [vmem:[#allocation2 + $0x48] sm:$0xff] %v570
        %725 = vst [vmem:[#allocation2 + $0x50] sm:$0xff] %v681
        %726 = vst [vmem:[#allocation2 + $0x58] sm:$0xff] %v683
        %727 = vst [vmem:[#allocation2 + $0x60] sm:$0xff] %v574
        %728 = vst [vmem:[#allocation2 + $0x68] sm:$0xff] %v576
        %729 = vst [vmem:[#allocation2 + $0x70] sm:$0xff] %v687
        %730 = vst [vmem:[#allocation2 + $0x78] sm:$0xff] %v689
        %731 = vst [vmem:[#allocation2 + $0x80] sm:$0xff] %v580
        %732 = vst [vmem:[#allocation2 + $0x88] sm:$0xff] %v582
        %733 = vst [vmem:[#allocation2 + $0x90] sm:$0xff] %v693
        %734 = vst [vmem:[#allocation2 + $0x98] sm:$0xff] %v695
        %735 = vst [vmem:[#allocation2 + $0xa0] sm:$0xff] %v586
        %736 = vst [vmem:[#allocation2 + $0xa8] sm:$0xff] %v588
        %737 = vst [vmem:[#allocation2 + $0xb0] sm:$0xff] %v699
        %738 = vst [vmem:[#allocation2 + $0xb8] sm:$0xff] %v701
        %739 = vst [vmem:[#allocation2 + $0xc0] sm:$0xff] %v592
        %740 = vst [vmem:[#allocation2 + $0xc8] sm:$0xff] %v594
        %741 = vst [vmem:[#allocation2 + $0xd0] sm:$0xff] %v705
        %742 = vst [vmem:[#allocation2 + $0xd8] sm:$0xff] %v707
        %743 = vst [vmem:[#allocation2 + $0xe0] sm:$0xff] %v598
        %744 = vst [vmem:[#allocation2 + $0xe8] sm:$0xff] %v600
        %745 = vst [vmem:[#allocation2 + $0xf0] sm:$0xff] %v711
        %746 = vst [vmem:[#allocation2 + $0xf8] sm:$0xff] %v713
        %p747 = scmp.eq.s32.totalorder %s34, 0
        // Predicated region
        $region65: #{tpu_custom_call.1} parent=43 // pred_check
          %p748 = pneg %p747
        $region66: #{tpu_custom_call.1} parent=43 // pred_check_branch
          %750 = sbr.rel (%p748) target = $region68
        $region67: #{tpu_custom_call.1} parent=43 // pred_region
          %v751 = vld [vmem:[#allocation6] sm:$0xff]
          %752 = vst [vmem:[#allocation13] sm:$0xff] %v751
          %v753 = vld [vmem:[#allocation8] sm:$0xff]
          %754 = vst [vmem:[#allocation15] sm:$0xff] %v753
        $region68: #{tpu_custom_call.1} parent=43 // pred_fallthru
          _
        %v755 = vld [vmem:[#allocation13] sm:$0xff]
        %v756 = vld [vmem:[#allocation15] sm:$0xff]
        %v757 = vld [vmem:[#allocation2] ss:$8 sm:$0xf]
        %s758 = scalar_lea.vmem [#allocation2], 32
        %v759 = vld [vmem:[%s758] ss:$8 sm:$0xf]
        %s760 = scalar_lea.vmem [#allocation2], 64
        %v761 = vld [vmem:[%s760] ss:$8 sm:$0xf]
        %s762 = scalar_lea.vmem [#allocation2], 96
        %v763 = vld [vmem:[%s762] ss:$8 sm:$0xf]
        %s764 = scalar_lea.vmem [#allocation2], 128
        %v765 = vld [vmem:[%s764] ss:$8 sm:$0xf]
        %s766 = scalar_lea.vmem [#allocation2], 160
        %v767 = vld [vmem:[%s766] ss:$8 sm:$0xf]
        %s768 = scalar_lea.vmem [#allocation2], 192
        %v769 = vld [vmem:[%s768] ss:$8 sm:$0xf]
        %s770 = scalar_lea.vmem [#allocation2], 224
        %v771 = vld [vmem:[%s770] ss:$8 sm:$0xf]
        %v772 = vld [vmem:[#allocation11] sm:$0xff]
        %v773 = vld [vmem:[#allocation11 + $0x8] sm:$0xff]
        %v774 = vld [vmem:[#allocation11 + $0x10] sm:$0xff]
        %v775 = vld [vmem:[#allocation11 + $0x18] sm:$0xff]
        %v776 = vld [vmem:[#allocation11 + $0x20] sm:$0xff]
        %v777 = vld [vmem:[#allocation11 + $0x28] sm:$0xff]
        %v778 = vld [vmem:[#allocation11 + $0x30] sm:$0xff]
        %v779 = vld [vmem:[#allocation11 + $0x38] sm:$0xff]
        %v780 = vld [vmem:[#allocation11 + $0x40] sm:$0xff]
        %v781 = vld [vmem:[#allocation11 + $0x48] sm:$0xff]
        %v782 = vld [vmem:[#allocation11 + $0x50] sm:$0xff]
        %v783 = vld [vmem:[#allocation11 + $0x58] sm:$0xff]
        %v784 = vld [vmem:[#allocation11 + $0x60] sm:$0xff]
        %v785 = vld [vmem:[#allocation11 + $0x68] sm:$0xff]
        %v786 = vld [vmem:[#allocation11 + $0x70] sm:$0xff]
        %v787 = vld [vmem:[#allocation11 + $0x78] sm:$0xff]
        %v788 = vld [vmem:[#allocation11 + $0x80] sm:$0xff]
        %v789 = vld [vmem:[#allocation11 + $0x88] sm:$0xff]
        %v790 = vld [vmem:[#allocation11 + $0x90] sm:$0xff]
        %v791 = vld [vmem:[#allocation11 + $0x98] sm:$0xff]
        %v792 = vld [vmem:[#allocation11 + $0xa0] sm:$0xff]
        %v793 = vld [vmem:[#allocation11 + $0xa8] sm:$0xff]
        %v794 = vld [vmem:[#allocation11 + $0xb0] sm:$0xff]
        %v795 = vld [vmem:[#allocation11 + $0xb8] sm:$0xff]
        %v796 = vld [vmem:[#allocation11 + $0xc0] sm:$0xff]
        %v797 = vld [vmem:[#allocation11 + $0xc8] sm:$0xff]
        %v798 = vld [vmem:[#allocation11 + $0xd0] sm:$0xff]
        %v799 = vld [vmem:[#allocation11 + $0xd8] sm:$0xff]
        %v800 = vld [vmem:[#allocation11 + $0xe0] sm:$0xff]
        %v801 = vld [vmem:[#allocation11 + $0xe8] sm:$0xff]
        %v802 = vld [vmem:[#allocation11 + $0xf0] sm:$0xff]
        %v803 = vld [vmem:[#allocation11 + $0xf8] sm:$0xff]
        %v804 = vld [vmem:[#allocation11 + $0x100] sm:$0xff]
        %v805 = vld [vmem:[#allocation11 + $0x108] sm:$0xff]
        %v806 = vld [vmem:[#allocation11 + $0x110] sm:$0xff]
        %v807 = vld [vmem:[#allocation11 + $0x118] sm:$0xff]
        %v808 = vld [vmem:[#allocation11 + $0x120] sm:$0xff]
        %v809 = vld [vmem:[#allocation11 + $0x128] sm:$0xff]
        %v810 = vld [vmem:[#allocation11 + $0x130] sm:$0xff]
        %v811 = vld [vmem:[#allocation11 + $0x138] sm:$0xff]
        %v812 = vld [vmem:[#allocation11 + $0x140] sm:$0xff]
        %v813 = vld [vmem:[#allocation11 + $0x148] sm:$0xff]
        %v814 = vld [vmem:[#allocation11 + $0x150] sm:$0xff]
        %v815 = vld [vmem:[#allocation11 + $0x158] sm:$0xff]
        %v816 = vld [vmem:[#allocation11 + $0x160] sm:$0xff]
        %v817 = vld [vmem:[#allocation11 + $0x168] sm:$0xff]
        %v818 = vld [vmem:[#allocation11 + $0x170] sm:$0xff]
        %v819 = vld [vmem:[#allocation11 + $0x178] sm:$0xff]
        %v820 = vld [vmem:[#allocation11 + $0x180] sm:$0xff]
        %v821 = vld [vmem:[#allocation11 + $0x188] sm:$0xff]
        %v822 = vld [vmem:[#allocation11 + $0x190] sm:$0xff]
        %v823 = vld [vmem:[#allocation11 + $0x198] sm:$0xff]
        %v824 = vld [vmem:[#allocation11 + $0x1a0] sm:$0xff]
        %v825 = vld [vmem:[#allocation11 + $0x1a8] sm:$0xff]
        %v826 = vld [vmem:[#allocation11 + $0x1b0] sm:$0xff]
        %v827 = vld [vmem:[#allocation11 + $0x1b8] sm:$0xff]
        %v828 = vld [vmem:[#allocation11 + $0x1c0] sm:$0xff]
        %v829 = vld [vmem:[#allocation11 + $0x1c8] sm:$0xff]
        %v830 = vld [vmem:[#allocation11 + $0x1d0] sm:$0xff]
        %v831 = vld [vmem:[#allocation11 + $0x1d8] sm:$0xff]
        %v832 = vld [vmem:[#allocation11 + $0x1e0] sm:$0xff]
        %v833 = vld [vmem:[#allocation11 + $0x1e8] sm:$0xff]
        %v834 = vld [vmem:[#allocation11 + $0x1f0] sm:$0xff]
        %v835 = vld [vmem:[#allocation11 + $0x1f8] sm:$0xff]
        %836 = vmatprep.subr.mxu0 %v833
        %837 = vmatpush1.msra.mxu0 %v832
        %838 = vmatprep.subr.mxu0 %v829
        %839 = vmatpush1.msra.mxu0 %v828
        %840 = vmatprep.subr.mxu0 %v825
        %841 = vmatpush1.msra.mxu0 %v824
        %842 = vmatprep.subr.mxu0 %v821
        %843 = vmatpush1.msra.mxu0 %v820
        %844 = vmatprep.subr.mxu0 %v817
        %845 = vmatpush1.msra.mxu0 %v816
        %846 = vmatprep.subr.mxu0 %v813
        %847 = vmatpush1.msra.mxu0 %v812
        %848 = vmatprep.subr.mxu0 %v809
        %849 = vmatpush1.msra.mxu0 %v808
        %850 = vmatprep.subr.mxu0 %v805
        %851 = vmatpush1.msra.mxu0 %v804
        %852 = vmatprep.subr.mxu0 %v801
        %853 = vmatpush1.msra.mxu0 %v800
        %854 = vmatprep.subr.mxu0 %v797
        %855 = vmatpush1.msra.mxu0 %v796
        %856 = vmatprep.subr.mxu0 %v793
        %857 = vmatpush1.msra.mxu0 %v792
        %858 = vmatprep.subr.mxu0 %v789
        %859 = vmatpush1.msra.mxu0 %v788
        %860 = vmatprep.subr.mxu0 %v785
        %861 = vmatpush1.msra.mxu0 %v784
        %862 = vmatprep.subr.mxu0 %v781
        %863 = vmatpush1.msra.mxu0 %v780
        %864 = vmatprep.subr.mxu0 %v777
        %865 = vmatpush1.msra.mxu0 %v776
        %866 = vmatprep.subr.mxu0 %v773
        %867 = vmatpush1.msra.mxu0 %v772
        %868 = vmatprep.subr.mxu0 0.0
        %869 = vmatpush2.msra.mxu0 0.0
        %870 = vmatprep.subr.mxu0 0.0
        %871 = vmatpush2.msra.mxu0 0.0
        %872 = vmatprep.subr.mxu0 0.0
        %873 = vmatpush2.msra.mxu0 0.0
        %874 = vmatprep.subr.mxu0 0.0
        %875 = vmatpush2.msra.mxu0 0.0
        %876 = vmatprep.subr.mxu0 0.0
        %877 = vmatpush2.msra.mxu0 0.0
        %878 = vmatprep.subr.mxu0 0.0
        %879 = vmatpush2.msra.mxu0 0.0
        %880 = vmatprep.subr.mxu0 0.0
        %881 = vmatpush2.msra.mxu0 0.0
        %882 = vmatprep.subr.mxu0 0.0
        %883 = vmatpush2.msra.mxu0 0.0
        %884 = vmatprep.subr.mxu0 0.0
        %885 = vmatpush2.msra.mxu0 0.0
        %886 = vmatprep.subr.mxu0 0.0
        %887 = vmatpush2.msra.mxu0 0.0
        %888 = vmatprep.subr.mxu0 0.0
        %889 = vmatpush2.msra.mxu0 0.0
        %890 = vmatprep.subr.mxu0 0.0
        %891 = vmatpush2.msra.mxu0 0.0
        %892 = vmatprep.subr.mxu0 0.0
        %893 = vmatpush2.msra.mxu0 0.0
        %894 = vmatprep.subr.mxu0 0.0
        %895 = vmatpush2.msra.mxu0 0.0
        %896 = vmatprep.subr.mxu0 0.0
        %897 = vmatpush2.msra.mxu0 0.0
        %898 = vmatprep.subr.mxu0 0.0
        %899 = vmatpush2.msra.mxu0 0.0
        %900 = vmatprep.mubr.f32.mxu0 0.0
        %901 = vmatmul.mubr.f32.gmra.mxu0 %v755
        %v902 = vpop.f32.mrf.mxu0
        %v903 = vadd.f32 0.0, %v902
        %v904 = vpop.f32.mrf.mxu0
        %v905 = vadd.f32 0.0, %v904
        %906 = vdwg.mxu0
        %907 = vmatprep.subr.mxu0 %v835
        %908 = vmatpush1.msra.mxu0 %v834
        %909 = vmatprep.subr.mxu0 %v831
        %910 = vmatpush1.msra.mxu0 %v830
        %911 = vmatprep.subr.mxu0 %v827
        %912 = vmatpush1.msra.mxu0 %v826
        %913 = vmatprep.subr.mxu0 %v823
        %914 = vmatpush1.msra.mxu0 %v822
        %915 = vmatprep.subr.mxu0 %v819
        %916 = vmatpush1.msra.mxu0 %v818
        %917 = vmatprep.subr.mxu0 %v815
        %918 = vmatpush1.msra.mxu0 %v814
        %919 = vmatprep.subr.mxu0 %v811
        %920 = vmatpush1.msra.mxu0 %v810
        %921 = vmatprep.subr.mxu0 %v807
        %922 = vmatpush1.msra.mxu0 %v806
        %923 = vmatprep.subr.mxu0 %v803
        %924 = vmatpush1.msra.mxu0 %v802
        %925 = vmatprep.subr.mxu0 %v799
        %926 = vmatpush1.msra.mxu0 %v798
        %927 = vmatprep.subr.mxu0 %v795
        %928 = vmatpush1.msra.mxu0 %v794
        %929 = vmatprep.subr.mxu0 %v791
        %930 = vmatpush1.msra.mxu0 %v790
        %931 = vmatprep.subr.mxu0 %v787
        %932 = vmatpush1.msra.mxu0 %v786
        %933 = vmatprep.subr.mxu0 %v783
        %934 = vmatpush1.msra.mxu0 %v782
        %935 = vmatprep.subr.mxu0 %v779
        %936 = vmatpush1.msra.mxu0 %v778
        %937 = vmatprep.subr.mxu0 %v775
        %938 = vmatpush1.msra.mxu0 %v774
        %939 = vmatprep.subr.mxu0 0.0
        %940 = vmatpush2.msra.mxu0 0.0
        %941 = vmatprep.subr.mxu0 0.0
        %942 = vmatpush2.msra.mxu0 0.0
        %943 = vmatprep.subr.mxu0 0.0
        %944 = vmatpush2.msra.mxu0 0.0
        %945 = vmatprep.subr.mxu0 0.0
        %946 = vmatpush2.msra.mxu0 0.0
        %947 = vmatprep.subr.mxu0 0.0
        %948 = vmatpush2.msra.mxu0 0.0
        %949 = vmatprep.subr.mxu0 0.0
        %950 = vmatpush2.msra.mxu0 0.0
        %951 = vmatprep.subr.mxu0 0.0
        %952 = vmatpush2.msra.mxu0 0.0
        %953 = vmatprep.subr.mxu0 0.0
        %954 = vmatpush2.msra.mxu0 0.0
        %955 = vmatprep.subr.mxu0 0.0
        %956 = vmatpush2.msra.mxu0 0.0
        %957 = vmatprep.subr.mxu0 0.0
        %958 = vmatpush2.msra.mxu0 0.0
        %959 = vmatprep.subr.mxu0 0.0
        %960 = vmatpush2.msra.mxu0 0.0
        %961 = vmatprep.subr.mxu0 0.0
        %962 = vmatpush2.msra.mxu0 0.0
        %963 = vmatprep.subr.mxu0 0.0
        %964 = vmatpush2.msra.mxu0 0.0
        %965 = vmatprep.subr.mxu0 0.0
        %966 = vmatpush2.msra.mxu0 0.0
        %967 = vmatprep.subr.mxu0 0.0
        %968 = vmatpush2.msra.mxu0 0.0
        %969 = vmatprep.subr.mxu0 0.0
        %970 = vmatpush2.msra.mxu0 0.0
        %971 = vmatprep.mubr.f32.mxu0 0.0
        %972 = vmatmul.mubr.f32.gmra.mxu0 %v755
        %v973 = vpop.f32.mrf.mxu0
        %v974 = vadd.f32 0.0, %v973
        %v975 = vpop.f32.mrf.mxu0
        %v976 = vadd.f32 0.0, %v975
        %977 = vdwg.mxu0
        %v982 = vcombine.low %v903, %v905
        %v983 = vcombine.high %v903, %v905
        %v984 = vcombine.low %v974, %v976
        %v985 = vcombine.high %v974, %v976
        %v987 = vunpack.c.l.s4 1966171168
        %v988 = vunpack.c.0.s8 %v987
        %v989 = vlaneseq
        %v990 = vshrl.u32 %v989, 7
        %v991 = vsub.s32 %v988, %v990
        %v992 = vrot.slane %v982, %v991
        %v994 = vunpack.c.l.s4 1966171168
        %v995 = vunpack.c.0.s8 %v994
        %v996 = vlaneseq
        %v997 = vshrl.u32 %v996, 7
        %v998 = vsub.s32 %v995, %v997
        %v999 = vrot.slane %v983, %v998
        %v1001 = vunpack.c.l.s4 1966171168
        %v1002 = vunpack.c.0.s8 %v1001
        %v1003 = vlaneseq
        %v1004 = vshrl.u32 %v1003, 7
        %v1005 = vsub.s32 %v1002, %v1004
        %v1006 = vrot.slane %v984, %v1005
        %v1008 = vunpack.c.l.s4 1966171168
        %v1009 = vunpack.c.0.s8 %v1008
        %v1010 = vlaneseq
        %v1011 = vshrl.u32 %v1010, 7
        %v1012 = vsub.s32 %v1009, %v1011
        %v1013 = vrot.slane %v985, %v1012
        %v1014 = vcombine.low %v992, %v1006
        %v1015 = vcombine.high %v992, %v1006
        %v1016 = vcombine.low %v999, %v1013
        %v1017 = vcombine.high %v999, %v1013
        %v1019 = vunpack.c.l.s4 1966171168
        %v1020 = vunpack.c.0.s8 %v1019
        %v1021 = vlaneseq
        %v1022 = vshrl.u32 %v1021, 7
        %v1023 = vsub.s32 %v1020, %v1022
        %v1024 = vrot.slane %v1014, %v1023
        %v1026 = vunpack.c.l.s4 1966171168
        %v1027 = vunpack.c.0.s8 %v1026
        %v1028 = vlaneseq
        %v1029 = vshrl.u32 %v1028, 7
        %v1030 = vsub.s32 %v1027, %v1029
        %v1031 = vrot.slane %v1016, %v1030
        %v1033 = vunpack.c.l.s4 1966171168
        %v1034 = vunpack.c.0.s8 %v1033
        %v1035 = vlaneseq
        %v1036 = vshrl.u32 %v1035, 7
        %v1037 = vsub.s32 %v1034, %v1036
        %v1038 = vrot.slane %v1015, %v1037
        %v1040 = vunpack.c.l.s4 1966171168
        %v1041 = vunpack.c.0.s8 %v1040
        %v1042 = vlaneseq
        %v1043 = vshrl.u32 %v1042, 7
        %v1044 = vsub.s32 %v1041, %v1043
        %v1045 = vrot.slane %v1017, %v1044
        %v1046 = vcombine.high %v1024, %v1024
        %v1047 = vcombine.high %v1031, %v1031
        %v1048 = vcombine.high %v1038, %v1038
        %v1049 = vcombine.high %v1045, %v1045
        %v1058 = vadd.f32 %v757, %v1024
        %v1059 = vadd.f32 %v759, %v1038
        %v1060 = vadd.f32 %v761, %v1046
        %v1061 = vadd.f32 %v763, %v1048
        %v1062 = vadd.f32 %v765, %v1031
        %v1063 = vadd.f32 %v767, %v1045
        %v1064 = vadd.f32 %v769, %v1047
        %v1065 = vadd.f32 %v771, %v1049
        %v1066 = vxor.u32 %v1058, 2147483648
        %v1067 = vxor.u32 %v1059, 2147483648
        %v1068 = vxor.u32 %v1060, 2147483648
        %v1069 = vxor.u32 %v1061, 2147483648
        %v1070 = vxor.u32 %v1062, 2147483648
        %v1071 = vxor.u32 %v1063, 2147483648
        %v1072 = vxor.u32 %v1064, 2147483648
        %v1073 = vxor.u32 %v1065, 2147483648
        %v1074 = vmul.f32 %v1066, 1.442695
        %v1075 = vpow.pop %v1074
        %v1076 = vmul.f32 %v1067, 1.442695
        %v1077 = vpow.pop %v1076
        %v1078 = vmul.f32 %v1068, 1.442695
        %v1079 = vpow.pop %v1078
        %v1080 = vmul.f32 %v1069, 1.442695
        %v1081 = vpow.pop %v1080
        %v1082 = vmul.f32 %v1070, 1.442695
        %v1083 = vpow.pop %v1082
        %v1084 = vmul.f32 %v1071, 1.442695
        %v1085 = vpow.pop %v1084
        %v1086 = vmul.f32 %v1072, 1.442695
        %v1087 = vpow.pop %v1086
        %v1088 = vmul.f32 %v1073, 1.442695
        %v1089 = vpow.pop %v1088
        %v1090 = vadd.f32 %v1075, 1.0
        %v1091 = vadd.f32 %v1077, 1.0
        %v1092 = vadd.f32 %v1079, 1.0
        %v1093 = vadd.f32 %v1081, 1.0
        %v1094 = vadd.f32 %v1083, 1.0
        %v1095 = vadd.f32 %v1085, 1.0
        %v1096 = vadd.f32 %v1087, 1.0
        %v1097 = vadd.f32 %v1089, 1.0
        %v1098 = vrcp.pop %v1090
        %v1099 = vmul.f32 1.0, %v1098
        %v1100 = vrcp.pop %v1091
        %v1101 = vmul.f32 1.0, %v1100
        %v1102 = vrcp.pop %v1092
        %v1103 = vmul.f32 1.0, %v1102
        %v1104 = vrcp.pop %v1093
        %v1105 = vmul.f32 1.0, %v1104
        %v1106 = vrcp.pop %v1094
        %v1107 = vmul.f32 1.0, %v1106
        %v1108 = vrcp.pop %v1095
        %v1109 = vmul.f32 1.0, %v1108
        %v1110 = vrcp.pop %v1096
        %v1111 = vmul.f32 1.0, %v1110
        %v1112 = vrcp.pop %v1097
        %v1113 = vmul.f32 1.0, %v1112
        %v1122 = vrot.slane %v1058, 1
        %v1123 = vrot.slane %v1059, 1
        %v1124 = vrot.slane %v1060, 1
        %v1125 = vrot.slane %v1061, 1
        %v1126 = vrot.slane %v1062, 1
        %v1127 = vrot.slane %v1063, 1
        %v1128 = vrot.slane %v1064, 1
        %v1129 = vrot.slane %v1065, 1
        %v1138 = vxor.u32 %v1122, 2147483648
        %v1139 = vxor.u32 %v1123, 2147483648
        %v1140 = vxor.u32 %v1124, 2147483648
        %v1141 = vxor.u32 %v1125, 2147483648
        %v1142 = vxor.u32 %v1126, 2147483648
        %v1143 = vxor.u32 %v1127, 2147483648
        %v1144 = vxor.u32 %v1128, 2147483648
        %v1145 = vxor.u32 %v1129, 2147483648
        %v1146 = vmul.f32 %v1138, 1.442695
        %v1147 = vpow.pop %v1146
        %v1148 = vmul.f32 %v1139, 1.442695
        %v1149 = vpow.pop %v1148
        %v1150 = vmul.f32 %v1140, 1.442695
        %v1151 = vpow.pop %v1150
        %v1152 = vmul.f32 %v1141, 1.442695
        %v1153 = vpow.pop %v1152
        %v1154 = vmul.f32 %v1142, 1.442695
        %v1155 = vpow.pop %v1154
        %v1156 = vmul.f32 %v1143, 1.442695
        %v1157 = vpow.pop %v1156
        %v1158 = vmul.f32 %v1144, 1.442695
        %v1159 = vpow.pop %v1158
        %v1160 = vmul.f32 %v1145, 1.442695
        %v1161 = vpow.pop %v1160
        %v1162 = vadd.f32 %v1147, 1.0
        %v1163 = vadd.f32 %v1149, 1.0
        %v1164 = vadd.f32 %v1151, 1.0
        %v1165 = vadd.f32 %v1153, 1.0
        %v1166 = vadd.f32 %v1155, 1.0
        %v1167 = vadd.f32 %v1157, 1.0
        %v1168 = vadd.f32 %v1159, 1.0
        %v1169 = vadd.f32 %v1161, 1.0
        %v1170 = vrcp.pop %v1162
        %v1171 = vmul.f32 1.0, %v1170
        %v1172 = vrcp.pop %v1163
        %v1173 = vmul.f32 1.0, %v1172
        %v1174 = vrcp.pop %v1164
        %v1175 = vmul.f32 1.0, %v1174
        %v1176 = vrcp.pop %v1165
        %v1177 = vmul.f32 1.0, %v1176
        %v1178 = vrcp.pop %v1166
        %v1179 = vmul.f32 1.0, %v1178
        %v1180 = vrcp.pop %v1167
        %v1181 = vmul.f32 1.0, %v1180
        %v1182 = vrcp.pop %v1168
        %v1183 = vmul.f32 1.0, %v1182
        %v1184 = vrcp.pop %v1169
        %v1185 = vmul.f32 1.0, %v1184
        %v1186 = vrot.slane %v1058, 2
        %v1187 = vrot.slane %v1059, 2
        %v1188 = vrot.slane %v1060, 2
        %v1189 = vrot.slane %v1061, 2
        %v1190 = vrot.slane %v1062, 2
        %v1191 = vrot.slane %v1063, 2
        %v1192 = vrot.slane %v1064, 2
        %v1193 = vrot.slane %v1065, 2
        %v1202 = vtanh.pop %v1186
        %v1203 = vtanh.pop %v1187
        %v1204 = vtanh.pop %v1188
        %v1205 = vtanh.pop %v1189
        %v1206 = vtanh.pop %v1190
        %v1207 = vtanh.pop %v1191
        %v1208 = vtanh.pop %v1192
        %v1209 = vtanh.pop %v1193
        %v1210 = vrot.slane %v1058, 3
        %v1211 = vrot.slane %v1059, 3
        %v1212 = vrot.slane %v1060, 3
        %v1213 = vrot.slane %v1061, 3
        %v1214 = vrot.slane %v1062, 3
        %v1215 = vrot.slane %v1063, 3
        %v1216 = vrot.slane %v1064, 3
        %v1217 = vrot.slane %v1065, 3
        %v1226 = vxor.u32 %v1210, 2147483648
        %v1227 = vxor.u32 %v1211, 2147483648
        %v1228 = vxor.u32 %v1212, 2147483648
        %v1229 = vxor.u32 %v1213, 2147483648
        %v1230 = vxor.u32 %v1214, 2147483648
        %v1231 = vxor.u32 %v1215, 2147483648
        %v1232 = vxor.u32 %v1216, 2147483648
        %v1233 = vxor.u32 %v1217, 2147483648
        %v1234 = vmul.f32 %v1226, 1.442695
        %v1235 = vpow.pop %v1234
        %v1236 = vmul.f32 %v1227, 1.442695
        %v1237 = vpow.pop %v1236
        %v1238 = vmul.f32 %v1228, 1.442695
        %v1239 = vpow.pop %v1238
        %v1240 = vmul.f32 %v1229, 1.442695
        %v1241 = vpow.pop %v1240
        %v1242 = vmul.f32 %v1230, 1.442695
        %v1243 = vpow.pop %v1242
        %v1244 = vmul.f32 %v1231, 1.442695
        %v1245 = vpow.pop %v1244
        %v1246 = vmul.f32 %v1232, 1.442695
        %v1247 = vpow.pop %v1246
        %v1248 = vmul.f32 %v1233, 1.442695
        %v1249 = vpow.pop %v1248
        %v1250 = vadd.f32 %v1235, 1.0
        %v1251 = vadd.f32 %v1237, 1.0
        %v1252 = vadd.f32 %v1239, 1.0
        %v1253 = vadd.f32 %v1241, 1.0
        %v1254 = vadd.f32 %v1243, 1.0
        %v1255 = vadd.f32 %v1245, 1.0
        %v1256 = vadd.f32 %v1247, 1.0
        %v1257 = vadd.f32 %v1249, 1.0
        %v1258 = vrcp.pop %v1250
        %v1259 = vmul.f32 1.0, %v1258
        %v1260 = vrcp.pop %v1251
        %v1261 = vmul.f32 1.0, %v1260
        %v1262 = vrcp.pop %v1252
        %v1263 = vmul.f32 1.0, %v1262
        %v1264 = vrcp.pop %v1253
        %v1265 = vmul.f32 1.0, %v1264
        %v1266 = vrcp.pop %v1254
        %v1267 = vmul.f32 1.0, %v1266
        %v1268 = vrcp.pop %v1255
        %v1269 = vmul.f32 1.0, %v1268
        %v1270 = vrcp.pop %v1256
        %v1271 = vmul.f32 1.0, %v1270
        %v1272 = vrcp.pop %v1257
        %v1273 = vmul.f32 1.0, %v1272
        %v1275 = vcombine.high %v756, %v756
        %v1277 = vunpack.c.l.s4 1966171168
        %v1278 = vunpack.c.0.s8 %v1277
        %v1279 = vlaneseq
        %v1280 = vshrl.u32 %v1279, 7
        %v1281 = vsub.s32 %v1278, %v1280
        %v1282 = vrot.slane %v756, %v1281
        %v1284 = vunpack.c.l.s4 1966171168
        %v1285 = vunpack.c.0.s8 %v1284
        %v1286 = vlaneseq
        %v1287 = vshrl.u32 %v1286, 7
        %v1288 = vsub.s32 %v1285, %v1287
        %v1289 = vrot.slane %v1275, %v1288
        %v1290 = vcombine.high %v1282, %v1282
        %v1291 = vcombine.high %v1289, %v1289
        %v1293 = vunpack.c.l.s4 1966171168
        %v1294 = vunpack.c.0.s8 %v1293
        %v1295 = vlaneseq
        %v1296 = vshrl.u32 %v1295, 7
        %v1297 = vsub.s32 %v1294, %v1296
        %v1298 = vrot.slane %v1282, %v1297
        %v1300 = vunpack.c.l.s4 1966171168
        %v1301 = vunpack.c.0.s8 %v1300
        %v1302 = vlaneseq
        %v1303 = vshrl.u32 %v1302, 7
        %v1304 = vsub.s32 %v1301, %v1303
        %v1305 = vrot.slane %v1289, %v1304
        %v1307 = vunpack.c.l.s4 1966171168
        %v1308 = vunpack.c.0.s8 %v1307
        %v1309 = vlaneseq
        %v1310 = vshrl.u32 %v1309, 7
        %v1311 = vsub.s32 %v1308, %v1310
        %v1312 = vrot.slane %v1290, %v1311
        %v1314 = vunpack.c.l.s4 1966171168
        %v1315 = vunpack.c.0.s8 %v1314
        %v1316 = vlaneseq
        %v1317 = vshrl.u32 %v1316, 7
        %v1318 = vsub.s32 %v1315, %v1317
        %v1319 = vrot.slane %v1291, %v1318
        %v1320 = vcombine.high %v1298, %v1298
        %v1321 = vcombine.high %v1305, %v1305
        %v1322 = vcombine.high %v1312, %v1312
        %v1323 = vcombine.high %v1319, %v1319
        %v1332 = vmul.f32 %v1171, %v1298
        %v1333 = vmul.f32 %v1173, %v1312
        %v1334 = vmul.f32 %v1175, %v1320
        %v1335 = vmul.f32 %v1177, %v1322
        %v1336 = vmul.f32 %v1179, %v1305
        %v1337 = vmul.f32 %v1181, %v1319
        %v1338 = vmul.f32 %v1183, %v1321
        %v1339 = vmul.f32 %v1185, %v1323
        %v1340 = vmul.f32 %v1099, %v1202
        %v1341 = vmul.f32 %v1101, %v1203
        %v1342 = vmul.f32 %v1103, %v1204
        %v1343 = vmul.f32 %v1105, %v1205
        %v1344 = vmul.f32 %v1107, %v1206
        %v1345 = vmul.f32 %v1109, %v1207
        %v1346 = vmul.f32 %v1111, %v1208
        %v1347 = vmul.f32 %v1113, %v1209
        %v1348 = vadd.f32 %v1332, %v1340
        %v1349 = vadd.f32 %v1333, %v1341
        %v1350 = vadd.f32 %v1334, %v1342
        %v1351 = vadd.f32 %v1335, %v1343
        %v1352 = vadd.f32 %v1336, %v1344
        %v1353 = vadd.f32 %v1337, %v1345
        %v1354 = vadd.f32 %v1338, %v1346
        %v1355 = vadd.f32 %v1339, %v1347
        %v1356 = vtanh.pop %v1348
        %v1357 = vtanh.pop %v1349
        %v1358 = vtanh.pop %v1350
        %v1359 = vtanh.pop %v1351
        %v1360 = vtanh.pop %v1352
        %v1361 = vtanh.pop %v1353
        %v1362 = vtanh.pop %v1354
        %v1363 = vtanh.pop %v1355
        %v1364 = vmul.f32 %v1259, %v1356
        %v1365 = vmul.f32 %v1261, %v1357
        %v1366 = vmul.f32 %v1263, %v1358
        %v1367 = vmul.f32 %v1265, %v1359
        %v1368 = vmul.f32 %v1267, %v1360
        %v1369 = vmul.f32 %v1269, %v1361
        %v1370 = vmul.f32 %v1271, %v1362
        %v1371 = vmul.f32 %v1273, %v1363
        %1372 = vst [vmem:[%s411] sm:$0x1] %v1364
        %1373 = vst [vmem:[%s411 + $0x8] sm:$0x1] %v1365
        %1374 = vst [vmem:[%s411 + $0x10] sm:$0x1] %v1366
        %1375 = vst [vmem:[%s411 + $0x18] sm:$0x1] %v1367
        %1376 = vst [vmem:[%s411 + $0x20] sm:$0x1] %v1368
        %1377 = vst [vmem:[%s411 + $0x28] sm:$0x1] %v1369
        %1378 = vst [vmem:[%s411 + $0x30] sm:$0x1] %v1370
        %1379 = vst [vmem:[%s411 + $0x38] sm:$0x1] %v1371
        %s1380 = scalar_lea.vmem [#allocation2], 1
        %v1381 = vld [vmem:[%s1380] ss:$8 sm:$0xf]
        %s1382 = scalar_lea.vmem [#allocation2], 33
        %v1383 = vld [vmem:[%s1382] ss:$8 sm:$0xf]
        %s1384 = scalar_lea.vmem [#allocation2], 65
        %v1385 = vld [vmem:[%s1384] ss:$8 sm:$0xf]
        %s1386 = scalar_lea.vmem [#allocation2], 97
        %v1387 = vld [vmem:[%s1386] ss:$8 sm:$0xf]
        %s1388 = scalar_lea.vmem [#allocation2], 129
        %v1389 = vld [vmem:[%s1388] ss:$8 sm:$0xf]
        %s1390 = scalar_lea.vmem [#allocation2], 161
        %v1391 = vld [vmem:[%s1390] ss:$8 sm:$0xf]
        %s1392 = scalar_lea.vmem [#allocation2], 193
        %v1393 = vld [vmem:[%s1392] ss:$8 sm:$0xf]
        %s1394 = scalar_lea.vmem [#allocation2], 225
        %v1395 = vld [vmem:[%s1394] ss:$8 sm:$0xf]
        %v1396 = vld [vmem:[#allocation11] sm:$0xff]
        %v1397 = vld [vmem:[#allocation11 + $0x8] sm:$0xff]
        %v1398 = vld [vmem:[#allocation11 + $0x10] sm:$0xff]
        %v1399 = vld [vmem:[#allocation11 + $0x18] sm:$0xff]
        %v1400 = vld [vmem:[#allocation11 + $0x20] sm:$0xff]
        %v1401 = vld [vmem:[#allocation11 + $0x28] sm:$0xff]
        %v1402 = vld [vmem:[#allocation11 + $0x30] sm:$0xff]
        %v1403 = vld [vmem:[#allocation11 + $0x38] sm:$0xff]
        %v1404 = vld [vmem:[#allocation11 + $0x40] sm:$0xff]
        %v1405 = vld [vmem:[#allocation11 + $0x48] sm:$0xff]
        %v1406 = vld [vmem:[#allocation11 + $0x50] sm:$0xff]
        %v1407 = vld [vmem:[#allocation11 + $0x58] sm:$0xff]
        %v1408 = vld [vmem:[#allocation11 + $0x60] sm:$0xff]
        %v1409 = vld [vmem:[#allocation11 + $0x68] sm:$0xff]
        %v1410 = vld [vmem:[#allocation11 + $0x70] sm:$0xff]
        %v1411 = vld [vmem:[#allocation11 + $0x78] sm:$0xff]
        %v1412 = vld [vmem:[#allocation11 + $0x80] sm:$0xff]
        %v1413 = vld [vmem:[#allocation11 + $0x88] sm:$0xff]
        %v1414 = vld [vmem:[#allocation11 + $0x90] sm:$0xff]
        %v1415 = vld [vmem:[#allocation11 + $0x98] sm:$0xff]
        %v1416 = vld [vmem:[#allocation11 + $0xa0] sm:$0xff]
        %v1417 = vld [vmem:[#allocation11 + $0xa8] sm:$0xff]
        %v1418 = vld [vmem:[#allocation11 + $0xb0] sm:$0xff]
        %v1419 = vld [vmem:[#allocation11 + $0xb8] sm:$0xff]
        %v1420 = vld [vmem:[#allocation11 + $0xc0] sm:$0xff]
        %v1421 = vld [vmem:[#allocation11 + $0xc8] sm:$0xff]
        %v1422 = vld [vmem:[#allocation11 + $0xd0] sm:$0xff]
        %v1423 = vld [vmem:[#allocation11 + $0xd8] sm:$0xff]
        %v1424 = vld [vmem:[#allocation11 + $0xe0] sm:$0xff]
        %v1425 = vld [vmem:[#allocation11 + $0xe8] sm:$0xff]
        %v1426 = vld [vmem:[#allocation11 + $0xf0] sm:$0xff]
        %v1427 = vld [vmem:[#allocation11 + $0xf8] sm:$0xff]
        %v1428 = vld [vmem:[#allocation11 + $0x100] sm:$0xff]
        %v1429 = vld [vmem:[#allocation11 + $0x108] sm:$0xff]
        %v1430 = vld [vmem:[#allocation11 + $0x110] sm:$0xff]
        %v1431 = vld [vmem:[#allocation11 + $0x118] sm:$0xff]
        %v1432 = vld [vmem:[#allocation11 + $0x120] sm:$0xff]
        %v1433 = vld [vmem:[#allocation11 + $0x128] sm:$0xff]
        %v1434 = vld [vmem:[#allocation11 + $0x130] sm:$0xff]
        %v1435 = vld [vmem:[#allocation11 + $0x138] sm:$0xff]
        %v1436 = vld [vmem:[#allocation11 + $0x140] sm:$0xff]
        %v1437 = vld [vmem:[#allocation11 + $0x148] sm:$0xff]
        %v1438 = vld [vmem:[#allocation11 + $0x150] sm:$0xff]
        %v1439 = vld [vmem:[#allocation11 + $0x158] sm:$0xff]
        %v1440 = vld [vmem:[#allocation11 + $0x160] sm:$0xff]
        %v1441 = vld [vmem:[#allocation11 + $0x168] sm:$0xff]
        %v1442 = vld [vmem:[#allocation11 + $0x170] sm:$0xff]
        %v1443 = vld [vmem:[#allocation11 + $0x178] sm:$0xff]
        %v1444 = vld [vmem:[#allocation11 + $0x180] sm:$0xff]
        %v1445 = vld [vmem:[#allocation11 + $0x188] sm:$0xff]
        %v1446 = vld [vmem:[#allocation11 + $0x190] sm:$0xff]
        %v1447 = vld [vmem:[#allocation11 + $0x198] sm:$0xff]
        %v1448 = vld [vmem:[#allocation11 + $0x1a0] sm:$0xff]
        %v1449 = vld [vmem:[#allocation11 + $0x1a8] sm:$0xff]
        %v1450 = vld [vmem:[#allocation11 + $0x1b0] sm:$0xff]
        %v1451 = vld [vmem:[#allocation11 + $0x1b8] sm:$0xff]
        %v1452 = vld [vmem:[#allocation11 + $0x1c0] sm:$0xff]
        %v1453 = vld [vmem:[#allocation11 + $0x1c8] sm:$0xff]
        %v1454 = vld [vmem:[#allocation11 + $0x1d0] sm:$0xff]
        %v1455 = vld [vmem:[#allocation11 + $0x1d8] sm:$0xff]
        %v1456 = vld [vmem:[#allocation11 + $0x1e0] sm:$0xff]
        %v1457 = vld [vmem:[#allocation11 + $0x1e8] sm:$0xff]
        %v1458 = vld [vmem:[#allocation11 + $0x1f0] sm:$0xff]
        %v1459 = vld [vmem:[#allocation11 + $0x1f8] sm:$0xff]
        %v1468 = vcombine.low %v1364, %v1365
        %v1469 = vcombine.low %v1366, %v1367
        %v1470 = vcombine.low %v1368, %v1369
        %v1471 = vcombine.low %v1370, %v1371
        %v1473 = vunpack.c.l.s4 1966171168
        %v1474 = vunpack.c.0.s8 %v1473
        %v1475 = vlaneseq
        %v1476 = vshrl.u32 %v1475, 7
        %v1477 = vsub.s32 %v1474, %v1476
        %v1478 = vrot.slane %v1468, %v1477
        %v1480 = vunpack.c.l.s4 1966171168
        %v1481 = vunpack.c.0.s8 %v1480
        %v1482 = vlaneseq
        %v1483 = vshrl.u32 %v1482, 7
        %v1484 = vsub.s32 %v1481, %v1483
        %v1485 = vrot.slane %v1469, %v1484
        %v1487 = vunpack.c.l.s4 1966171168
        %v1488 = vunpack.c.0.s8 %v1487
        %v1489 = vlaneseq
        %v1490 = vshrl.u32 %v1489, 7
        %v1491 = vsub.s32 %v1488, %v1490
        %v1492 = vrot.slane %v1470, %v1491
        %v1494 = vunpack.c.l.s4 1966171168
        %v1495 = vunpack.c.0.s8 %v1494
        %v1496 = vlaneseq
        %v1497 = vshrl.u32 %v1496, 7
        %v1498 = vsub.s32 %v1495, %v1497
        %v1499 = vrot.slane %v1471, %v1498
        %v1500 = vcombine.low %v1478, %v1485
        %v1501 = vcombine.low %v1492, %v1499
        %v1503 = vunpack.c.l.s4 1966171168
        %v1504 = vunpack.c.0.s8 %v1503
        %v1505 = vlaneseq
        %v1506 = vshrl.u32 %v1505, 7
        %v1507 = vsub.s32 %v1504, %v1506
        %v1508 = vrot.slane %v1500, %v1507
        %v1510 = vunpack.c.l.s4 1966171168
        %v1511 = vunpack.c.0.s8 %v1510
        %v1512 = vlaneseq
        %v1513 = vshrl.u32 %v1512, 7
        %v1514 = vsub.s32 %v1511, %v1513
        %v1515 = vrot.slane %v1501, %v1514
        %v1516 = vcombine.low %v1508, %v1515
        %1518 = vmatprep.subr.mxu0 %v1457
        %1519 = vmatpush1.msra.mxu0 %v1456
        %1520 = vmatprep.subr.mxu0 %v1453
        %1521 = vmatpush1.msra.mxu0 %v1452
        %1522 = vmatprep.subr.mxu0 %v1449
        %1523 = vmatpush1.msra.mxu0 %v1448
        %1524 = vmatprep.subr.mxu0 %v1445
        %1525 = vmatpush1.msra.mxu0 %v1444
        %1526 = vmatprep.subr.mxu0 %v1441
        %1527 = vmatpush1.msra.mxu0 %v1440
        %1528 = vmatprep.subr.mxu0 %v1437
        %1529 = vmatpush1.msra.mxu0 %v1436
        %1530 = vmatprep.subr.mxu0 %v1433
        %1531 = vmatpush1.msra.mxu0 %v1432
        %1532 = vmatprep.subr.mxu0 %v1429
        %1533 = vmatpush1.msra.mxu0 %v1428
        %1534 = vmatprep.subr.mxu0 %v1425
        %1535 = vmatpush1.msra.mxu0 %v1424
        %1536 = vmatprep.subr.mxu0 %v1421
        %1537 = vmatpush1.msra.mxu0 %v1420
        %1538 = vmatprep.subr.mxu0 %v1417
        %1539 = vmatpush1.msra.mxu0 %v1416
        %1540 = vmatprep.subr.mxu0 %v1413
        %1541 = vmatpush1.msra.mxu0 %v1412
        %1542 = vmatprep.subr.mxu0 %v1409
        %1543 = vmatpush1.msra.mxu0 %v1408
        %1544 = vmatprep.subr.mxu0 %v1405
        %1545 = vmatpush1.msra.mxu0 %v1404
        %1546 = vmatprep.subr.mxu0 %v1401
        %1547 = vmatpush1.msra.mxu0 %v1400
        %1548 = vmatprep.subr.mxu0 %v1397
        %1549 = vmatpush1.msra.mxu0 %v1396
        %1550 = vmatprep.subr.mxu0 0.0
        %1551 = vmatpush2.msra.mxu0 0.0
        %1552 = vmatprep.subr.mxu0 0.0
        %1553 = vmatpush2.msra.mxu0 0.0
        %1554 = vmatprep.subr.mxu0 0.0
        %1555 = vmatpush2.msra.mxu0 0.0
        %1556 = vmatprep.subr.mxu0 0.0
        %1557 = vmatpush2.msra.mxu0 0.0
        %1558 = vmatprep.subr.mxu0 0.0
        %1559 = vmatpush2.msra.mxu0 0.0
        %1560 = vmatprep.subr.mxu0 0.0
        %1561 = vmatpush2.msra.mxu0 0.0
        %1562 = vmatprep.subr.mxu0 0.0
        %1563 = vmatpush2.msra.mxu0 0.0
        %1564 = vmatprep.subr.mxu0 0.0
        %1565 = vmatpush2.msra.mxu0 0.0
        %1566 = vmatprep.subr.mxu0 0.0
        %1567 = vmatpush2.msra.mxu0 0.0
        %1568 = vmatprep.subr.mxu0 0.0
        %1569 = vmatpush2.msra.mxu0 0.0
        %1570 = vmatprep.subr.mxu0 0.0
        %1571 = vmatpush2.msra.mxu0 0.0
        %1572 = vmatprep.subr.mxu0 0.0
        %1573 = vmatpush2.msra.mxu0 0.0
        %1574 = vmatprep.subr.mxu0 0.0
        %1575 = vmatpush2.msra.mxu0 0.0
        %1576 = vmatprep.subr.mxu0 0.0
        %1577 = vmatpush2.msra.mxu0 0.0
        %1578 = vmatprep.subr.mxu0 0.0
        %1579 = vmatpush2.msra.mxu0 0.0
        %1580 = vmatprep.subr.mxu0 0.0
        %1581 = vmatpush2.msra.mxu0 0.0
        %1582 = vmatprep.mubr.f32.mxu0 0.0
        %1583 = vmatmul.mubr.f32.gmra.mxu0 %v1516
        %v1584 = vpop.f32.mrf.mxu0
        %v1585 = vadd.f32 0.0, %v1584
        %v1586 = vpop.f32.mrf.mxu0
        %v1587 = vadd.f32 0.0, %v1586
        %1588 = vdwg.mxu0
        %1589 = vmatprep.subr.mxu0 %v1459
        %1590 = vmatpush1.msra.mxu0 %v1458
        %1591 = vmatprep.subr.mxu0 %v1455
        %1592 = vmatpush1.msra.mxu0 %v1454
        %1593 = vmatprep.subr.mxu0 %v1451
        %1594 = vmatpush1.msra.mxu0 %v1450
        %1595 = vmatprep.subr.mxu0 %v1447
        %1596 = vmatpush1.msra.mxu0 %v1446
        %1597 = vmatprep.subr.mxu0 %v1443
        %1598 = vmatpush1.msra.mxu0 %v1442
        %1599 = vmatprep.subr.mxu0 %v1439
        %1600 = vmatpush1.msra.mxu0 %v1438
        %1601 = vmatprep.subr.mxu0 %v1435
        %1602 = vmatpush1.msra.mxu0 %v1434
        %1603 = vmatprep.subr.mxu0 %v1431
        %1604 = vmatpush1.msra.mxu0 %v1430
        %1605 = vmatprep.subr.mxu0 %v1427
        %1606 = vmatpush1.msra.mxu0 %v1426
        %1607 = vmatprep.subr.mxu0 %v1423
        %1608 = vmatpush1.msra.mxu0 %v1422
        %1609 = vmatprep.subr.mxu0 %v1419
        %1610 = vmatpush1.msra.mxu0 %v1418
        %1611 = vmatprep.subr.mxu0 %v1415
        %1612 = vmatpush1.msra.mxu0 %v1414
        %1613 = vmatprep.subr.mxu0 %v1411
        %1614 = vmatpush1.msra.mxu0 %v1410
        %1615 = vmatprep.subr.mxu0 %v1407
        %1616 = vmatpush1.msra.mxu0 %v1406
        %1617 = vmatprep.subr.mxu0 %v1403
        %1618 = vmatpush1.msra.mxu0 %v1402
        %1619 = vmatprep.subr.mxu0 %v1399
        %1620 = vmatpush1.msra.mxu0 %v1398
        %1621 = vmatprep.subr.mxu0 0.0
        %1622 = vmatpush2.msra.mxu0 0.0
        %1623 = vmatprep.subr.mxu0 0.0
        %1624 = vmatpush2.msra.mxu0 0.0
        %1625 = vmatprep.subr.mxu0 0.0
        %1626 = vmatpush2.msra.mxu0 0.0
        %1627 = vmatprep.subr.mxu0 0.0
        %1628 = vmatpush2.msra.mxu0 0.0
        %1629 = vmatprep.subr.mxu0 0.0
        %1630 = vmatpush2.msra.mxu0 0.0
        %1631 = vmatprep.subr.mxu0 0.0
        %1632 = vmatpush2.msra.mxu0 0.0
        %1633 = vmatprep.subr.mxu0 0.0
        %1634 = vmatpush2.msra.mxu0 0.0
        %1635 = vmatprep.subr.mxu0 0.0
        %1636 = vmatpush2.msra.mxu0 0.0
        %1637 = vmatprep.subr.mxu0 0.0
        %1638 = vmatpush2.msra.mxu0 0.0
        %1639 = vmatprep.subr.mxu0 0.0
        %1640 = vmatpush2.msra.mxu0 0.0
        %1641 = vmatprep.subr.mxu0 0.0
        %1642 = vmatpush2.msra.mxu0 0.0
        %1643 = vmatprep.subr.mxu0 0.0
        %1644 = vmatpush2.msra.mxu0 0.0
        %1645 = vmatprep.subr.mxu0 0.0
        %1646 = vmatpush2.msra.mxu0 0.0
        %1647 = vmatprep.subr.mxu0 0.0
        %1648 = vmatpush2.msra.mxu0 0.0
        %1649 = vmatprep.subr.mxu0 0.0
        %1650 = vmatpush2.msra.mxu0 0.0
        %1651 = vmatprep.subr.mxu0 0.0
        %1652 = vmatpush2.msra.mxu0 0.0
        %1653 = vmatprep.mubr.f32.mxu0 0.0
        %1654 = vmatmul.mubr.f32.gmra.mxu0 %v1516
        %v1655 = vpop.f32.mrf.mxu0
        %v1656 = vadd.f32 0.0, %v1655
        %v1657 = vpop.f32.mrf.mxu0
        %v1658 = vadd.f32 0.0, %v1657
        %1659 = vdwg.mxu0
        %v1664 = vcombine.low %v1585, %v1587
        %v1665 = vcombine.high %v1585, %v1587
        %v1666 = vcombine.low %v1656, %v1658
        %v1667 = vcombine.high %v1656, %v1658
        %v1669 = vunpack.c.l.s4 1966171168
        %v1670 = vunpack.c.0.s8 %v1669
        %v1671 = vlaneseq
        %v1672 = vshrl.u32 %v1671, 7
        %v1673 = vsub.s32 %v1670, %v1672
        %v1674 = vrot.slane %v1664, %v1673
        %v1676 = vunpack.c.l.s4 1966171168
        %v1677 = vunpack.c.0.s8 %v1676
        %v1678 = vlaneseq
        %v1679 = vshrl.u32 %v1678, 7
        %v1680 = vsub.s32 %v1677, %v1679
        %v1681 = vrot.slane %v1665, %v1680
        %v1683 = vunpack.c.l.s4 1966171168
        %v1684 = vunpack.c.0.s8 %v1683
        %v1685 = vlaneseq
        %v1686 = vshrl.u32 %v1685, 7
        %v1687 = vsub.s32 %v1684, %v1686
        %v1688 = vrot.slane %v1666, %v1687
        %v1690 = vunpack.c.l.s4 1966171168
        %v1691 = vunpack.c.0.s8 %v1690
        %v1692 = vlaneseq
        %v1693 = vshrl.u32 %v1692, 7
        %v1694 = vsub.s32 %v1691, %v1693
        %v1695 = vrot.slane %v1667, %v1694
        %v1696 = vcombine.low %v1674, %v1688
        %v1697 = vcombine.high %v1674, %v1688
        %v1698 = vcombine.low %v1681, %v1695
        %v1699 = vcombine.high %v1681, %v1695
        %v1701 = vunpack.c.l.s4 1966171168
        %v1702 = vunpack.c.0.s8 %v1701
        %v1703 = vlaneseq
        %v1704 = vshrl.u32 %v1703, 7
        %v1705 = vsub.s32 %v1702, %v1704
        %v1706 = vrot.slane %v1696, %v1705
        %v1708 = vunpack.c.l.s4 1966171168
        %v1709 = vunpack.c.0.s8 %v1708
        %v1710 = vlaneseq
        %v1711 = vshrl.u32 %v1710, 7
        %v1712 = vsub.s32 %v1709, %v1711
        %v1713 = vrot.slane %v1698, %v1712
        %v1715 = vunpack.c.l.s4 1966171168
        %v1716 = vunpack.c.0.s8 %v1715
        %v1717 = vlaneseq
        %v1718 = vshrl.u32 %v1717, 7
        %v1719 = vsub.s32 %v1716, %v1718
        %v1720 = vrot.slane %v1697, %v1719
        %v1722 = vunpack.c.l.s4 1966171168
        %v1723 = vunpack.c.0.s8 %v1722
        %v1724 = vlaneseq
        %v1725 = vshrl.u32 %v1724, 7
        %v1726 = vsub.s32 %v1723, %v1725
        %v1727 = vrot.slane %v1699, %v1726
        %v1728 = vcombine.high %v1706, %v1706
        %v1729 = vcombine.high %v1713, %v1713
        %v1730 = vcombine.high %v1720, %v1720
        %v1731 = vcombine.high %v1727, %v1727
        %v1740 = vadd.f32 %v1381, %v1706
        %v1741 = vadd.f32 %v1383, %v1720
        %v1742 = vadd.f32 %v1385, %v1728
        %v1743 = vadd.f32 %v1387, %v1730
        %v1744 = vadd.f32 %v1389, %v1713
        %v1745 = vadd.f32 %v1391, %v1727
        %v1746 = vadd.f32 %v1393, %v1729
        %v1747 = vadd.f32 %v1395, %v1731
        %v1748 = vxor.u32 %v1740, 2147483648
        %v1749 = vxor.u32 %v1741, 2147483648
        %v1750 = vxor.u32 %v1742, 2147483648
        %v1751 = vxor.u32 %v1743, 2147483648
        %v1752 = vxor.u32 %v1744, 2147483648
        %v1753 = vxor.u32 %v1745, 2147483648
        %v1754 = vxor.u32 %v1746, 2147483648
        %v1755 = vxor.u32 %v1747, 2147483648
        %v1756 = vmul.f32 %v1748, 1.442695
        %v1757 = vpow.pop %v1756
        %v1758 = vmul.f32 %v1749, 1.442695
        %v1759 = vpow.pop %v1758
        %v1760 = vmul.f32 %v1750, 1.442695
        %v1761 = vpow.pop %v1760
        %v1762 = vmul.f32 %v1751, 1.442695
        %v1763 = vpow.pop %v1762
        %v1764 = vmul.f32 %v1752, 1.442695
        %v1765 = vpow.pop %v1764
        %v1766 = vmul.f32 %v1753, 1.442695
        %v1767 = vpow.pop %v1766
        %v1768 = vmul.f32 %v1754, 1.442695
        %v1769 = vpow.pop %v1768
        %v1770 = vmul.f32 %v1755, 1.442695
        %v1771 = vpow.pop %v1770
        %v1772 = vadd.f32 %v1757, 1.0
        %v1773 = vadd.f32 %v1759, 1.0
        %v1774 = vadd.f32 %v1761, 1.0
        %v1775 = vadd.f32 %v1763, 1.0
        %v1776 = vadd.f32 %v1765, 1.0
        %v1777 = vadd.f32 %v1767, 1.0
        %v1778 = vadd.f32 %v1769, 1.0
        %v1779 = vadd.f32 %v1771, 1.0
        %v1780 = vrcp.pop %v1772
        %v1781 = vmul.f32 1.0, %v1780
        %v1782 = vrcp.pop %v1773
        %v1783 = vmul.f32 1.0, %v1782
        %v1784 = vrcp.pop %v1774
        %v1785 = vmul.f32 1.0, %v1784
        %v1786 = vrcp.pop %v1775
        %v1787 = vmul.f32 1.0, %v1786
        %v1788 = vrcp.pop %v1776
        %v1789 = vmul.f32 1.0, %v1788
        %v1790 = vrcp.pop %v1777
        %v1791 = vmul.f32 1.0, %v1790
        %v1792 = vrcp.pop %v1778
        %v1793 = vmul.f32 1.0, %v1792
        %v1794 = vrcp.pop %v1779
        %v1795 = vmul.f32 1.0, %v1794
        %v1804 = vrot.slane %v1740, 1
        %v1805 = vrot.slane %v1741, 1
        %v1806 = vrot.slane %v1742, 1
        %v1807 = vrot.slane %v1743, 1
        %v1808 = vrot.slane %v1744, 1
        %v1809 = vrot.slane %v1745, 1
        %v1810 = vrot.slane %v1746, 1
        %v1811 = vrot.slane %v1747, 1
        %v1820 = vxor.u32 %v1804, 2147483648
        %v1821 = vxor.u32 %v1805, 2147483648
        %v1822 = vxor.u32 %v1806, 2147483648
        %v1823 = vxor.u32 %v1807, 2147483648
        %v1824 = vxor.u32 %v1808, 2147483648
        %v1825 = vxor.u32 %v1809, 2147483648
        %v1826 = vxor.u32 %v1810, 2147483648
        %v1827 = vxor.u32 %v1811, 2147483648
        %v1828 = vmul.f32 %v1820, 1.442695
        %v1829 = vpow.pop %v1828
        %v1830 = vmul.f32 %v1821, 1.442695
        %v1831 = vpow.pop %v1830
        %v1832 = vmul.f32 %v1822, 1.442695
        %v1833 = vpow.pop %v1832
        %v1834 = vmul.f32 %v1823, 1.442695
        %v1835 = vpow.pop %v1834
        %v1836 = vmul.f32 %v1824, 1.442695
        %v1837 = vpow.pop %v1836
        %v1838 = vmul.f32 %v1825, 1.442695
        %v1839 = vpow.pop %v1838
        %v1840 = vmul.f32 %v1826, 1.442695
        %v1841 = vpow.pop %v1840
        %v1842 = vmul.f32 %v1827, 1.442695
        %v1843 = vpow.pop %v1842
        %v1844 = vadd.f32 %v1829, 1.0
        %v1845 = vadd.f32 %v1831, 1.0
        %v1846 = vadd.f32 %v1833, 1.0
        %v1847 = vadd.f32 %v1835, 1.0
        %v1848 = vadd.f32 %v1837, 1.0
        %v1849 = vadd.f32 %v1839, 1.0
        %v1850 = vadd.f32 %v1841, 1.0
        %v1851 = vadd.f32 %v1843, 1.0
        %v1852 = vrcp.pop %v1844
        %v1853 = vmul.f32 1.0, %v1852
        %v1854 = vrcp.pop %v1845
        %v1855 = vmul.f32 1.0, %v1854
        %v1856 = vrcp.pop %v1846
        %v1857 = vmul.f32 1.0, %v1856
        %v1858 = vrcp.pop %v1847
        %v1859 = vmul.f32 1.0, %v1858
        %v1860 = vrcp.pop %v1848
        %v1861 = vmul.f32 1.0, %v1860
        %v1862 = vrcp.pop %v1849
        %v1863 = vmul.f32 1.0, %v1862
        %v1864 = vrcp.pop %v1850
        %v1865 = vmul.f32 1.0, %v1864
        %v1866 = vrcp.pop %v1851
        %v1867 = vmul.f32 1.0, %v1866
        %v1868 = vrot.slane %v1740, 2
        %v1869 = vrot.slane %v1741, 2
        %v1870 = vrot.slane %v1742, 2
        %v1871 = vrot.slane %v1743, 2
        %v1872 = vrot.slane %v1744, 2
        %v1873 = vrot.slane %v1745, 2
        %v1874 = vrot.slane %v1746, 2
        %v1875 = vrot.slane %v1747, 2
        %v1884 = vtanh.pop %v1868
        %v1885 = vtanh.pop %v1869
        %v1886 = vtanh.pop %v1870
        %v1887 = vtanh.pop %v1871
        %v1888 = vtanh.pop %v1872
        %v1889 = vtanh.pop %v1873
        %v1890 = vtanh.pop %v1874
        %v1891 = vtanh.pop %v1875
        %v1892 = vrot.slane %v1740, 3
        %v1893 = vrot.slane %v1741, 3
        %v1894 = vrot.slane %v1742, 3
        %v1895 = vrot.slane %v1743, 3
        %v1896 = vrot.slane %v1744, 3
        %v1897 = vrot.slane %v1745, 3
        %v1898 = vrot.slane %v1746, 3
        %v1899 = vrot.slane %v1747, 3
        %v1908 = vxor.u32 %v1892, 2147483648
        %v1909 = vxor.u32 %v1893, 2147483648
        %v1910 = vxor.u32 %v1894, 2147483648
        %v1911 = vxor.u32 %v1895, 2147483648
        %v1912 = vxor.u32 %v1896, 2147483648
        %v1913 = vxor.u32 %v1897, 2147483648
        %v1914 = vxor.u32 %v1898, 2147483648
        %v1915 = vxor.u32 %v1899, 2147483648
        %v1916 = vmul.f32 %v1908, 1.442695
        %v1917 = vpow.pop %v1916
        %v1918 = vmul.f32 %v1909, 1.442695
        %v1919 = vpow.pop %v1918
        %v1920 = vmul.f32 %v1910, 1.442695
        %v1921 = vpow.pop %v1920
        %v1922 = vmul.f32 %v1911, 1.442695
        %v1923 = vpow.pop %v1922
        %v1924 = vmul.f32 %v1912, 1.442695
        %v1925 = vpow.pop %v1924
        %v1926 = vmul.f32 %v1913, 1.442695
        %v1927 = vpow.pop %v1926
        %v1928 = vmul.f32 %v1914, 1.442695
        %v1929 = vpow.pop %v1928
        %v1930 = vmul.f32 %v1915, 1.442695
        %v1931 = vpow.pop %v1930
        %v1932 = vadd.f32 %v1917, 1.0
        %v1933 = vadd.f32 %v1919, 1.0
        %v1934 = vadd.f32 %v1921, 1.0
        %v1935 = vadd.f32 %v1923, 1.0
        %v1936 = vadd.f32 %v1925, 1.0
        %v1937 = vadd.f32 %v1927, 1.0
        %v1938 = vadd.f32 %v1929, 1.0
        %v1939 = vadd.f32 %v1931, 1.0
        %v1940 = vrcp.pop %v1932
        %v1941 = vmul.f32 1.0, %v1940
        %v1942 = vrcp.pop %v1933
        %v1943 = vmul.f32 1.0, %v1942
        %v1944 = vrcp.pop %v1934
        %v1945 = vmul.f32 1.0, %v1944
        %v1946 = vrcp.pop %v1935
        %v1947 = vmul.f32 1.0, %v1946
        %v1948 = vrcp.pop %v1936
        %v1949 = vmul.f32 1.0, %v1948
        %v1950 = vrcp.pop %v1937
        %v1951 = vmul.f32 1.0, %v1950
        %v1952 = vrcp.pop %v1938
        %v1953 = vmul.f32 1.0, %v1952
        %v1954 = vrcp.pop %v1939
        %v1955 = vmul.f32 1.0, %v1954
        %v1956 = vmul.f32 %v1853, %v1348
        %v1957 = vmul.f32 %v1855, %v1349
        %v1958 = vmul.f32 %v1857, %v1350
        %v1959 = vmul.f32 %v1859, %v1351
        %v1960 = vmul.f32 %v1861, %v1352
        %v1961 = vmul.f32 %v1863, %v1353
        %v1962 = vmul.f32 %v1865, %v1354
        %v1963 = vmul.f32 %v1867, %v1355
        %v1964 = vmul.f32 %v1781, %v1884
        %v1965 = vmul.f32 %v1783, %v1885
        %v1966 = vmul.f32 %v1785, %v1886
        %v1967 = vmul.f32 %v1787, %v1887
        %v1968 = vmul.f32 %v1789, %v1888
        %v1969 = vmul.f32 %v1791, %v1889
        %v1970 = vmul.f32 %v1793, %v1890
        %v1971 = vmul.f32 %v1795, %v1891
        %v1972 = vadd.f32 %v1956, %v1964
        %v1973 = vadd.f32 %v1957, %v1965
        %v1974 = vadd.f32 %v1958, %v1966
        %v1975 = vadd.f32 %v1959, %v1967
        %v1976 = vadd.f32 %v1960, %v1968
        %v1977 = vadd.f32 %v1961, %v1969
        %v1978 = vadd.f32 %v1962, %v1970
        %v1979 = vadd.f32 %v1963, %v1971
        %v1980 = vtanh.pop %v1972
        %v1981 = vtanh.pop %v1973
        %v1982 = vtanh.pop %v1974
        %v1983 = vtanh.pop %v1975
        %v1984 = vtanh.pop %v1976
        %v1985 = vtanh.pop %v1977
        %v1986 = vtanh.pop %v1978
        %v1987 = vtanh.pop %v1979
        %v1988 = vmul.f32 %v1941, %v1980
        %v1989 = vmul.f32 %v1943, %v1981
        %v1990 = vmul.f32 %v1945, %v1982
        %v1991 = vmul.f32 %v1947, %v1983
        %v1992 = vmul.f32 %v1949, %v1984
        %v1993 = vmul.f32 %v1951, %v1985
        %v1994 = vmul.f32 %v1953, %v1986
        %v1995 = vmul.f32 %v1955, %v1987
        %1996 = vst [vmem:[%s411 + $0x1] sm:$0x1] %v1988
        %1997 = vst [vmem:[%s411 + $0x9] sm:$0x1] %v1989
        %1998 = vst [vmem:[%s411 + $0x11] sm:$0x1] %v1990
        %1999 = vst [vmem:[%s411 + $0x19] sm:$0x1] %v1991
        %2000 = vst [vmem:[%s411 + $0x21] sm:$0x1] %v1992
        %2001 = vst [vmem:[%s411 + $0x29] sm:$0x1] %v1993
        %2002 = vst [vmem:[%s411 + $0x31] sm:$0x1] %v1994
        %2003 = vst [vmem:[%s411 + $0x39] sm:$0x1] %v1995
        %s2004 = scalar_lea.vmem [#allocation2], 2
        %v2005 = vld [vmem:[%s2004] ss:$8 sm:$0xf]
        %s2006 = scalar_lea.vmem [#allocation2], 34
        %v2007 = vld [vmem:[%s2006] ss:$8 sm:$0xf]
        %s2008 = scalar_lea.vmem [#allocation2], 66
        %v2009 = vld [vmem:[%s2008] ss:$8 sm:$0xf]
        %s2010 = scalar_lea.vmem [#allocation2], 98
        %v2011 = vld [vmem:[%s2010] ss:$8 sm:$0xf]
        %s2012 = scalar_lea.vmem [#allocation2], 130
        %v2013 = vld [vmem:[%s2012] ss:$8 sm:$0xf]
        %s2014 = scalar_lea.vmem [#allocation2], 162
        %v2015 = vld [vmem:[%s2014] ss:$8 sm:$0xf]
        %s2016 = scalar_lea.vmem [#allocation2], 194
        %v2017 = vld [vmem:[%s2016] ss:$8 sm:$0xf]
        %s2018 = scalar_lea.vmem [#allocation2], 226
        %v2019 = vld [vmem:[%s2018] ss:$8 sm:$0xf]
        %v2020 = vld [vmem:[#allocation11] sm:$0xff]
        %v2021 = vld [vmem:[#allocation11 + $0x8] sm:$0xff]
        %v2022 = vld [vmem:[#allocation11 + $0x10] sm:$0xff]
        %v2023 = vld [vmem:[#allocation11 + $0x18] sm:$0xff]
        %v2024 = vld [vmem:[#allocation11 + $0x20] sm:$0xff]
        %v2025 = vld [vmem:[#allocation11 + $0x28] sm:$0xff]
        %v2026 = vld [vmem:[#allocation11 + $0x30] sm:$0xff]
        %v2027 = vld [vmem:[#allocation11 + $0x38] sm:$0xff]
        %v2028 = vld [vmem:[#allocation11 + $0x40] sm:$0xff]
        %v2029 = vld [vmem:[#allocation11 + $0x48] sm:$0xff]
        %v2030 = vld [vmem:[#allocation11 + $0x50] sm:$0xff]
        %v2031 = vld [vmem:[#allocation11 + $0x58] sm:$0xff]
        %v2032 = vld [vmem:[#allocation11 + $0x60] sm:$0xff]
        %v2033 = vld [vmem:[#allocation11 + $0x68] sm:$0xff]
        %v2034 = vld [vmem:[#allocation11 + $0x70] sm:$0xff]
        %v2035 = vld [vmem:[#allocation11 + $0x78] sm:$0xff]
        %v2036 = vld [vmem:[#allocation11 + $0x80] sm:$0xff]
        %v2037 = vld [vmem:[#allocation11 + $0x88] sm:$0xff]
        %v2038 = vld [vmem:[#allocation11 + $0x90] sm:$0xff]
        %v2039 = vld [vmem:[#allocation11 + $0x98] sm:$0xff]
        %v2040 = vld [vmem:[#allocation11 + $0xa0] sm:$0xff]
        %v2041 = vld [vmem:[#allocation11 + $0xa8] sm:$0xff]
        %v2042 = vld [vmem:[#allocation11 + $0xb0] sm:$0xff]
        %v2043 = vld [vmem:[#allocation11 + $0xb8] sm:$0xff]
        %v2044 = vld [vmem:[#allocation11 + $0xc0] sm:$0xff]
        %v2045 = vld [vmem:[#allocation11 + $0xc8] sm:$0xff]
        %v2046 = vld [vmem:[#allocation11 + $0xd0] sm:$0xff]
        %v2047 = vld [vmem:[#allocation11 + $0xd8] sm:$0xff]
        %v2048 = vld [vmem:[#allocation11 + $0xe0] sm:$0xff]
        %v2049 = vld [vmem:[#allocation11 + $0xe8] sm:$0xff]
        %v2050 = vld [vmem:[#allocation11 + $0xf0] sm:$0xff]
        %v2051 = vld [vmem:[#allocation11 + $0xf8] sm:$0xff]
        %v2052 = vld [vmem:[#allocation11 + $0x100] sm:$0xff]
        %v2053 = vld [vmem:[#allocation11 + $0x108] sm:$0xff]
        %v2054 = vld [vmem:[#allocation11 + $0x110] sm:$0xff]
        %v2055 = vld [vmem:[#allocation11 + $0x118] sm:$0xff]
        %v2056 = vld [vmem:[#allocation11 + $0x120] sm:$0xff]
        %v2057 = vld [vmem:[#allocation11 + $0x128] sm:$0xff]
        %v2058 = vld [vmem:[#allocation11 + $0x130] sm:$0xff]
        %v2059 = vld [vmem:[#allocation11 + $0x138] sm:$0xff]
        %v2060 = vld [vmem:[#allocation11 + $0x140] sm:$0xff]
        %v2061 = vld [vmem:[#allocation11 + $0x148] sm:$0xff]
        %v2062 = vld [vmem:[#allocation11 + $0x150] sm:$0xff]
        %v2063 = vld [vmem:[#allocation11 + $0x158] sm:$0xff]
        %v2064 = vld [vmem:[#allocation11 + $0x160] sm:$0xff]
        %v2065 = vld [vmem:[#allocation11 + $0x168] sm:$0xff]
        %v2066 = vld [vmem:[#allocation11 + $0x170] sm:$0xff]
        %v2067 = vld [vmem:[#allocation11 + $0x178] sm:$0xff]
        %v2068 = vld [vmem:[#allocation11 + $0x180] sm:$0xff]
        %v2069 = vld [vmem:[#allocation11 + $0x188] sm:$0xff]
        %v2070 = vld [vmem:[#allocation11 + $0x190] sm:$0xff]
        %v2071 = vld [vmem:[#allocation11 + $0x198] sm:$0xff]
        %v2072 = vld [vmem:[#allocation11 + $0x1a0] sm:$0xff]
        %v2073 = vld [vmem:[#allocation11 + $0x1a8] sm:$0xff]
        %v2074 = vld [vmem:[#allocation11 + $0x1b0] sm:$0xff]
        %v2075 = vld [vmem:[#allocation11 + $0x1b8] sm:$0xff]
        %v2076 = vld [vmem:[#allocation11 + $0x1c0] sm:$0xff]
        %v2077 = vld [vmem:[#allocation11 + $0x1c8] sm:$0xff]
        %v2078 = vld [vmem:[#allocation11 + $0x1d0] sm:$0xff]
        %v2079 = vld [vmem:[#allocation11 + $0x1d8] sm:$0xff]
        %v2080 = vld [vmem:[#allocation11 + $0x1e0] sm:$0xff]
        %v2081 = vld [vmem:[#allocation11 + $0x1e8] sm:$0xff]
        %v2082 = vld [vmem:[#allocation11 + $0x1f0] sm:$0xff]
        %v2083 = vld [vmem:[#allocation11 + $0x1f8] sm:$0xff]
        %v2092 = vcombine.low %v1988, %v1989
        %v2093 = vcombine.low %v1990, %v1991
        %v2094 = vcombine.low %v1992, %v1993
        %v2095 = vcombine.low %v1994, %v1995
        %v2097 = vunpack.c.l.s4 1966171168
        %v2098 = vunpack.c.0.s8 %v2097
        %v2099 = vlaneseq
        %v2100 = vshrl.u32 %v2099, 7
        %v2101 = vsub.s32 %v2098, %v2100
        %v2102 = vrot.slane %v2092, %v2101
        %v2104 = vunpack.c.l.s4 1966171168
        %v2105 = vunpack.c.0.s8 %v2104
        %v2106 = vlaneseq
        %v2107 = vshrl.u32 %v2106, 7
        %v2108 = vsub.s32 %v2105, %v2107
        %v2109 = vrot.slane %v2093, %v2108
        %v2111 = vunpack.c.l.s4 1966171168
        %v2112 = vunpack.c.0.s8 %v2111
        %v2113 = vlaneseq
        %v2114 = vshrl.u32 %v2113, 7
        %v2115 = vsub.s32 %v2112, %v2114
        %v2116 = vrot.slane %v2094, %v2115
        %v2118 = vunpack.c.l.s4 1966171168
        %v2119 = vunpack.c.0.s8 %v2118
        %v2120 = vlaneseq
        %v2121 = vshrl.u32 %v2120, 7
        %v2122 = vsub.s32 %v2119, %v2121
        %v2123 = vrot.slane %v2095, %v2122
        %v2124 = vcombine.low %v2102, %v2109
        %v2125 = vcombine.low %v2116, %v2123
        %v2127 = vunpack.c.l.s4 1966171168
        %v2128 = vunpack.c.0.s8 %v2127
        %v2129 = vlaneseq
        %v2130 = vshrl.u32 %v2129, 7
        %v2131 = vsub.s32 %v2128, %v2130
        %v2132 = vrot.slane %v2124, %v2131
        %v2134 = vunpack.c.l.s4 1966171168
        %v2135 = vunpack.c.0.s8 %v2134
        %v2136 = vlaneseq
        %v2137 = vshrl.u32 %v2136, 7
        %v2138 = vsub.s32 %v2135, %v2137
        %v2139 = vrot.slane %v2125, %v2138
        %v2140 = vcombine.low %v2132, %v2139
        %2142 = vmatprep.subr.mxu0 %v2081
        %2143 = vmatpush1.msra.mxu0 %v2080
        %2144 = vmatprep.subr.mxu0 %v2077
        %2145 = vmatpush1.msra.mxu0 %v2076
        %2146 = vmatprep.subr.mxu0 %v2073
        %2147 = vmatpush1.msra.mxu0 %v2072
        %2148 = vmatprep.subr.mxu0 %v2069
        %2149 = vmatpush1.msra.mxu0 %v2068
        %2150 = vmatprep.subr.mxu0 %v2065
        %2151 = vmatpush1.msra.mxu0 %v2064
        %2152 = vmatprep.subr.mxu0 %v2061
        %2153 = vmatpush1.msra.mxu0 %v2060
        %2154 = vmatprep.subr.mxu0 %v2057
        %2155 = vmatpush1.msra.mxu0 %v2056
        %2156 = vmatprep.subr.mxu0 %v2053
        %2157 = vmatpush1.msra.mxu0 %v2052
        %2158 = vmatprep.subr.mxu0 %v2049
        %2159 = vmatpush1.msra.mxu0 %v2048
        %2160 = vmatprep.subr.mxu0 %v2045
        %2161 = vmatpush1.msra.mxu0 %v2044
        %2162 = vmatprep.subr.mxu0 %v2041
        %2163 = vmatpush1.msra.mxu0 %v2040
        %2164 = vmatprep.subr.mxu0 %v2037
        %2165 = vmatpush1.msra.mxu0 %v2036
        %2166 = vmatprep.subr.mxu0 %v2033
        %2167 = vmatpush1.msra.mxu0 %v2032
        %2168 = vmatprep.subr.mxu0 %v2029
        %2169 = vmatpush1.msra.mxu0 %v2028
        %2170 = vmatprep.subr.mxu0 %v2025
        %2171 = vmatpush1.msra.mxu0 %v2024
        %2172 = vmatprep.subr.mxu0 %v2021
        %2173 = vmatpush1.msra.mxu0 %v2020
        %2174 = vmatprep.subr.mxu0 0.0
        %2175 = vmatpush2.msra.mxu0 0.0
        %2176 = vmatprep.subr.mxu0 0.0
        %2177 = vmatpush2.msra.mxu0 0.0
        %2178 = vmatprep.subr.mxu0 0.0
        %2179 = vmatpush2.msra.mxu0 0.0
        %2180 = vmatprep.subr.mxu0 0.0
        %2181 = vmatpush2.msra.mxu0 0.0
        %2182 = vmatprep.subr.mxu0 0.0
        %2183 = vmatpush2.msra.mxu0 0.0
        %2184 = vmatprep.subr.mxu0 0.0
        %2185 = vmatpush2.msra.mxu0 0.0
        %2186 = vmatprep.subr.mxu0 0.0
        %2187 = vmatpush2.msra.mxu0 0.0
        %2188 = vmatprep.subr.mxu0 0.0
        %2189 = vmatpush2.msra.mxu0 0.0
        %2190 = vmatprep.subr.mxu0 0.0
        %2191 = vmatpush2.msra.mxu0 0.0
        %2192 = vmatprep.subr.mxu0 0.0
        %2193 = vmatpush2.msra.mxu0 0.0
        %2194 = vmatprep.subr.mxu0 0.0
        %2195 = vmatpush2.msra.mxu0 0.0
        %2196 = vmatprep.subr.mxu0 0.0
        %2197 = vmatpush2.msra.mxu0 0.0
        %2198 = vmatprep.subr.mxu0 0.0
        %2199 = vmatpush2.msra.mxu0 0.0
        %2200 = vmatprep.subr.mxu0 0.0
        %2201 = vmatpush2.msra.mxu0 0.0
        %2202 = vmatprep.subr.mxu0 0.0
        %2203 = vmatpush2.msra.mxu0 0.0
        %2204 = vmatprep.subr.mxu0 0.0
        %2205 = vmatpush2.msra.mxu0 0.0
        %2206 = vmatprep.mubr.f32.mxu0 0.0
        %2207 = vmatmul.mubr.f32.gmra.mxu0 %v2140
        %v2208 = vpop.f32.mrf.mxu0
        %v2209 = vadd.f32 0.0, %v2208
        %v2210 = vpop.f32.mrf.mxu0
        %v2211 = vadd.f32 0.0, %v2210
        %2212 = vdwg.mxu0
        %2213 = vmatprep.subr.mxu0 %v2083
        %2214 = vmatpush1.msra.mxu0 %v2082
        %2215 = vmatprep.subr.mxu0 %v2079
        %2216 = vmatpush1.msra.mxu0 %v2078
        %2217 = vmatprep.subr.mxu0 %v2075
        %2218 = vmatpush1.msra.mxu0 %v2074
        %2219 = vmatprep.subr.mxu0 %v2071
        %2220 = vmatpush1.msra.mxu0 %v2070
        %2221 = vmatprep.subr.mxu0 %v2067
        %2222 = vmatpush1.msra.mxu0 %v2066
        %2223 = vmatprep.subr.mxu0 %v2063
        %2224 = vmatpush1.msra.mxu0 %v2062
        %2225 = vmatprep.subr.mxu0 %v2059
        %2226 = vmatpush1.msra.mxu0 %v2058
        %2227 = vmatprep.subr.mxu0 %v2055
        %2228 = vmatpush1.msra.mxu0 %v2054
        %2229 = vmatprep.subr.mxu0 %v2051
        %2230 = vmatpush1.msra.mxu0 %v2050
        %2231 = vmatprep.subr.mxu0 %v2047
        %2232 = vmatpush1.msra.mxu0 %v2046
        %2233 = vmatprep.subr.mxu0 %v2043
        %2234 = vmatpush1.msra.mxu0 %v2042
        %2235 = vmatprep.subr.mxu0 %v2039
        %2236 = vmatpush1.msra.mxu0 %v2038
        %2237 = vmatprep.subr.mxu0 %v2035
        %2238 = vmatpush1.msra.mxu0 %v2034
        %2239 = vmatprep.subr.mxu0 %v2031
        %2240 = vmatpush1.msra.mxu0 %v2030
        %2241 = vmatprep.subr.mxu0 %v2027
        %2242 = vmatpush1.msra.mxu0 %v2026
        %2243 = vmatprep.subr.mxu0 %v2023
        %2244 = vmatpush1.msra.mxu0 %v2022
        %2245 = vmatprep.subr.mxu0 0.0
        %2246 = vmatpush2.msra.mxu0 0.0
        %2247 = vmatprep.subr.mxu0 0.0
        %2248 = vmatpush2.msra.mxu0 0.0
        %2249 = vmatprep.subr.mxu0 0.0
        %2250 = vmatpush2.msra.mxu0 0.0
        %2251 = vmatprep.subr.mxu0 0.0
        %2252 = vmatpush2.msra.mxu0 0.0
        %2253 = vmatprep.subr.mxu0 0.0
        %2254 = vmatpush2.msra.mxu0 0.0
        %2255 = vmatprep.subr.mxu0 0.0
        %2256 = vmatpush2.msra.mxu0 0.0
        %2257 = vmatprep.subr.mxu0 0.0
        %2258 = vmatpush2.msra.mxu0 0.0
        %2259 = vmatprep.subr.mxu0 0.0
        %2260 = vmatpush2.msra.mxu0 0.0
        %2261 = vmatprep.subr.mxu0 0.0
        %2262 = vmatpush2.msra.mxu0 0.0
        %2263 = vmatprep.subr.mxu0 0.0
        %2264 = vmatpush2.msra.mxu0 0.0
        %2265 = vmatprep.subr.mxu0 0.0
        %2266 = vmatpush2.msra.mxu0 0.0
        %2267 = vmatprep.subr.mxu0 0.0
        %2268 = vmatpush2.msra.mxu0 0.0
        %2269 = vmatprep.subr.mxu0 0.0
        %2270 = vmatpush2.msra.mxu0 0.0
        %2271 = vmatprep.subr.mxu0 0.0
        %2272 = vmatpush2.msra.mxu0 0.0
        %2273 = vmatprep.subr.mxu0 0.0
        %2274 = vmatpush2.msra.mxu0 0.0
        %2275 = vmatprep.subr.mxu0 0.0
        %2276 = vmatpush2.msra.mxu0 0.0
        %2277 = vmatprep.mubr.f32.mxu0 0.0
        %2278 = vmatmul.mubr.f32.gmra.mxu0 %v2140
        %v2279 = vpop.f32.mrf.mxu0
        %v2280 = vadd.f32 0.0, %v2279
        %v2281 = vpop.f32.mrf.mxu0
        %v2282 = vadd.f32 0.0, %v2281
        %2283 = vdwg.mxu0
        %v2288 = vcombine.low %v2209, %v2211
        %v2289 = vcombine.high %v2209, %v2211
        %v2290 = vcombine.low %v2280, %v2282
        %v2291 = vcombine.high %v2280, %v2282
        %v2293 = vunpack.c.l.s4 1966171168
        %v2294 = vunpack.c.0.s8 %v2293
        %v2295 = vlaneseq
        %v2296 = vshrl.u32 %v2295, 7
        %v2297 = vsub.s32 %v2294, %v2296
        %v2298 = vrot.slane %v2288, %v2297
        %v2300 = vunpack.c.l.s4 1966171168
        %v2301 = vunpack.c.0.s8 %v2300
        %v2302 = vlaneseq
        %v2303 = vshrl.u32 %v2302, 7
        %v2304 = vsub.s32 %v2301, %v2303
        %v2305 = vrot.slane %v2289, %v2304
        %v2307 = vunpack.c.l.s4 1966171168
        %v2308 = vunpack.c.0.s8 %v2307
        %v2309 = vlaneseq
        %v2310 = vshrl.u32 %v2309, 7
        %v2311 = vsub.s32 %v2308, %v2310
        %v2312 = vrot.slane %v2290, %v2311
        %v2314 = vunpack.c.l.s4 1966171168
        %v2315 = vunpack.c.0.s8 %v2314
        %v2316 = vlaneseq
        %v2317 = vshrl.u32 %v2316, 7
        %v2318 = vsub.s32 %v2315, %v2317
        %v2319 = vrot.slane %v2291, %v2318
        %v2320 = vcombine.low %v2298, %v2312
        %v2321 = vcombine.high %v2298, %v2312
        %v2322 = vcombine.low %v2305, %v2319
        %v2323 = vcombine.high %v2305, %v2319
        %v2325 = vunpack.c.l.s4 1966171168
        %v2326 = vunpack.c.0.s8 %v2325
        %v2327 = vlaneseq
        %v2328 = vshrl.u32 %v2327, 7
        %v2329 = vsub.s32 %v2326, %v2328
        %v2330 = vrot.slane %v2320, %v2329
        %v2332 = vunpack.c.l.s4 1966171168
        %v2333 = vunpack.c.0.s8 %v2332
        %v2334 = vlaneseq
        %v2335 = vshrl.u32 %v2334, 7
        %v2336 = vsub.s32 %v2333, %v2335
        %v2337 = vrot.slane %v2322, %v2336
        %v2339 = vunpack.c.l.s4 1966171168
        %v2340 = vunpack.c.0.s8 %v2339
        %v2341 = vlaneseq
        %v2342 = vshrl.u32 %v2341, 7
        %v2343 = vsub.s32 %v2340, %v2342
        %v2344 = vrot.slane %v2321, %v2343
        %v2346 = vunpack.c.l.s4 1966171168
        %v2347 = vunpack.c.0.s8 %v2346
        %v2348 = vlaneseq
        %v2349 = vshrl.u32 %v2348, 7
        %v2350 = vsub.s32 %v2347, %v2349
        %v2351 = vrot.slane %v2323, %v2350
        %v2352 = vcombine.high %v2330, %v2330
        %v2353 = vcombine.high %v2337, %v2337
        %v2354 = vcombine.high %v2344, %v2344
        %v2355 = vcombine.high %v2351, %v2351
        %v2364 = vadd.f32 %v2005, %v2330
        %v2365 = vadd.f32 %v2007, %v2344
        %v2366 = vadd.f32 %v2009, %v2352
        %v2367 = vadd.f32 %v2011, %v2354
        %v2368 = vadd.f32 %v2013, %v2337
        %v2369 = vadd.f32 %v2015, %v2351
        %v2370 = vadd.f32 %v2017, %v2353
        %v2371 = vadd.f32 %v2019, %v2355
        %v2372 = vxor.u32 %v2364, 2147483648
        %v2373 = vxor.u32 %v2365, 2147483648
        %v2374 = vxor.u32 %v2366, 2147483648
        %v2375 = vxor.u32 %v2367, 2147483648
        %v2376 = vxor.u32 %v2368, 2147483648
        %v2377 = vxor.u32 %v2369, 2147483648
        %v2378 = vxor.u32 %v2370, 2147483648
        %v2379 = vxor.u32 %v2371, 2147483648
        %v2380 = vmul.f32 %v2372, 1.442695
        %v2381 = vpow.pop %v2380
        %v2382 = vmul.f32 %v2373, 1.442695
        %v2383 = vpow.pop %v2382
        %v2384 = vmul.f32 %v2374, 1.442695
        %v2385 = vpow.pop %v2384
        %v2386 = vmul.f32 %v2375, 1.442695
        %v2387 = vpow.pop %v2386
        %v2388 = vmul.f32 %v2376, 1.442695
        %v2389 = vpow.pop %v2388
        %v2390 = vmul.f32 %v2377, 1.442695
        %v2391 = vpow.pop %v2390
        %v2392 = vmul.f32 %v2378, 1.442695
        %v2393 = vpow.pop %v2392
        %v2394 = vmul.f32 %v2379, 1.442695
        %v2395 = vpow.pop %v2394
        %v2396 = vadd.f32 %v2381, 1.0
        %v2397 = vadd.f32 %v2383, 1.0
        %v2398 = vadd.f32 %v2385, 1.0
        %v2399 = vadd.f32 %v2387, 1.0
        %v2400 = vadd.f32 %v2389, 1.0
        %v2401 = vadd.f32 %v2391, 1.0
        %v2402 = vadd.f32 %v2393, 1.0
        %v2403 = vadd.f32 %v2395, 1.0
        %v2404 = vrcp.pop %v2396
        %v2405 = vmul.f32 1.0, %v2404
        %v2406 = vrcp.pop %v2397
        %v2407 = vmul.f32 1.0, %v2406
        %v2408 = vrcp.pop %v2398
        %v2409 = vmul.f32 1.0, %v2408
        %v2410 = vrcp.pop %v2399
        %v2411 = vmul.f32 1.0, %v2410
        %v2412 = vrcp.pop %v2400
        %v2413 = vmul.f32 1.0, %v2412
        %v2414 = vrcp.pop %v2401
        %v2415 = vmul.f32 1.0, %v2414
        %v2416 = vrcp.pop %v2402
        %v2417 = vmul.f32 1.0, %v2416
        %v2418 = vrcp.pop %v2403
        %v2419 = vmul.f32 1.0, %v2418
        %v2428 = vrot.slane %v2364, 1
        %v2429 = vrot.slane %v2365, 1
        %v2430 = vrot.slane %v2366, 1
        %v2431 = vrot.slane %v2367, 1
        %v2432 = vrot.slane %v2368, 1
        %v2433 = vrot.slane %v2369, 1
        %v2434 = vrot.slane %v2370, 1
        %v2435 = vrot.slane %v2371, 1
        %v2444 = vxor.u32 %v2428, 2147483648
        %v2445 = vxor.u32 %v2429, 2147483648
        %v2446 = vxor.u32 %v2430, 2147483648
        %v2447 = vxor.u32 %v2431, 2147483648
        %v2448 = vxor.u32 %v2432, 2147483648
        %v2449 = vxor.u32 %v2433, 2147483648
        %v2450 = vxor.u32 %v2434, 2147483648
        %v2451 = vxor.u32 %v2435, 2147483648
        %v2452 = vmul.f32 %v2444, 1.442695
        %v2453 = vpow.pop %v2452
        %v2454 = vmul.f32 %v2445, 1.442695
        %v2455 = vpow.pop %v2454
        %v2456 = vmul.f32 %v2446, 1.442695
        %v2457 = vpow.pop %v2456
        %v2458 = vmul.f32 %v2447, 1.442695
        %v2459 = vpow.pop %v2458
        %v2460 = vmul.f32 %v2448, 1.442695
        %v2461 = vpow.pop %v2460
        %v2462 = vmul.f32 %v2449, 1.442695
        %v2463 = vpow.pop %v2462
        %v2464 = vmul.f32 %v2450, 1.442695
        %v2465 = vpow.pop %v2464
        %v2466 = vmul.f32 %v2451, 1.442695
        %v2467 = vpow.pop %v2466
        %v2468 = vadd.f32 %v2453, 1.0
        %v2469 = vadd.f32 %v2455, 1.0
        %v2470 = vadd.f32 %v2457, 1.0
        %v2471 = vadd.f32 %v2459, 1.0
        %v2472 = vadd.f32 %v2461, 1.0
        %v2473 = vadd.f32 %v2463, 1.0
        %v2474 = vadd.f32 %v2465, 1.0
        %v2475 = vadd.f32 %v2467, 1.0
        %v2476 = vrcp.pop %v2468
        %v2477 = vmul.f32 1.0, %v2476
        %v2478 = vrcp.pop %v2469
        %v2479 = vmul.f32 1.0, %v2478
        %v2480 = vrcp.pop %v2470
        %v2481 = vmul.f32 1.0, %v2480
        %v2482 = vrcp.pop %v2471
        %v2483 = vmul.f32 1.0, %v2482
        %v2484 = vrcp.pop %v2472
        %v2485 = vmul.f32 1.0, %v2484
        %v2486 = vrcp.pop %v2473
        %v2487 = vmul.f32 1.0, %v2486
        %v2488 = vrcp.pop %v2474
        %v2489 = vmul.f32 1.0, %v2488
        %v2490 = vrcp.pop %v2475
        %v2491 = vmul.f32 1.0, %v2490
        %v2492 = vrot.slane %v2364, 2
        %v2493 = vrot.slane %v2365, 2
        %v2494 = vrot.slane %v2366, 2
        %v2495 = vrot.slane %v2367, 2
        %v2496 = vrot.slane %v2368, 2
        %v2497 = vrot.slane %v2369, 2
        %v2498 = vrot.slane %v2370, 2
        %v2499 = vrot.slane %v2371, 2
        %v2508 = vtanh.pop %v2492
        %v2509 = vtanh.pop %v2493
        %v2510 = vtanh.pop %v2494
        %v2511 = vtanh.pop %v2495
        %v2512 = vtanh.pop %v2496
        %v2513 = vtanh.pop %v2497
        %v2514 = vtanh.pop %v2498
        %v2515 = vtanh.pop %v2499
        %v2516 = vrot.slane %v2364, 3
        %v2517 = vrot.slane %v2365, 3
        %v2518 = vrot.slane %v2366, 3
        %v2519 = vrot.slane %v2367, 3
        %v2520 = vrot.slane %v2368, 3
        %v2521 = vrot.slane %v2369, 3
        %v2522 = vrot.slane %v2370, 3
        %v2523 = vrot.slane %v2371, 3
        %v2532 = vxor.u32 %v2516, 2147483648
        %v2533 = vxor.u32 %v2517, 2147483648
        %v2534 = vxor.u32 %v2518, 2147483648
        %v2535 = vxor.u32 %v2519, 2147483648
        %v2536 = vxor.u32 %v2520, 2147483648
        %v2537 = vxor.u32 %v2521, 2147483648
        %v2538 = vxor.u32 %v2522, 2147483648
        %v2539 = vxor.u32 %v2523, 2147483648
        %v2540 = vmul.f32 %v2532, 1.442695
        %v2541 = vpow.pop %v2540
        %v2542 = vmul.f32 %v2533, 1.442695
        %v2543 = vpow.pop %v2542
        %v2544 = vmul.f32 %v2534, 1.442695
        %v2545 = vpow.pop %v2544
        %v2546 = vmul.f32 %v2535, 1.442695
        %v2547 = vpow.pop %v2546
        %v2548 = vmul.f32 %v2536, 1.442695
        %v2549 = vpow.pop %v2548
        %v2550 = vmul.f32 %v2537, 1.442695
        %v2551 = vpow.pop %v2550
        %v2552 = vmul.f32 %v2538, 1.442695
        %v2553 = vpow.pop %v2552
        %v2554 = vmul.f32 %v2539, 1.442695
        %v2555 = vpow.pop %v2554
        %v2556 = vadd.f32 %v2541, 1.0
        %v2557 = vadd.f32 %v2543, 1.0
        %v2558 = vadd.f32 %v2545, 1.0
        %v2559 = vadd.f32 %v2547, 1.0
        %v2560 = vadd.f32 %v2549, 1.0
        %v2561 = vadd.f32 %v2551, 1.0
        %v2562 = vadd.f32 %v2553, 1.0
        %v2563 = vadd.f32 %v2555, 1.0
        %v2564 = vrcp.pop %v2556
        %v2565 = vmul.f32 1.0, %v2564
        %v2566 = vrcp.pop %v2557
        %v2567 = vmul.f32 1.0, %v2566
        %v2568 = vrcp.pop %v2558
        %v2569 = vmul.f32 1.0, %v2568
        %v2570 = vrcp.pop %v2559
        %v2571 = vmul.f32 1.0, %v2570
        %v2572 = vrcp.pop %v2560
        %v2573 = vmul.f32 1.0, %v2572
        %v2574 = vrcp.pop %v2561
        %v2575 = vmul.f32 1.0, %v2574
        %v2576 = vrcp.pop %v2562
        %v2577 = vmul.f32 1.0, %v2576
        %v2578 = vrcp.pop %v2563
        %v2579 = vmul.f32 1.0, %v2578
        %v2580 = vmul.f32 %v2477, %v1972
        %v2581 = vmul.f32 %v2479, %v1973
        %v2582 = vmul.f32 %v2481, %v1974
        %v2583 = vmul.f32 %v2483, %v1975
        %v2584 = vmul.f32 %v2485, %v1976
        %v2585 = vmul.f32 %v2487, %v1977
        %v2586 = vmul.f32 %v2489, %v1978
        %v2587 = vmul.f32 %v2491, %v1979
        %v2588 = vmul.f32 %v2405, %v2508
        %v2589 = vmul.f32 %v2407, %v2509
        %v2590 = vmul.f32 %v2409, %v2510
        %v2591 = vmul.f32 %v2411, %v2511
        %v2592 = vmul.f32 %v2413, %v2512
        %v2593 = vmul.f32 %v2415, %v2513
        %v2594 = vmul.f32 %v2417, %v2514
        %v2595 = vmul.f32 %v2419, %v2515
        %v2596 = vadd.f32 %v2580, %v2588
        %v2597 = vadd.f32 %v2581, %v2589
        %v2598 = vadd.f32 %v2582, %v2590
        %v2599 = vadd.f32 %v2583, %v2591
        %v2600 = vadd.f32 %v2584, %v2592
        %v2601 = vadd.f32 %v2585, %v2593
        %v2602 = vadd.f32 %v2586, %v2594
        %v2603 = vadd.f32 %v2587, %v2595
        %v2604 = vtanh.pop %v2596
        %v2605 = vtanh.pop %v2597
        %v2606 = vtanh.pop %v2598
        %v2607 = vtanh.pop %v2599
        %v2608 = vtanh.pop %v2600
        %v2609 = vtanh.pop %v2601
        %v2610 = vtanh.pop %v2602
        %v2611 = vtanh.pop %v2603
        %v2612 = vmul.f32 %v2565, %v2604
        %v2613 = vmul.f32 %v2567, %v2605
        %v2614 = vmul.f32 %v2569, %v2606
        %v2615 = vmul.f32 %v2571, %v2607
        %v2616 = vmul.f32 %v2573, %v2608
        %v2617 = vmul.f32 %v2575, %v2609
        %v2618 = vmul.f32 %v2577, %v2610
        %v2619 = vmul.f32 %v2579, %v2611
        %2620 = vst [vmem:[%s411 + $0x2] sm:$0x1] %v2612
        %2621 = vst [vmem:[%s411 + $0xa] sm:$0x1] %v2613
        %2622 = vst [vmem:[%s411 + $0x12] sm:$0x1] %v2614
        %2623 = vst [vmem:[%s411 + $0x1a] sm:$0x1] %v2615
        %2624 = vst [vmem:[%s411 + $0x22] sm:$0x1] %v2616
        %2625 = vst [vmem:[%s411 + $0x2a] sm:$0x1] %v2617
        %2626 = vst [vmem:[%s411 + $0x32] sm:$0x1] %v2618
        %2627 = vst [vmem:[%s411 + $0x3a] sm:$0x1] %v2619
        %s2628 = scalar_lea.vmem [#allocation2], 3
        %v2629 = vld [vmem:[%s2628] ss:$8 sm:$0xf]
        %s2630 = scalar_lea.vmem [#allocation2], 35
        %v2631 = vld [vmem:[%s2630] ss:$8 sm:$0xf]
        %s2632 = scalar_lea.vmem [#allocation2], 67
        %v2633 = vld [vmem:[%s2632] ss:$8 sm:$0xf]
        %s2634 = scalar_lea.vmem [#allocation2], 99
        %v2635 = vld [vmem:[%s2634] ss:$8 sm:$0xf]
        %s2636 = scalar_lea.vmem [#allocation2], 131
        %v2637 = vld [vmem:[%s2636] ss:$8 sm:$0xf]
        %s2638 = scalar_lea.vmem [#allocation2], 163
        %v2639 = vld [vmem:[%s2638] ss:$8 sm:$0xf]
        %s2640 = scalar_lea.vmem [#allocation2], 195
        %v2641 = vld [vmem:[%s2640] ss:$8 sm:$0xf]
        %s2642 = scalar_lea.vmem [#allocation2], 227
        %v2643 = vld [vmem:[%s2642] ss:$8 sm:$0xf]
        %v2644 = vld [vmem:[#allocation11] sm:$0xff]
        %v2645 = vld [vmem:[#allocation11 + $0x8] sm:$0xff]
        %v2646 = vld [vmem:[#allocation11 + $0x10] sm:$0xff]
        %v2647 = vld [vmem:[#allocation11 + $0x18] sm:$0xff]
        %v2648 = vld [vmem:[#allocation11 + $0x20] sm:$0xff]
        %v2649 = vld [vmem:[#allocation11 + $0x28] sm:$0xff]
        %v2650 = vld [vmem:[#allocation11 + $0x30] sm:$0xff]
        %v2651 = vld [vmem:[#allocation11 + $0x38] sm:$0xff]
        %v2652 = vld [vmem:[#allocation11 + $0x40] sm:$0xff]
        %v2653 = vld [vmem:[#allocation11 + $0x48] sm:$0xff]
        %v2654 = vld [vmem:[#allocation11 + $0x50] sm:$0xff]
        %v2655 = vld [vmem:[#allocation11 + $0x58] sm:$0xff]
        %v2656 = vld [vmem:[#allocation11 + $0x60] sm:$0xff]
        %v2657 = vld [vmem:[#allocation11 + $0x68] sm:$0xff]
        %v2658 = vld [vmem:[#allocation11 + $0x70] sm:$0xff]
        %v2659 = vld [vmem:[#allocation11 + $0x78] sm:$0xff]
        %v2660 = vld [vmem:[#allocation11 + $0x80] sm:$0xff]
        %v2661 = vld [vmem:[#allocation11 + $0x88] sm:$0xff]
        %v2662 = vld [vmem:[#allocation11 + $0x90] sm:$0xff]
        %v2663 = vld [vmem:[#allocation11 + $0x98] sm:$0xff]
        %v2664 = vld [vmem:[#allocation11 + $0xa0] sm:$0xff]
        %v2665 = vld [vmem:[#allocation11 + $0xa8] sm:$0xff]
        %v2666 = vld [vmem:[#allocation11 + $0xb0] sm:$0xff]
        %v2667 = vld [vmem:[#allocation11 + $0xb8] sm:$0xff]
        %v2668 = vld [vmem:[#allocation11 + $0xc0] sm:$0xff]
        %v2669 = vld [vmem:[#allocation11 + $0xc8] sm:$0xff]
        %v2670 = vld [vmem:[#allocation11 + $0xd0] sm:$0xff]
        %v2671 = vld [vmem:[#allocation11 + $0xd8] sm:$0xff]
        %v2672 = vld [vmem:[#allocation11 + $0xe0] sm:$0xff]
        %v2673 = vld [vmem:[#allocation11 + $0xe8] sm:$0xff]
        %v2674 = vld [vmem:[#allocation11 + $0xf0] sm:$0xff]
        %v2675 = vld [vmem:[#allocation11 + $0xf8] sm:$0xff]
        %v2676 = vld [vmem:[#allocation11 + $0x100] sm:$0xff]
        %v2677 = vld [vmem:[#allocation11 + $0x108] sm:$0xff]
        %v2678 = vld [vmem:[#allocation11 + $0x110] sm:$0xff]
        %v2679 = vld [vmem:[#allocation11 + $0x118] sm:$0xff]
        %v2680 = vld [vmem:[#allocation11 + $0x120] sm:$0xff]
        %v2681 = vld [vmem:[#allocation11 + $0x128] sm:$0xff]
        %v2682 = vld [vmem:[#allocation11 + $0x130] sm:$0xff]
        %v2683 = vld [vmem:[#allocation11 + $0x138] sm:$0xff]
        %v2684 = vld [vmem:[#allocation11 + $0x140] sm:$0xff]
        %v2685 = vld [vmem:[#allocation11 + $0x148] sm:$0xff]
        %v2686 = vld [vmem:[#allocation11 + $0x150] sm:$0xff]
        %v2687 = vld [vmem:[#allocation11 + $0x158] sm:$0xff]
        %v2688 = vld [vmem:[#allocation11 + $0x160] sm:$0xff]
        %v2689 = vld [vmem:[#allocation11 + $0x168] sm:$0xff]
        %v2690 = vld [vmem:[#allocation11 + $0x170] sm:$0xff]
        %v2691 = vld [vmem:[#allocation11 + $0x178] sm:$0xff]
        %v2692 = vld [vmem:[#allocation11 + $0x180] sm:$0xff]
        %v2693 = vld [vmem:[#allocation11 + $0x188] sm:$0xff]
        %v2694 = vld [vmem:[#allocation11 + $0x190] sm:$0xff]
        %v2695 = vld [vmem:[#allocation11 + $0x198] sm:$0xff]
        %v2696 = vld [vmem:[#allocation11 + $0x1a0] sm:$0xff]
        %v2697 = vld [vmem:[#allocation11 + $0x1a8] sm:$0xff]
        %v2698 = vld [vmem:[#allocation11 + $0x1b0] sm:$0xff]
        %v2699 = vld [vmem:[#allocation11 + $0x1b8] sm:$0xff]
        %v2700 = vld [vmem:[#allocation11 + $0x1c0] sm:$0xff]
        %v2701 = vld [vmem:[#allocation11 + $0x1c8] sm:$0xff]
        %v2702 = vld [vmem:[#allocation11 + $0x1d0] sm:$0xff]
        %v2703 = vld [vmem:[#allocation11 + $0x1d8] sm:$0xff]
        %v2704 = vld [vmem:[#allocation11 + $0x1e0] sm:$0xff]
        %v2705 = vld [vmem:[#allocation11 + $0x1e8] sm:$0xff]
        %v2706 = vld [vmem:[#allocation11 + $0x1f0] sm:$0xff]
        %v2707 = vld [vmem:[#allocation11 + $0x1f8] sm:$0xff]
        %v2716 = vcombine.low %v2612, %v2613
        %v2717 = vcombine.low %v2614, %v2615
        %v2718 = vcombine.low %v2616, %v2617
        %v2719 = vcombine.low %v2618, %v2619
        %v2721 = vunpack.c.l.s4 1966171168
        %v2722 = vunpack.c.0.s8 %v2721
        %v2723 = vlaneseq
        %v2724 = vshrl.u32 %v2723, 7
        %v2725 = vsub.s32 %v2722, %v2724
        %v2726 = vrot.slane %v2716, %v2725
        %v2728 = vunpack.c.l.s4 1966171168
        %v2729 = vunpack.c.0.s8 %v2728
        %v2730 = vlaneseq
        %v2731 = vshrl.u32 %v2730, 7
        %v2732 = vsub.s32 %v2729, %v2731
        %v2733 = vrot.slane %v2717, %v2732
        %v2735 = vunpack.c.l.s4 1966171168
        %v2736 = vunpack.c.0.s8 %v2735
        %v2737 = vlaneseq
        %v2738 = vshrl.u32 %v2737, 7
        %v2739 = vsub.s32 %v2736, %v2738
        %v2740 = vrot.slane %v2718, %v2739
        %v2742 = vunpack.c.l.s4 1966171168
        %v2743 = vunpack.c.0.s8 %v2742
        %v2744 = vlaneseq
        %v2745 = vshrl.u32 %v2744, 7
        %v2746 = vsub.s32 %v2743, %v2745
        %v2747 = vrot.slane %v2719, %v2746
        %v2748 = vcombine.low %v2726, %v2733
        %v2749 = vcombine.low %v2740, %v2747
        %v2751 = vunpack.c.l.s4 1966171168
        %v2752 = vunpack.c.0.s8 %v2751
        %v2753 = vlaneseq
        %v2754 = vshrl.u32 %v2753, 7
        %v2755 = vsub.s32 %v2752, %v2754
        %v2756 = vrot.slane %v2748, %v2755
        %v2758 = vunpack.c.l.s4 1966171168
        %v2759 = vunpack.c.0.s8 %v2758
        %v2760 = vlaneseq
        %v2761 = vshrl.u32 %v2760, 7
        %v2762 = vsub.s32 %v2759, %v2761
        %v2763 = vrot.slane %v2749, %v2762
        %v2764 = vcombine.low %v2756, %v2763
        %2766 = vmatprep.subr.mxu0 %v2705
        %2767 = vmatpush1.msra.mxu0 %v2704
        %2768 = vmatprep.subr.mxu0 %v2701
        %2769 = vmatpush1.msra.mxu0 %v2700
        %2770 = vmatprep.subr.mxu0 %v2697
        %2771 = vmatpush1.msra.mxu0 %v2696
        %2772 = vmatprep.subr.mxu0 %v2693
        %2773 = vmatpush1.msra.mxu0 %v2692
        %2774 = vmatprep.subr.mxu0 %v2689
        %2775 = vmatpush1.msra.mxu0 %v2688
        %2776 = vmatprep.subr.mxu0 %v2685
        %2777 = vmatpush1.msra.mxu0 %v2684
        %2778 = vmatprep.subr.mxu0 %v2681
        %2779 = vmatpush1.msra.mxu0 %v2680
        %2780 = vmatprep.subr.mxu0 %v2677
        %2781 = vmatpush1.msra.mxu0 %v2676
        %2782 = vmatprep.subr.mxu0 %v2673
        %2783 = vmatpush1.msra.mxu0 %v2672
        %2784 = vmatprep.subr.mxu0 %v2669
        %2785 = vmatpush1.msra.mxu0 %v2668
        %2786 = vmatprep.subr.mxu0 %v2665
        %2787 = vmatpush1.msra.mxu0 %v2664
        %2788 = vmatprep.subr.mxu0 %v2661
        %2789 = vmatpush1.msra.mxu0 %v2660
        %2790 = vmatprep.subr.mxu0 %v2657
        %2791 = vmatpush1.msra.mxu0 %v2656
        %2792 = vmatprep.subr.mxu0 %v2653
        %2793 = vmatpush1.msra.mxu0 %v2652
        %2794 = vmatprep.subr.mxu0 %v2649
        %2795 = vmatpush1.msra.mxu0 %v2648
        %2796 = vmatprep.subr.mxu0 %v2645
        %2797 = vmatpush1.msra.mxu0 %v2644
        %2798 = vmatprep.subr.mxu0 0.0
        %2799 = vmatpush2.msra.mxu0 0.0
        %2800 = vmatprep.subr.mxu0 0.0
        %2801 = vmatpush2.msra.mxu0 0.0
        %2802 = vmatprep.subr.mxu0 0.0
        %2803 = vmatpush2.msra.mxu0 0.0
        %2804 = vmatprep.subr.mxu0 0.0
        %2805 = vmatpush2.msra.mxu0 0.0
        %2806 = vmatprep.subr.mxu0 0.0
        %2807 = vmatpush2.msra.mxu0 0.0
        %2808 = vmatprep.subr.mxu0 0.0
        %2809 = vmatpush2.msra.mxu0 0.0
        %2810 = vmatprep.subr.mxu0 0.0
        %2811 = vmatpush2.msra.mxu0 0.0
        %2812 = vmatprep.subr.mxu0 0.0
        %2813 = vmatpush2.msra.mxu0 0.0
        %2814 = vmatprep.subr.mxu0 0.0
        %2815 = vmatpush2.msra.mxu0 0.0
        %2816 = vmatprep.subr.mxu0 0.0
        %2817 = vmatpush2.msra.mxu0 0.0
        %2818 = vmatprep.subr.mxu0 0.0
        %2819 = vmatpush2.msra.mxu0 0.0
        %2820 = vmatprep.subr.mxu0 0.0
        %2821 = vmatpush2.msra.mxu0 0.0
        %2822 = vmatprep.subr.mxu0 0.0
        %2823 = vmatpush2.msra.mxu0 0.0
        %2824 = vmatprep.subr.mxu0 0.0
        %2825 = vmatpush2.msra.mxu0 0.0
        %2826 = vmatprep.subr.mxu0 0.0
        %2827 = vmatpush2.msra.mxu0 0.0
        %2828 = vmatprep.subr.mxu0 0.0
        %2829 = vmatpush2.msra.mxu0 0.0
        %2830 = vmatprep.mubr.f32.mxu0 0.0
        %2831 = vmatmul.mubr.f32.gmra.mxu0 %v2764
        %v2832 = vpop.f32.mrf.mxu0
        %v2833 = vadd.f32 0.0, %v2832
        %v2834 = vpop.f32.mrf.mxu0
        %v2835 = vadd.f32 0.0, %v2834
        %2836 = vdwg.mxu0
        %2837 = vmatprep.subr.mxu0 %v2707
        %2838 = vmatpush1.msra.mxu0 %v2706
        %2839 = vmatprep.subr.mxu0 %v2703
        %2840 = vmatpush1.msra.mxu0 %v2702
        %2841 = vmatprep.subr.mxu0 %v2699
        %2842 = vmatpush1.msra.mxu0 %v2698
        %2843 = vmatprep.subr.mxu0 %v2695
        %2844 = vmatpush1.msra.mxu0 %v2694
        %2845 = vmatprep.subr.mxu0 %v2691
        %2846 = vmatpush1.msra.mxu0 %v2690
        %2847 = vmatprep.subr.mxu0 %v2687
        %2848 = vmatpush1.msra.mxu0 %v2686
        %2849 = vmatprep.subr.mxu0 %v2683
        %2850 = vmatpush1.msra.mxu0 %v2682
        %2851 = vmatprep.subr.mxu0 %v2679
        %2852 = vmatpush1.msra.mxu0 %v2678
        %2853 = vmatprep.subr.mxu0 %v2675
        %2854 = vmatpush1.msra.mxu0 %v2674
        %2855 = vmatprep.subr.mxu0 %v2671
        %2856 = vmatpush1.msra.mxu0 %v2670
        %2857 = vmatprep.subr.mxu0 %v2667
        %2858 = vmatpush1.msra.mxu0 %v2666
        %2859 = vmatprep.subr.mxu0 %v2663
        %2860 = vmatpush1.msra.mxu0 %v2662
        %2861 = vmatprep.subr.mxu0 %v2659
        %2862 = vmatpush1.msra.mxu0 %v2658
        %2863 = vmatprep.subr.mxu0 %v2655
        %2864 = vmatpush1.msra.mxu0 %v2654
        %2865 = vmatprep.subr.mxu0 %v2651
        %2866 = vmatpush1.msra.mxu0 %v2650
        %2867 = vmatprep.subr.mxu0 %v2647
        %2868 = vmatpush1.msra.mxu0 %v2646
        %2869 = vmatprep.subr.mxu0 0.0
        %2870 = vmatpush2.msra.mxu0 0.0
        %2871 = vmatprep.subr.mxu0 0.0
        %2872 = vmatpush2.msra.mxu0 0.0
        %2873 = vmatprep.subr.mxu0 0.0
        %2874 = vmatpush2.msra.mxu0 0.0
        %2875 = vmatprep.subr.mxu0 0.0
        %2876 = vmatpush2.msra.mxu0 0.0
        %2877 = vmatprep.subr.mxu0 0.0
        %2878 = vmatpush2.msra.mxu0 0.0
        %2879 = vmatprep.subr.mxu0 0.0
        %2880 = vmatpush2.msra.mxu0 0.0
        %2881 = vmatprep.subr.mxu0 0.0
        %2882 = vmatpush2.msra.mxu0 0.0
        %2883 = vmatprep.subr.mxu0 0.0
        %2884 = vmatpush2.msra.mxu0 0.0
        %2885 = vmatprep.subr.mxu0 0.0
        %2886 = vmatpush2.msra.mxu0 0.0
        %2887 = vmatprep.subr.mxu0 0.0
        %2888 = vmatpush2.msra.mxu0 0.0
        %2889 = vmatprep.subr.mxu0 0.0
        %2890 = vmatpush2.msra.mxu0 0.0
        %2891 = vmatprep.subr.mxu0 0.0
        %2892 = vmatpush2.msra.mxu0 0.0
        %2893 = vmatprep.subr.mxu0 0.0
        %2894 = vmatpush2.msra.mxu0 0.0
        %2895 = vmatprep.subr.mxu0 0.0
        %2896 = vmatpush2.msra.mxu0 0.0
        %2897 = vmatprep.subr.mxu0 0.0
        %2898 = vmatpush2.msra.mxu0 0.0
        %2899 = vmatprep.subr.mxu0 0.0
        %2900 = vmatpush2.msra.mxu0 0.0
        %2901 = vmatprep.mubr.f32.mxu0 0.0
        %2902 = vmatmul.mubr.f32.gmra.mxu0 %v2764
        %v2903 = vpop.f32.mrf.mxu0
        %v2904 = vadd.f32 0.0, %v2903
        %v2905 = vpop.f32.mrf.mxu0
        %v2906 = vadd.f32 0.0, %v2905
        %2907 = vdwg.mxu0
        %v2912 = vcombine.low %v2833, %v2835
        %v2913 = vcombine.high %v2833, %v2835
        %v2914 = vcombine.low %v2904, %v2906
        %v2915 = vcombine.high %v2904, %v2906
        %v2917 = vunpack.c.l.s4 1966171168
        %v2918 = vunpack.c.0.s8 %v2917
        %v2919 = vlaneseq
        %v2920 = vshrl.u32 %v2919, 7
        %v2921 = vsub.s32 %v2918, %v2920
        %v2922 = vrot.slane %v2912, %v2921
        %v2924 = vunpack.c.l.s4 1966171168
        %v2925 = vunpack.c.0.s8 %v2924
        %v2926 = vlaneseq
        %v2927 = vshrl.u32 %v2926, 7
        %v2928 = vsub.s32 %v2925, %v2927
        %v2929 = vrot.slane %v2913, %v2928
        %v2931 = vunpack.c.l.s4 1966171168
        %v2932 = vunpack.c.0.s8 %v2931
        %v2933 = vlaneseq
        %v2934 = vshrl.u32 %v2933, 7
        %v2935 = vsub.s32 %v2932, %v2934
        %v2936 = vrot.slane %v2914, %v2935
        %v2938 = vunpack.c.l.s4 1966171168
        %v2939 = vunpack.c.0.s8 %v2938
        %v2940 = vlaneseq
        %v2941 = vshrl.u32 %v2940, 7
        %v2942 = vsub.s32 %v2939, %v2941
        %v2943 = vrot.slane %v2915, %v2942
        %v2944 = vcombine.low %v2922, %v2936
        %v2945 = vcombine.high %v2922, %v2936
        %v2946 = vcombine.low %v2929, %v2943
        %v2947 = vcombine.high %v2929, %v2943
        %v2949 = vunpack.c.l.s4 1966171168
        %v2950 = vunpack.c.0.s8 %v2949
        %v2951 = vlaneseq
        %v2952 = vshrl.u32 %v2951, 7
        %v2953 = vsub.s32 %v2950, %v2952
        %v2954 = vrot.slane %v2944, %v2953
        %v2956 = vunpack.c.l.s4 1966171168
        %v2957 = vunpack.c.0.s8 %v2956
        %v2958 = vlaneseq
        %v2959 = vshrl.u32 %v2958, 7
        %v2960 = vsub.s32 %v2957, %v2959
        %v2961 = vrot.slane %v2946, %v2960
        %v2963 = vunpack.c.l.s4 1966171168
        %v2964 = vunpack.c.0.s8 %v2963
        %v2965 = vlaneseq
        %v2966 = vshrl.u32 %v2965, 7
        %v2967 = vsub.s32 %v2964, %v2966
        %v2968 = vrot.slane %v2945, %v2967
        %v2970 = vunpack.c.l.s4 1966171168
        %v2971 = vunpack.c.0.s8 %v2970
        %v2972 = vlaneseq
        %v2973 = vshrl.u32 %v2972, 7
        %v2974 = vsub.s32 %v2971, %v2973
        %v2975 = vrot.slane %v2947, %v2974
        %v2976 = vcombine.high %v2954, %v2954
        %v2977 = vcombine.high %v2961, %v2961
        %v2978 = vcombine.high %v2968, %v2968
        %v2979 = vcombine.high %v2975, %v2975
        %v2988 = vadd.f32 %v2629, %v2954
        %v2989 = vadd.f32 %v2631, %v2968
        %v2990 = vadd.f32 %v2633, %v2976
        %v2991 = vadd.f32 %v2635, %v2978
        %v2992 = vadd.f32 %v2637, %v2961
        %v2993 = vadd.f32 %v2639, %v2975
        %v2994 = vadd.f32 %v2641, %v2977
        %v2995 = vadd.f32 %v2643, %v2979
        %v2996 = vxor.u32 %v2988, 2147483648
        %v2997 = vxor.u32 %v2989, 2147483648
        %v2998 = vxor.u32 %v2990, 2147483648
        %v2999 = vxor.u32 %v2991, 2147483648
        %v3000 = vxor.u32 %v2992, 2147483648
        %v3001 = vxor.u32 %v2993, 2147483648
        %v3002 = vxor.u32 %v2994, 2147483648
        %v3003 = vxor.u32 %v2995, 2147483648
        %v3004 = vmul.f32 %v2996, 1.442695
        %v3005 = vpow.pop %v3004
        %v3006 = vmul.f32 %v2997, 1.442695
        %v3007 = vpow.pop %v3006
        %v3008 = vmul.f32 %v2998, 1.442695
        %v3009 = vpow.pop %v3008
        %v3010 = vmul.f32 %v2999, 1.442695
        %v3011 = vpow.pop %v3010
        %v3012 = vmul.f32 %v3000, 1.442695
        %v3013 = vpow.pop %v3012
        %v3014 = vmul.f32 %v3001, 1.442695
        %v3015 = vpow.pop %v3014
        %v3016 = vmul.f32 %v3002, 1.442695
        %v3017 = vpow.pop %v3016
        %v3018 = vmul.f32 %v3003, 1.442695
        %v3019 = vpow.pop %v3018
        %v3020 = vadd.f32 %v3005, 1.0
        %v3021 = vadd.f32 %v3007, 1.0
        %v3022 = vadd.f32 %v3009, 1.0
        %v3023 = vadd.f32 %v3011, 1.0
        %v3024 = vadd.f32 %v3013, 1.0
        %v3025 = vadd.f32 %v3015, 1.0
        %v3026 = vadd.f32 %v3017, 1.0
        %v3027 = vadd.f32 %v3019, 1.0
        %v3028 = vrcp.pop %v3020
        %v3029 = vmul.f32 1.0, %v3028
        %v3030 = vrcp.pop %v3021
        %v3031 = vmul.f32 1.0, %v3030
        %v3032 = vrcp.pop %v3022
        %v3033 = vmul.f32 1.0, %v3032
        %v3034 = vrcp.pop %v3023
        %v3035 = vmul.f32 1.0, %v3034
        %v3036 = vrcp.pop %v3024
        %v3037 = vmul.f32 1.0, %v3036
        %v3038 = vrcp.pop %v3025
        %v3039 = vmul.f32 1.0, %v3038
        %v3040 = vrcp.pop %v3026
        %v3041 = vmul.f32 1.0, %v3040
        %v3042 = vrcp.pop %v3027
        %v3043 = vmul.f32 1.0, %v3042
        %v3052 = vrot.slane %v2988, 1
        %v3053 = vrot.slane %v2989, 1
        %v3054 = vrot.slane %v2990, 1
        %v3055 = vrot.slane %v2991, 1
        %v3056 = vrot.slane %v2992, 1
        %v3057 = vrot.slane %v2993, 1
        %v3058 = vrot.slane %v2994, 1
        %v3059 = vrot.slane %v2995, 1
        %v3068 = vxor.u32 %v3052, 2147483648
        %v3069 = vxor.u32 %v3053, 2147483648
        %v3070 = vxor.u32 %v3054, 2147483648
        %v3071 = vxor.u32 %v3055, 2147483648
        %v3072 = vxor.u32 %v3056, 2147483648
        %v3073 = vxor.u32 %v3057, 2147483648
        %v3074 = vxor.u32 %v3058, 2147483648
        %v3075 = vxor.u32 %v3059, 2147483648
        %v3076 = vmul.f32 %v3068, 1.442695
        %v3077 = vpow.pop %v3076
        %v3078 = vmul.f32 %v3069, 1.442695
        %v3079 = vpow.pop %v3078
        %v3080 = vmul.f32 %v3070, 1.442695
        %v3081 = vpow.pop %v3080
        %v3082 = vmul.f32 %v3071, 1.442695
        %v3083 = vpow.pop %v3082
        %v3084 = vmul.f32 %v3072, 1.442695
        %v3085 = vpow.pop %v3084
        %v3086 = vmul.f32 %v3073, 1.442695
        %v3087 = vpow.pop %v3086
        %v3088 = vmul.f32 %v3074, 1.442695
        %v3089 = vpow.pop %v3088
        %v3090 = vmul.f32 %v3075, 1.442695
        %v3091 = vpow.pop %v3090
        %v3092 = vadd.f32 %v3077, 1.0
        %v3093 = vadd.f32 %v3079, 1.0
        %v3094 = vadd.f32 %v3081, 1.0
        %v3095 = vadd.f32 %v3083, 1.0
        %v3096 = vadd.f32 %v3085, 1.0
        %v3097 = vadd.f32 %v3087, 1.0
        %v3098 = vadd.f32 %v3089, 1.0
        %v3099 = vadd.f32 %v3091, 1.0
        %v3100 = vrcp.pop %v3092
        %v3101 = vmul.f32 1.0, %v3100
        %v3102 = vrcp.pop %v3093
        %v3103 = vmul.f32 1.0, %v3102
        %v3104 = vrcp.pop %v3094
        %v3105 = vmul.f32 1.0, %v3104
        %v3106 = vrcp.pop %v3095
        %v3107 = vmul.f32 1.0, %v3106
        %v3108 = vrcp.pop %v3096
        %v3109 = vmul.f32 1.0, %v3108
        %v3110 = vrcp.pop %v3097
        %v3111 = vmul.f32 1.0, %v3110
        %v3112 = vrcp.pop %v3098
        %v3113 = vmul.f32 1.0, %v3112
        %v3114 = vrcp.pop %v3099
        %v3115 = vmul.f32 1.0, %v3114
        %v3116 = vrot.slane %v2988, 2
        %v3117 = vrot.slane %v2989, 2
        %v3118 = vrot.slane %v2990, 2
        %v3119 = vrot.slane %v2991, 2
        %v3120 = vrot.slane %v2992, 2
        %v3121 = vrot.slane %v2993, 2
        %v3122 = vrot.slane %v2994, 2
        %v3123 = vrot.slane %v2995, 2
        %v3132 = vtanh.pop %v3116
        %v3133 = vtanh.pop %v3117
        %v3134 = vtanh.pop %v3118
        %v3135 = vtanh.pop %v3119
        %v3136 = vtanh.pop %v3120
        %v3137 = vtanh.pop %v3121
        %v3138 = vtanh.pop %v3122
        %v3139 = vtanh.pop %v3123
        %v3140 = vrot.slane %v2988, 3
        %v3141 = vrot.slane %v2989, 3
        %v3142 = vrot.slane %v2990, 3
        %v3143 = vrot.slane %v2991, 3
        %v3144 = vrot.slane %v2992, 3
        %v3145 = vrot.slane %v2993, 3
        %v3146 = vrot.slane %v2994, 3
        %v3147 = vrot.slane %v2995, 3
        %v3156 = vxor.u32 %v3140, 2147483648
        %v3157 = vxor.u32 %v3141, 2147483648
        %v3158 = vxor.u32 %v3142, 2147483648
        %v3159 = vxor.u32 %v3143, 2147483648
        %v3160 = vxor.u32 %v3144, 2147483648
        %v3161 = vxor.u32 %v3145, 2147483648
        %v3162 = vxor.u32 %v3146, 2147483648
        %v3163 = vxor.u32 %v3147, 2147483648
        %v3164 = vmul.f32 %v3156, 1.442695
        %v3165 = vpow.pop %v3164
        %v3166 = vmul.f32 %v3157, 1.442695
        %v3167 = vpow.pop %v3166
        %v3168 = vmul.f32 %v3158, 1.442695
        %v3169 = vpow.pop %v3168
        %v3170 = vmul.f32 %v3159, 1.442695
        %v3171 = vpow.pop %v3170
        %v3172 = vmul.f32 %v3160, 1.442695
        %v3173 = vpow.pop %v3172
        %v3174 = vmul.f32 %v3161, 1.442695
        %v3175 = vpow.pop %v3174
        %v3176 = vmul.f32 %v3162, 1.442695
        %v3177 = vpow.pop %v3176
        %v3178 = vmul.f32 %v3163, 1.442695
        %v3179 = vpow.pop %v3178
        %v3180 = vadd.f32 %v3165, 1.0
        %v3181 = vadd.f32 %v3167, 1.0
        %v3182 = vadd.f32 %v3169, 1.0
        %v3183 = vadd.f32 %v3171, 1.0
        %v3184 = vadd.f32 %v3173, 1.0
        %v3185 = vadd.f32 %v3175, 1.0
        %v3186 = vadd.f32 %v3177, 1.0
        %v3187 = vadd.f32 %v3179, 1.0
        %v3188 = vrcp.pop %v3180
        %v3189 = vmul.f32 1.0, %v3188
        %v3190 = vrcp.pop %v3181
        %v3191 = vmul.f32 1.0, %v3190
        %v3192 = vrcp.pop %v3182
        %v3193 = vmul.f32 1.0, %v3192
        %v3194 = vrcp.pop %v3183
        %v3195 = vmul.f32 1.0, %v3194
        %v3196 = vrcp.pop %v3184
        %v3197 = vmul.f32 1.0, %v3196
        %v3198 = vrcp.pop %v3185
        %v3199 = vmul.f32 1.0, %v3198
        %v3200 = vrcp.pop %v3186
        %v3201 = vmul.f32 1.0, %v3200
        %v3202 = vrcp.pop %v3187
        %v3203 = vmul.f32 1.0, %v3202
        %v3204 = vmul.f32 %v3101, %v2596
        %v3205 = vmul.f32 %v3103, %v2597
        %v3206 = vmul.f32 %v3105, %v2598
        %v3207 = vmul.f32 %v3107, %v2599
        %v3208 = vmul.f32 %v3109, %v2600
        %v3209 = vmul.f32 %v3111, %v2601
        %v3210 = vmul.f32 %v3113, %v2602
        %v3211 = vmul.f32 %v3115, %v2603
        %v3212 = vmul.f32 %v3029, %v3132
        %v3213 = vmul.f32 %v3031, %v3133
        %v3214 = vmul.f32 %v3033, %v3134
        %v3215 = vmul.f32 %v3035, %v3135
        %v3216 = vmul.f32 %v3037, %v3136
        %v3217 = vmul.f32 %v3039, %v3137
        %v3218 = vmul.f32 %v3041, %v3138
        %v3219 = vmul.f32 %v3043, %v3139
        %v3220 = vadd.f32 %v3204, %v3212
        %v3221 = vadd.f32 %v3205, %v3213
        %v3222 = vadd.f32 %v3206, %v3214
        %v3223 = vadd.f32 %v3207, %v3215
        %v3224 = vadd.f32 %v3208, %v3216
        %v3225 = vadd.f32 %v3209, %v3217
        %v3226 = vadd.f32 %v3210, %v3218
        %v3227 = vadd.f32 %v3211, %v3219
        %v3228 = vtanh.pop %v3220
        %v3229 = vtanh.pop %v3221
        %v3230 = vtanh.pop %v3222
        %v3231 = vtanh.pop %v3223
        %v3232 = vtanh.pop %v3224
        %v3233 = vtanh.pop %v3225
        %v3234 = vtanh.pop %v3226
        %v3235 = vtanh.pop %v3227
        %v3236 = vmul.f32 %v3189, %v3228
        %v3237 = vmul.f32 %v3191, %v3229
        %v3238 = vmul.f32 %v3193, %v3230
        %v3239 = vmul.f32 %v3195, %v3231
        %v3240 = vmul.f32 %v3197, %v3232
        %v3241 = vmul.f32 %v3199, %v3233
        %v3242 = vmul.f32 %v3201, %v3234
        %v3243 = vmul.f32 %v3203, %v3235
        %3244 = vst [vmem:[%s411 + $0x3] sm:$0x1] %v3236
        %3245 = vst [vmem:[%s411 + $0xb] sm:$0x1] %v3237
        %3246 = vst [vmem:[%s411 + $0x13] sm:$0x1] %v3238
        %3247 = vst [vmem:[%s411 + $0x1b] sm:$0x1] %v3239
        %3248 = vst [vmem:[%s411 + $0x23] sm:$0x1] %v3240
        %3249 = vst [vmem:[%s411 + $0x2b] sm:$0x1] %v3241
        %3250 = vst [vmem:[%s411 + $0x33] sm:$0x1] %v3242
        %3251 = vst [vmem:[%s411 + $0x3b] sm:$0x1] %v3243
        %s3252 = scalar_lea.vmem [#allocation2], 4
        %v3253 = vld [vmem:[%s3252] ss:$8 sm:$0xf]
        %s3254 = scalar_lea.vmem [#allocation2], 36
        %v3255 = vld [vmem:[%s3254] ss:$8 sm:$0xf]
        %s3256 = scalar_lea.vmem [#allocation2], 68
        %v3257 = vld [vmem:[%s3256] ss:$8 sm:$0xf]
        %s3258 = scalar_lea.vmem [#allocation2], 100
        %v3259 = vld [vmem:[%s3258] ss:$8 sm:$0xf]
        %s3260 = scalar_lea.vmem [#allocation2], 132
        %v3261 = vld [vmem:[%s3260] ss:$8 sm:$0xf]
        %s3262 = scalar_lea.vmem [#allocation2], 164
        %v3263 = vld [vmem:[%s3262] ss:$8 sm:$0xf]
        %s3264 = scalar_lea.vmem [#allocation2], 196
        %v3265 = vld [vmem:[%s3264] ss:$8 sm:$0xf]
        %s3266 = scalar_lea.vmem [#allocation2], 228
        %v3267 = vld [vmem:[%s3266] ss:$8 sm:$0xf]
        %v3268 = vld [vmem:[#allocation11] sm:$0xff]
        %v3269 = vld [vmem:[#allocation11 + $0x8] sm:$0xff]
        %v3270 = vld [vmem:[#allocation11 + $0x10] sm:$0xff]
        %v3271 = vld [vmem:[#allocation11 + $0x18] sm:$0xff]
        %v3272 = vld [vmem:[#allocation11 + $0x20] sm:$0xff]
        %v3273 = vld [vmem:[#allocation11 + $0x28] sm:$0xff]
        %v3274 = vld [vmem:[#allocation11 + $0x30] sm:$0xff]
        %v3275 = vld [vmem:[#allocation11 + $0x38] sm:$0xff]
        %v3276 = vld [vmem:[#allocation11 + $0x40] sm:$0xff]
        %v3277 = vld [vmem:[#allocation11 + $0x48] sm:$0xff]
        %v3278 = vld [vmem:[#allocation11 + $0x50] sm:$0xff]
        %v3279 = vld [vmem:[#allocation11 + $0x58] sm:$0xff]
        %v3280 = vld [vmem:[#allocation11 + $0x60] sm:$0xff]
        %v3281 = vld [vmem:[#allocation11 + $0x68] sm:$0xff]
        %v3282 = vld [vmem:[#allocation11 + $0x70] sm:$0xff]
        %v3283 = vld [vmem:[#allocation11 + $0x78] sm:$0xff]
        %v3284 = vld [vmem:[#allocation11 + $0x80] sm:$0xff]
        %v3285 = vld [vmem:[#allocation11 + $0x88] sm:$0xff]
        %v3286 = vld [vmem:[#allocation11 + $0x90] sm:$0xff]
        %v3287 = vld [vmem:[#allocation11 + $0x98] sm:$0xff]
        %v3288 = vld [vmem:[#allocation11 + $0xa0] sm:$0xff]
        %v3289 = vld [vmem:[#allocation11 + $0xa8] sm:$0xff]
        %v3290 = vld [vmem:[#allocation11 + $0xb0] sm:$0xff]
        %v3291 = vld [vmem:[#allocation11 + $0xb8] sm:$0xff]
        %v3292 = vld [vmem:[#allocation11 + $0xc0] sm:$0xff]
        %v3293 = vld [vmem:[#allocation11 + $0xc8] sm:$0xff]
        %v3294 = vld [vmem:[#allocation11 + $0xd0] sm:$0xff]
        %v3295 = vld [vmem:[#allocation11 + $0xd8] sm:$0xff]
        %v3296 = vld [vmem:[#allocation11 + $0xe0] sm:$0xff]
        %v3297 = vld [vmem:[#allocation11 + $0xe8] sm:$0xff]
        %v3298 = vld [vmem:[#allocation11 + $0xf0] sm:$0xff]
        %v3299 = vld [vmem:[#allocation11 + $0xf8] sm:$0xff]
        %v3300 = vld [vmem:[#allocation11 + $0x100] sm:$0xff]
        %v3301 = vld [vmem:[#allocation11 + $0x108] sm:$0xff]
        %v3302 = vld [vmem:[#allocation11 + $0x110] sm:$0xff]
        %v3303 = vld [vmem:[#allocation11 + $0x118] sm:$0xff]
        %v3304 = vld [vmem:[#allocation11 + $0x120] sm:$0xff]
        %v3305 = vld [vmem:[#allocation11 + $0x128] sm:$0xff]
        %v3306 = vld [vmem:[#allocation11 + $0x130] sm:$0xff]
        %v3307 = vld [vmem:[#allocation11 + $0x138] sm:$0xff]
        %v3308 = vld [vmem:[#allocation11 + $0x140] sm:$0xff]
        %v3309 = vld [vmem:[#allocation11 + $0x148] sm:$0xff]
        %v3310 = vld [vmem:[#allocation11 + $0x150] sm:$0xff]
        %v3311 = vld [vmem:[#allocation11 + $0x158] sm:$0xff]
        %v3312 = vld [vmem:[#allocation11 + $0x160] sm:$0xff]
        %v3313 = vld [vmem:[#allocation11 + $0x168] sm:$0xff]
        %v3314 = vld [vmem:[#allocation11 + $0x170] sm:$0xff]
        %v3315 = vld [vmem:[#allocation11 + $0x178] sm:$0xff]
        %v3316 = vld [vmem:[#allocation11 + $0x180] sm:$0xff]
        %v3317 = vld [vmem:[#allocation11 + $0x188] sm:$0xff]
        %v3318 = vld [vmem:[#allocation11 + $0x190] sm:$0xff]
        %v3319 = vld [vmem:[#allocation11 + $0x198] sm:$0xff]
        %v3320 = vld [vmem:[#allocation11 + $0x1a0] sm:$0xff]
        %v3321 = vld [vmem:[#allocation11 + $0x1a8] sm:$0xff]
        %v3322 = vld [vmem:[#allocation11 + $0x1b0] sm:$0xff]
        %v3323 = vld [vmem:[#allocation11 + $0x1b8] sm:$0xff]
        %v3324 = vld [vmem:[#allocation11 + $0x1c0] sm:$0xff]
        %v3325 = vld [vmem:[#allocation11 + $0x1c8] sm:$0xff]
        %v3326 = vld [vmem:[#allocation11 + $0x1d0] sm:$0xff]
        %v3327 = vld [vmem:[#allocation11 + $0x1d8] sm:$0xff]
        %v3328 = vld [vmem:[#allocation11 + $0x1e0] sm:$0xff]
        %v3329 = vld [vmem:[#allocation11 + $0x1e8] sm:$0xff]
        %v3330 = vld [vmem:[#allocation11 + $0x1f0] sm:$0xff]
        %v3331 = vld [vmem:[#allocation11 + $0x1f8] sm:$0xff]
        %v3340 = vcombine.low %v3236, %v3237
        %v3341 = vcombine.low %v3238, %v3239
        %v3342 = vcombine.low %v3240, %v3241
        %v3343 = vcombine.low %v3242, %v3243
        %v3345 = vunpack.c.l.s4 1966171168
        %v3346 = vunpack.c.0.s8 %v3345
        %v3347 = vlaneseq
        %v3348 = vshrl.u32 %v3347, 7
        %v3349 = vsub.s32 %v3346, %v3348
        %v3350 = vrot.slane %v3340, %v3349
        %v3352 = vunpack.c.l.s4 1966171168
        %v3353 = vunpack.c.0.s8 %v3352
        %v3354 = vlaneseq
        %v3355 = vshrl.u32 %v3354, 7
        %v3356 = vsub.s32 %v3353, %v3355
        %v3357 = vrot.slane %v3341, %v3356
        %v3359 = vunpack.c.l.s4 1966171168
        %v3360 = vunpack.c.0.s8 %v3359
        %v3361 = vlaneseq
        %v3362 = vshrl.u32 %v3361, 7
        %v3363 = vsub.s32 %v3360, %v3362
        %v3364 = vrot.slane %v3342, %v3363
        %v3366 = vunpack.c.l.s4 1966171168
        %v3367 = vunpack.c.0.s8 %v3366
        %v3368 = vlaneseq
        %v3369 = vshrl.u32 %v3368, 7
        %v3370 = vsub.s32 %v3367, %v3369
        %v3371 = vrot.slane %v3343, %v3370
        %v3372 = vcombine.low %v3350, %v3357
        %v3373 = vcombine.low %v3364, %v3371
        %v3375 = vunpack.c.l.s4 1966171168
        %v3376 = vunpack.c.0.s8 %v3375
        %v3377 = vlaneseq
        %v3378 = vshrl.u32 %v3377, 7
        %v3379 = vsub.s32 %v3376, %v3378
        %v3380 = vrot.slane %v3372, %v3379
        %v3382 = vunpack.c.l.s4 1966171168
        %v3383 = vunpack.c.0.s8 %v3382
        %v3384 = vlaneseq
        %v3385 = vshrl.u32 %v3384, 7
        %v3386 = vsub.s32 %v3383, %v3385
        %v3387 = vrot.slane %v3373, %v3386
        %v3388 = vcombine.low %v3380, %v3387
        %3390 = vmatprep.subr.mxu0 %v3329
        %3391 = vmatpush1.msra.mxu0 %v3328
        %3392 = vmatprep.subr.mxu0 %v3325
        %3393 = vmatpush1.msra.mxu0 %v3324
        %3394 = vmatprep.subr.mxu0 %v3321
        %3395 = vmatpush1.msra.mxu0 %v3320
        %3396 = vmatprep.subr.mxu0 %v3317
        %3397 = vmatpush1.msra.mxu0 %v3316
        %3398 = vmatprep.subr.mxu0 %v3313
        %3399 = vmatpush1.msra.mxu0 %v3312
        %3400 = vmatprep.subr.mxu0 %v3309
        %3401 = vmatpush1.msra.mxu0 %v3308
        %3402 = vmatprep.subr.mxu0 %v3305
        %3403 = vmatpush1.msra.mxu0 %v3304
        %3404 = vmatprep.subr.mxu0 %v3301
        %3405 = vmatpush1.msra.mxu0 %v3300
        %3406 = vmatprep.subr.mxu0 %v3297
        %3407 = vmatpush1.msra.mxu0 %v3296
        %3408 = vmatprep.subr.mxu0 %v3293
        %3409 = vmatpush1.msra.mxu0 %v3292
        %3410 = vmatprep.subr.mxu0 %v3289
        %3411 = vmatpush1.msra.mxu0 %v3288
        %3412 = vmatprep.subr.mxu0 %v3285
        %3413 = vmatpush1.msra.mxu0 %v3284
        %3414 = vmatprep.subr.mxu0 %v3281
        %3415 = vmatpush1.msra.mxu0 %v3280
        %3416 = vmatprep.subr.mxu0 %v3277
        %3417 = vmatpush1.msra.mxu0 %v3276
        %3418 = vmatprep.subr.mxu0 %v3273
        %3419 = vmatpush1.msra.mxu0 %v3272
        %3420 = vmatprep.subr.mxu0 %v3269
        %3421 = vmatpush1.msra.mxu0 %v3268
        %3422 = vmatprep.subr.mxu0 0.0
        %3423 = vmatpush2.msra.mxu0 0.0
        %3424 = vmatprep.subr.mxu0 0.0
        %3425 = vmatpush2.msra.mxu0 0.0
        %3426 = vmatprep.subr.mxu0 0.0
        %3427 = vmatpush2.msra.mxu0 0.0
        %3428 = vmatprep.subr.mxu0 0.0
        %3429 = vmatpush2.msra.mxu0 0.0
        %3430 = vmatprep.subr.mxu0 0.0
        %3431 = vmatpush2.msra.mxu0 0.0
        %3432 = vmatprep.subr.mxu0 0.0
        %3433 = vmatpush2.msra.mxu0 0.0
        %3434 = vmatprep.subr.mxu0 0.0
        %3435 = vmatpush2.msra.mxu0 0.0
        %3436 = vmatprep.subr.mxu0 0.0
        %3437 = vmatpush2.msra.mxu0 0.0
        %3438 = vmatprep.subr.mxu0 0.0
        %3439 = vmatpush2.msra.mxu0 0.0
        %3440 = vmatprep.subr.mxu0 0.0
        %3441 = vmatpush2.msra.mxu0 0.0
        %3442 = vmatprep.subr.mxu0 0.0
        %3443 = vmatpush2.msra.mxu0 0.0
        %3444 = vmatprep.subr.mxu0 0.0
        %3445 = vmatpush2.msra.mxu0 0.0
        %3446 = vmatprep.subr.mxu0 0.0
        %3447 = vmatpush2.msra.mxu0 0.0
        %3448 = vmatprep.subr.mxu0 0.0
        %3449 = vmatpush2.msra.mxu0 0.0
        %3450 = vmatprep.subr.mxu0 0.0
        %3451 = vmatpush2.msra.mxu0 0.0
        %3452 = vmatprep.subr.mxu0 0.0
        %3453 = vmatpush2.msra.mxu0 0.0
        %3454 = vmatprep.mubr.f32.mxu0 0.0
        %3455 = vmatmul.mubr.f32.gmra.mxu0 %v3388
        %v3456 = vpop.f32.mrf.mxu0
        %v3457 = vadd.f32 0.0, %v3456
        %v3458 = vpop.f32.mrf.mxu0
        %v3459 = vadd.f32 0.0, %v3458
        %3460 = vdwg.mxu0
        %3461 = vmatprep.subr.mxu0 %v3331
        %3462 = vmatpush1.msra.mxu0 %v3330
        %3463 = vmatprep.subr.mxu0 %v3327
        %3464 = vmatpush1.msra.mxu0 %v3326
        %3465 = vmatprep.subr.mxu0 %v3323
        %3466 = vmatpush1.msra.mxu0 %v3322
        %3467 = vmatprep.subr.mxu0 %v3319
        %3468 = vmatpush1.msra.mxu0 %v3318
        %3469 = vmatprep.subr.mxu0 %v3315
        %3470 = vmatpush1.msra.mxu0 %v3314
        %3471 = vmatprep.subr.mxu0 %v3311
        %3472 = vmatpush1.msra.mxu0 %v3310
        %3473 = vmatprep.subr.mxu0 %v3307
        %3474 = vmatpush1.msra.mxu0 %v3306
        %3475 = vmatprep.subr.mxu0 %v3303
        %3476 = vmatpush1.msra.mxu0 %v3302
        %3477 = vmatprep.subr.mxu0 %v3299
        %3478 = vmatpush1.msra.mxu0 %v3298
        %3479 = vmatprep.subr.mxu0 %v3295
        %3480 = vmatpush1.msra.mxu0 %v3294
        %3481 = vmatprep.subr.mxu0 %v3291
        %3482 = vmatpush1.msra.mxu0 %v3290
        %3483 = vmatprep.subr.mxu0 %v3287
        %3484 = vmatpush1.msra.mxu0 %v3286
        %3485 = vmatprep.subr.mxu0 %v3283
        %3486 = vmatpush1.msra.mxu0 %v3282
        %3487 = vmatprep.subr.mxu0 %v3279
        %3488 = vmatpush1.msra.mxu0 %v3278
        %3489 = vmatprep.subr.mxu0 %v3275
        %3490 = vmatpush1.msra.mxu0 %v3274
        %3491 = vmatprep.subr.mxu0 %v3271
        %3492 = vmatpush1.msra.mxu0 %v3270
        %3493 = vmatprep.subr.mxu0 0.0
        %3494 = vmatpush2.msra.mxu0 0.0
        %3495 = vmatprep.subr.mxu0 0.0
        %3496 = vmatpush2.msra.mxu0 0.0
        %3497 = vmatprep.subr.mxu0 0.0
        %3498 = vmatpush2.msra.mxu0 0.0
        %3499 = vmatprep.subr.mxu0 0.0
        %3500 = vmatpush2.msra.mxu0 0.0
        %3501 = vmatprep.subr.mxu0 0.0
        %3502 = vmatpush2.msra.mxu0 0.0
        %3503 = vmatprep.subr.mxu0 0.0
        %3504 = vmatpush2.msra.mxu0 0.0
        %3505 = vmatprep.subr.mxu0 0.0
        %3506 = vmatpush2.msra.mxu0 0.0
        %3507 = vmatprep.subr.mxu0 0.0
        %3508 = vmatpush2.msra.mxu0 0.0
        %3509 = vmatprep.subr.mxu0 0.0
        %3510 = vmatpush2.msra.mxu0 0.0
        %3511 = vmatprep.subr.mxu0 0.0
        %3512 = vmatpush2.msra.mxu0 0.0
        %3513 = vmatprep.subr.mxu0 0.0
        %3514 = vmatpush2.msra.mxu0 0.0
        %3515 = vmatprep.subr.mxu0 0.0
        %3516 = vmatpush2.msra.mxu0 0.0
        %3517 = vmatprep.subr.mxu0 0.0
        %3518 = vmatpush2.msra.mxu0 0.0
        %3519 = vmatprep.subr.mxu0 0.0
        %3520 = vmatpush2.msra.mxu0 0.0
        %3521 = vmatprep.subr.mxu0 0.0
        %3522 = vmatpush2.msra.mxu0 0.0
        %3523 = vmatprep.subr.mxu0 0.0
        %3524 = vmatpush2.msra.mxu0 0.0
        %3525 = vmatprep.mubr.f32.mxu0 0.0
        %3526 = vmatmul.mubr.f32.gmra.mxu0 %v3388
        %v3527 = vpop.f32.mrf.mxu0
        %v3528 = vadd.f32 0.0, %v3527
        %v3529 = vpop.f32.mrf.mxu0
        %v3530 = vadd.f32 0.0, %v3529
        %3531 = vdwg.mxu0
        %v3536 = vcombine.low %v3457, %v3459
        %v3537 = vcombine.high %v3457, %v3459
        %v3538 = vcombine.low %v3528, %v3530
        %v3539 = vcombine.high %v3528, %v3530
        %v3541 = vunpack.c.l.s4 1966171168
        %v3542 = vunpack.c.0.s8 %v3541
        %v3543 = vlaneseq
        %v3544 = vshrl.u32 %v3543, 7
        %v3545 = vsub.s32 %v3542, %v3544
        %v3546 = vrot.slane %v3536, %v3545
        %v3548 = vunpack.c.l.s4 1966171168
        %v3549 = vunpack.c.0.s8 %v3548
        %v3550 = vlaneseq
        %v3551 = vshrl.u32 %v3550, 7
        %v3552 = vsub.s32 %v3549, %v3551
        %v3553 = vrot.slane %v3537, %v3552
        %v3555 = vunpack.c.l.s4 1966171168
        %v3556 = vunpack.c.0.s8 %v3555
        %v3557 = vlaneseq
        %v3558 = vshrl.u32 %v3557, 7
        %v3559 = vsub.s32 %v3556, %v3558
        %v3560 = vrot.slane %v3538, %v3559
        %v3562 = vunpack.c.l.s4 1966171168
        %v3563 = vunpack.c.0.s8 %v3562
        %v3564 = vlaneseq
        %v3565 = vshrl.u32 %v3564, 7
        %v3566 = vsub.s32 %v3563, %v3565
        %v3567 = vrot.slane %v3539, %v3566
        %v3568 = vcombine.low %v3546, %v3560
        %v3569 = vcombine.high %v3546, %v3560
        %v3570 = vcombine.low %v3553, %v3567
        %v3571 = vcombine.high %v3553, %v3567
        %v3573 = vunpack.c.l.s4 1966171168
        %v3574 = vunpack.c.0.s8 %v3573
        %v3575 = vlaneseq
        %v3576 = vshrl.u32 %v3575, 7
        %v3577 = vsub.s32 %v3574, %v3576
        %v3578 = vrot.slane %v3568, %v3577
        %v3580 = vunpack.c.l.s4 1966171168
        %v3581 = vunpack.c.0.s8 %v3580
        %v3582 = vlaneseq
        %v3583 = vshrl.u32 %v3582, 7
        %v3584 = vsub.s32 %v3581, %v3583
        %v3585 = vrot.slane %v3570, %v3584
        %v3587 = vunpack.c.l.s4 1966171168
        %v3588 = vunpack.c.0.s8 %v3587
        %v3589 = vlaneseq
        %v3590 = vshrl.u32 %v3589, 7
        %v3591 = vsub.s32 %v3588, %v3590
        %v3592 = vrot.slane %v3569, %v3591
        %v3594 = vunpack.c.l.s4 1966171168
        %v3595 = vunpack.c.0.s8 %v3594
        %v3596 = vlaneseq
        %v3597 = vshrl.u32 %v3596, 7
        %v3598 = vsub.s32 %v3595, %v3597
        %v3599 = vrot.slane %v3571, %v3598
        %v3600 = vcombine.high %v3578, %v3578
        %v3601 = vcombine.high %v3585, %v3585
        %v3602 = vcombine.high %v3592, %v3592
        %v3603 = vcombine.high %v3599, %v3599
        %v3612 = vadd.f32 %v3253, %v3578
        %v3613 = vadd.f32 %v3255, %v3592
        %v3614 = vadd.f32 %v3257, %v3600
        %v3615 = vadd.f32 %v3259, %v3602
        %v3616 = vadd.f32 %v3261, %v3585
        %v3617 = vadd.f32 %v3263, %v3599
        %v3618 = vadd.f32 %v3265, %v3601
        %v3619 = vadd.f32 %v3267, %v3603
        %v3620 = vxor.u32 %v3612, 2147483648
        %v3621 = vxor.u32 %v3613, 2147483648
        %v3622 = vxor.u32 %v3614, 2147483648
        %v3623 = vxor.u32 %v3615, 2147483648
        %v3624 = vxor.u32 %v3616, 2147483648
        %v3625 = vxor.u32 %v3617, 2147483648
        %v3626 = vxor.u32 %v3618, 2147483648
        %v3627 = vxor.u32 %v3619, 2147483648
        %v3628 = vmul.f32 %v3620, 1.442695
        %v3629 = vpow.pop %v3628
        %v3630 = vmul.f32 %v3621, 1.442695
        %v3631 = vpow.pop %v3630
        %v3632 = vmul.f32 %v3622, 1.442695
        %v3633 = vpow.pop %v3632
        %v3634 = vmul.f32 %v3623, 1.442695
        %v3635 = vpow.pop %v3634
        %v3636 = vmul.f32 %v3624, 1.442695
        %v3637 = vpow.pop %v3636
        %v3638 = vmul.f32 %v3625, 1.442695
        %v3639 = vpow.pop %v3638
        %v3640 = vmul.f32 %v3626, 1.442695
        %v3641 = vpow.pop %v3640
        %v3642 = vmul.f32 %v3627, 1.442695
        %v3643 = vpow.pop %v3642
        %v3644 = vadd.f32 %v3629, 1.0
        %v3645 = vadd.f32 %v3631, 1.0
        %v3646 = vadd.f32 %v3633, 1.0
        %v3647 = vadd.f32 %v3635, 1.0
        %v3648 = vadd.f32 %v3637, 1.0
        %v3649 = vadd.f32 %v3639, 1.0
        %v3650 = vadd.f32 %v3641, 1.0
        %v3651 = vadd.f32 %v3643, 1.0
        %v3652 = vrcp.pop %v3644
        %v3653 = vmul.f32 1.0, %v3652
        %v3654 = vrcp.pop %v3645
        %v3655 = vmul.f32 1.0, %v3654
        %v3656 = vrcp.pop %v3646
        %v3657 = vmul.f32 1.0, %v3656
        %v3658 = vrcp.pop %v3647
        %v3659 = vmul.f32 1.0, %v3658
        %v3660 = vrcp.pop %v3648
        %v3661 = vmul.f32 1.0, %v3660
        %v3662 = vrcp.pop %v3649
        %v3663 = vmul.f32 1.0, %v3662
        %v3664 = vrcp.pop %v3650
        %v3665 = vmul.f32 1.0, %v3664
        %v3666 = vrcp.pop %v3651
        %v3667 = vmul.f32 1.0, %v3666
        %v3676 = vrot.slane %v3612, 1
        %v3677 = vrot.slane %v3613, 1
        %v3678 = vrot.slane %v3614, 1
        %v3679 = vrot.slane %v3615, 1
        %v3680 = vrot.slane %v3616, 1
        %v3681 = vrot.slane %v3617, 1
        %v3682 = vrot.slane %v3618, 1
        %v3683 = vrot.slane %v3619, 1
        %v3692 = vxor.u32 %v3676, 2147483648
        %v3693 = vxor.u32 %v3677, 2147483648
        %v3694 = vxor.u32 %v3678, 2147483648
        %v3695 = vxor.u32 %v3679, 2147483648
        %v3696 = vxor.u32 %v3680, 2147483648
        %v3697 = vxor.u32 %v3681, 2147483648
        %v3698 = vxor.u32 %v3682, 2147483648
        %v3699 = vxor.u32 %v3683, 2147483648
        %v3700 = vmul.f32 %v3692, 1.442695
        %v3701 = vpow.pop %v3700
        %v3702 = vmul.f32 %v3693, 1.442695
        %v3703 = vpow.pop %v3702
        %v3704 = vmul.f32 %v3694, 1.442695
        %v3705 = vpow.pop %v3704
        %v3706 = vmul.f32 %v3695, 1.442695
        %v3707 = vpow.pop %v3706
        %v3708 = vmul.f32 %v3696, 1.442695
        %v3709 = vpow.pop %v3708
        %v3710 = vmul.f32 %v3697, 1.442695
        %v3711 = vpow.pop %v3710
        %v3712 = vmul.f32 %v3698, 1.442695
        %v3713 = vpow.pop %v3712
        %v3714 = vmul.f32 %v3699, 1.442695
        %v3715 = vpow.pop %v3714
        %v3716 = vadd.f32 %v3701, 1.0
        %v3717 = vadd.f32 %v3703, 1.0
        %v3718 = vadd.f32 %v3705, 1.0
        %v3719 = vadd.f32 %v3707, 1.0
        %v3720 = vadd.f32 %v3709, 1.0
        %v3721 = vadd.f32 %v3711, 1.0
        %v3722 = vadd.f32 %v3713, 1.0
        %v3723 = vadd.f32 %v3715, 1.0
        %v3724 = vrcp.pop %v3716
        %v3725 = vmul.f32 1.0, %v3724
        %v3726 = vrcp.pop %v3717
        %v3727 = vmul.f32 1.0, %v3726
        %v3728 = vrcp.pop %v3718
        %v3729 = vmul.f32 1.0, %v3728
        %v3730 = vrcp.pop %v3719
        %v3731 = vmul.f32 1.0, %v3730
        %v3732 = vrcp.pop %v3720
        %v3733 = vmul.f32 1.0, %v3732
        %v3734 = vrcp.pop %v3721
        %v3735 = vmul.f32 1.0, %v3734
        %v3736 = vrcp.pop %v3722
        %v3737 = vmul.f32 1.0, %v3736
        %v3738 = vrcp.pop %v3723
        %v3739 = vmul.f32 1.0, %v3738
        %v3740 = vrot.slane %v3612, 2
        %v3741 = vrot.slane %v3613, 2
        %v3742 = vrot.slane %v3614, 2
        %v3743 = vrot.slane %v3615, 2
        %v3744 = vrot.slane %v3616, 2
        %v3745 = vrot.slane %v3617, 2
        %v3746 = vrot.slane %v3618, 2
        %v3747 = vrot.slane %v3619, 2
        %v3756 = vtanh.pop %v3740
        %v3757 = vtanh.pop %v3741
        %v3758 = vtanh.pop %v3742
        %v3759 = vtanh.pop %v3743
        %v3760 = vtanh.pop %v3744
        %v3761 = vtanh.pop %v3745
        %v3762 = vtanh.pop %v3746
        %v3763 = vtanh.pop %v3747
        %v3764 = vrot.slane %v3612, 3
        %v3765 = vrot.slane %v3613, 3
        %v3766 = vrot.slane %v3614, 3
        %v3767 = vrot.slane %v3615, 3
        %v3768 = vrot.slane %v3616, 3
        %v3769 = vrot.slane %v3617, 3
        %v3770 = vrot.slane %v3618, 3
        %v3771 = vrot.slane %v3619, 3
        %v3780 = vxor.u32 %v3764, 2147483648
        %v3781 = vxor.u32 %v3765, 2147483648
        %v3782 = vxor.u32 %v3766, 2147483648
        %v3783 = vxor.u32 %v3767, 2147483648
        %v3784 = vxor.u32 %v3768, 2147483648
        %v3785 = vxor.u32 %v3769, 2147483648
        %v3786 = vxor.u32 %v3770, 2147483648
        %v3787 = vxor.u32 %v3771, 2147483648
        %v3788 = vmul.f32 %v3780, 1.442695
        %v3789 = vpow.pop %v3788
        %v3790 = vmul.f32 %v3781, 1.442695
        %v3791 = vpow.pop %v3790
        %v3792 = vmul.f32 %v3782, 1.442695
        %v3793 = vpow.pop %v3792
        %v3794 = vmul.f32 %v3783, 1.442695
        %v3795 = vpow.pop %v3794
        %v3796 = vmul.f32 %v3784, 1.442695
        %v3797 = vpow.pop %v3796
        %v3798 = vmul.f32 %v3785, 1.442695
        %v3799 = vpow.pop %v3798
        %v3800 = vmul.f32 %v3786, 1.442695
        %v3801 = vpow.pop %v3800
        %v3802 = vmul.f32 %v3787, 1.442695
        %v3803 = vpow.pop %v3802
        %v3804 = vadd.f32 %v3789, 1.0
        %v3805 = vadd.f32 %v3791, 1.0
        %v3806 = vadd.f32 %v3793, 1.0
        %v3807 = vadd.f32 %v3795, 1.0
        %v3808 = vadd.f32 %v3797, 1.0
        %v3809 = vadd.f32 %v3799, 1.0
        %v3810 = vadd.f32 %v3801, 1.0
        %v3811 = vadd.f32 %v3803, 1.0
        %v3812 = vrcp.pop %v3804
        %v3813 = vmul.f32 1.0, %v3812
        %v3814 = vrcp.pop %v3805
        %v3815 = vmul.f32 1.0, %v3814
        %v3816 = vrcp.pop %v3806
        %v3817 = vmul.f32 1.0, %v3816
        %v3818 = vrcp.pop %v3807
        %v3819 = vmul.f32 1.0, %v3818
        %v3820 = vrcp.pop %v3808
        %v3821 = vmul.f32 1.0, %v3820
        %v3822 = vrcp.pop %v3809
        %v3823 = vmul.f32 1.0, %v3822
        %v3824 = vrcp.pop %v3810
        %v3825 = vmul.f32 1.0, %v3824
        %v3826 = vrcp.pop %v3811
        %v3827 = vmul.f32 1.0, %v3826
        %v3828 = vmul.f32 %v3725, %v3220
        %v3829 = vmul.f32 %v3727, %v3221
        %v3830 = vmul.f32 %v3729, %v3222
        %v3831 = vmul.f32 %v3731, %v3223
        %v3832 = vmul.f32 %v3733, %v3224
        %v3833 = vmul.f32 %v3735, %v3225
        %v3834 = vmul.f32 %v3737, %v3226
        %v3835 = vmul.f32 %v3739, %v3227
        %v3836 = vmul.f32 %v3653, %v3756
        %v3837 = vmul.f32 %v3655, %v3757
        %v3838 = vmul.f32 %v3657, %v3758
        %v3839 = vmul.f32 %v3659, %v3759
        %v3840 = vmul.f32 %v3661, %v3760
        %v3841 = vmul.f32 %v3663, %v3761
        %v3842 = vmul.f32 %v3665, %v3762
        %v3843 = vmul.f32 %v3667, %v3763
        %v3844 = vadd.f32 %v3828, %v3836
        %v3845 = vadd.f32 %v3829, %v3837
        %v3846 = vadd.f32 %v3830, %v3838
        %v3847 = vadd.f32 %v3831, %v3839
        %v3848 = vadd.f32 %v3832, %v3840
        %v3849 = vadd.f32 %v3833, %v3841
        %v3850 = vadd.f32 %v3834, %v3842
        %v3851 = vadd.f32 %v3835, %v3843
        %v3852 = vtanh.pop %v3844
        %v3853 = vtanh.pop %v3845
        %v3854 = vtanh.pop %v3846
        %v3855 = vtanh.pop %v3847
        %v3856 = vtanh.pop %v3848
        %v3857 = vtanh.pop %v3849
        %v3858 = vtanh.pop %v3850
        %v3859 = vtanh.pop %v3851
        %v3860 = vmul.f32 %v3813, %v3852
        %v3861 = vmul.f32 %v3815, %v3853
        %v3862 = vmul.f32 %v3817, %v3854
        %v3863 = vmul.f32 %v3819, %v3855
        %v3864 = vmul.f32 %v3821, %v3856
        %v3865 = vmul.f32 %v3823, %v3857
        %v3866 = vmul.f32 %v3825, %v3858
        %v3867 = vmul.f32 %v3827, %v3859
        %3868 = vst [vmem:[%s411 + $0x4] sm:$0x1] %v3860
        %3869 = vst [vmem:[%s411 + $0xc] sm:$0x1] %v3861
        %3870 = vst [vmem:[%s411 + $0x14] sm:$0x1] %v3862
        %3871 = vst [vmem:[%s411 + $0x1c] sm:$0x1] %v3863
        %3872 = vst [vmem:[%s411 + $0x24] sm:$0x1] %v3864
        %3873 = vst [vmem:[%s411 + $0x2c] sm:$0x1] %v3865
        %3874 = vst [vmem:[%s411 + $0x34] sm:$0x1] %v3866
        %3875 = vst [vmem:[%s411 + $0x3c] sm:$0x1] %v3867
        %s3876 = scalar_lea.vmem [#allocation2], 5
        %v3877 = vld [vmem:[%s3876] ss:$8 sm:$0xf]
        %s3878 = scalar_lea.vmem [#allocation2], 37
        %v3879 = vld [vmem:[%s3878] ss:$8 sm:$0xf]
        %s3880 = scalar_lea.vmem [#allocation2], 69
        %v3881 = vld [vmem:[%s3880] ss:$8 sm:$0xf]
        %s3882 = scalar_lea.vmem [#allocation2], 101
        %v3883 = vld [vmem:[%s3882] ss:$8 sm:$0xf]
        %s3884 = scalar_lea.vmem [#allocation2], 133
        %v3885 = vld [vmem:[%s3884] ss:$8 sm:$0xf]
        %s3886 = scalar_lea.vmem [#allocation2], 165
        %v3887 = vld [vmem:[%s3886] ss:$8 sm:$0xf]
        %s3888 = scalar_lea.vmem [#allocation2], 197
        %v3889 = vld [vmem:[%s3888] ss:$8 sm:$0xf]
        %s3890 = scalar_lea.vmem [#allocation2], 229
        %v3891 = vld [vmem:[%s3890] ss:$8 sm:$0xf]
        %v3892 = vld [vmem:[#allocation11] sm:$0xff]
        %v3893 = vld [vmem:[#allocation11 + $0x8] sm:$0xff]
        %v3894 = vld [vmem:[#allocation11 + $0x10] sm:$0xff]
        %v3895 = vld [vmem:[#allocation11 + $0x18] sm:$0xff]
        %v3896 = vld [vmem:[#allocation11 + $0x20] sm:$0xff]
        %v3897 = vld [vmem:[#allocation11 + $0x28] sm:$0xff]
        %v3898 = vld [vmem:[#allocation11 + $0x30] sm:$0xff]
        %v3899 = vld [vmem:[#allocation11 + $0x38] sm:$0xff]
        %v3900 = vld [vmem:[#allocation11 + $0x40] sm:$0xff]
        %v3901 = vld [vmem:[#allocation11 + $0x48] sm:$0xff]
        %v3902 = vld [vmem:[#allocation11 + $0x50] sm:$0xff]
        %v3903 = vld [vmem:[#allocation11 + $0x58] sm:$0xff]
        %v3904 = vld [vmem:[#allocation11 + $0x60] sm:$0xff]
        %v3905 = vld [vmem:[#allocation11 + $0x68] sm:$0xff]
        %v3906 = vld [vmem:[#allocation11 + $0x70] sm:$0xff]
        %v3907 = vld [vmem:[#allocation11 + $0x78] sm:$0xff]
        %v3908 = vld [vmem:[#allocation11 + $0x80] sm:$0xff]
        %v3909 = vld [vmem:[#allocation11 + $0x88] sm:$0xff]
        %v3910 = vld [vmem:[#allocation11 + $0x90] sm:$0xff]
        %v3911 = vld [vmem:[#allocation11 + $0x98] sm:$0xff]
        %v3912 = vld [vmem:[#allocation11 + $0xa0] sm:$0xff]
        %v3913 = vld [vmem:[#allocation11 + $0xa8] sm:$0xff]
        %v3914 = vld [vmem:[#allocation11 + $0xb0] sm:$0xff]
        %v3915 = vld [vmem:[#allocation11 + $0xb8] sm:$0xff]
        %v3916 = vld [vmem:[#allocation11 + $0xc0] sm:$0xff]
        %v3917 = vld [vmem:[#allocation11 + $0xc8] sm:$0xff]
        %v3918 = vld [vmem:[#allocation11 + $0xd0] sm:$0xff]
        %v3919 = vld [vmem:[#allocation11 + $0xd8] sm:$0xff]
        %v3920 = vld [vmem:[#allocation11 + $0xe0] sm:$0xff]
        %v3921 = vld [vmem:[#allocation11 + $0xe8] sm:$0xff]
        %v3922 = vld [vmem:[#allocation11 + $0xf0] sm:$0xff]
        %v3923 = vld [vmem:[#allocation11 + $0xf8] sm:$0xff]
        %v3924 = vld [vmem:[#allocation11 + $0x100] sm:$0xff]
        %v3925 = vld [vmem:[#allocation11 + $0x108] sm:$0xff]
        %v3926 = vld [vmem:[#allocation11 + $0x110] sm:$0xff]
        %v3927 = vld [vmem:[#allocation11 + $0x118] sm:$0xff]
        %v3928 = vld [vmem:[#allocation11 + $0x120] sm:$0xff]
        %v3929 = vld [vmem:[#allocation11 + $0x128] sm:$0xff]
        %v3930 = vld [vmem:[#allocation11 + $0x130] sm:$0xff]
        %v3931 = vld [vmem:[#allocation11 + $0x138] sm:$0xff]
        %v3932 = vld [vmem:[#allocation11 + $0x140] sm:$0xff]
        %v3933 = vld [vmem:[#allocation11 + $0x148] sm:$0xff]
        %v3934 = vld [vmem:[#allocation11 + $0x150] sm:$0xff]
        %v3935 = vld [vmem:[#allocation11 + $0x158] sm:$0xff]
        %v3936 = vld [vmem:[#allocation11 + $0x160] sm:$0xff]
        %v3937 = vld [vmem:[#allocation11 + $0x168] sm:$0xff]
        %v3938 = vld [vmem:[#allocation11 + $0x170] sm:$0xff]
        %v3939 = vld [vmem:[#allocation11 + $0x178] sm:$0xff]
        %v3940 = vld [vmem:[#allocation11 + $0x180] sm:$0xff]
        %v3941 = vld [vmem:[#allocation11 + $0x188] sm:$0xff]
        %v3942 = vld [vmem:[#allocation11 + $0x190] sm:$0xff]
        %v3943 = vld [vmem:[#allocation11 + $0x198] sm:$0xff]
        %v3944 = vld [vmem:[#allocation11 + $0x1a0] sm:$0xff]
        %v3945 = vld [vmem:[#allocation11 + $0x1a8] sm:$0xff]
        %v3946 = vld [vmem:[#allocation11 + $0x1b0] sm:$0xff]
        %v3947 = vld [vmem:[#allocation11 + $0x1b8] sm:$0xff]
        %v3948 = vld [vmem:[#allocation11 + $0x1c0] sm:$0xff]
        %v3949 = vld [vmem:[#allocation11 + $0x1c8] sm:$0xff]
        %v3950 = vld [vmem:[#allocation11 + $0x1d0] sm:$0xff]
        %v3951 = vld [vmem:[#allocation11 + $0x1d8] sm:$0xff]
        %v3952 = vld [vmem:[#allocation11 + $0x1e0] sm:$0xff]
        %v3953 = vld [vmem:[#allocation11 + $0x1e8] sm:$0xff]
        %v3954 = vld [vmem:[#allocation11 + $0x1f0] sm:$0xff]
        %v3955 = vld [vmem:[#allocation11 + $0x1f8] sm:$0xff]
        %v3964 = vcombine.low %v3860, %v3861
        %v3965 = vcombine.low %v3862, %v3863
        %v3966 = vcombine.low %v3864, %v3865
        %v3967 = vcombine.low %v3866, %v3867
        %v3969 = vunpack.c.l.s4 1966171168
        %v3970 = vunpack.c.0.s8 %v3969
        %v3971 = vlaneseq
        %v3972 = vshrl.u32 %v3971, 7
        %v3973 = vsub.s32 %v3970, %v3972
        %v3974 = vrot.slane %v3964, %v3973
        %v3976 = vunpack.c.l.s4 1966171168
        %v3977 = vunpack.c.0.s8 %v3976
        %v3978 = vlaneseq
        %v3979 = vshrl.u32 %v3978, 7
        %v3980 = vsub.s32 %v3977, %v3979
        %v3981 = vrot.slane %v3965, %v3980
        %v3983 = vunpack.c.l.s4 1966171168
        %v3984 = vunpack.c.0.s8 %v3983
        %v3985 = vlaneseq
        %v3986 = vshrl.u32 %v3985, 7
        %v3987 = vsub.s32 %v3984, %v3986
        %v3988 = vrot.slane %v3966, %v3987
        %v3990 = vunpack.c.l.s4 1966171168
        %v3991 = vunpack.c.0.s8 %v3990
        %v3992 = vlaneseq
        %v3993 = vshrl.u32 %v3992, 7
        %v3994 = vsub.s32 %v3991, %v3993
        %v3995 = vrot.slane %v3967, %v3994
        %v3996 = vcombine.low %v3974, %v3981
        %v3997 = vcombine.low %v3988, %v3995
        %v3999 = vunpack.c.l.s4 1966171168
        %v4000 = vunpack.c.0.s8 %v3999
        %v4001 = vlaneseq
        %v4002 = vshrl.u32 %v4001, 7
        %v4003 = vsub.s32 %v4000, %v4002
        %v4004 = vrot.slane %v3996, %v4003
        %v4006 = vunpack.c.l.s4 1966171168
        %v4007 = vunpack.c.0.s8 %v4006
        %v4008 = vlaneseq
        %v4009 = vshrl.u32 %v4008, 7
        %v4010 = vsub.s32 %v4007, %v4009
        %v4011 = vrot.slane %v3997, %v4010
        %v4012 = vcombine.low %v4004, %v4011
        %4014 = vmatprep.subr.mxu0 %v3953
        %4015 = vmatpush1.msra.mxu0 %v3952
        %4016 = vmatprep.subr.mxu0 %v3949
        %4017 = vmatpush1.msra.mxu0 %v3948
        %4018 = vmatprep.subr.mxu0 %v3945
        %4019 = vmatpush1.msra.mxu0 %v3944
        %4020 = vmatprep.subr.mxu0 %v3941
        %4021 = vmatpush1.msra.mxu0 %v3940
        %4022 = vmatprep.subr.mxu0 %v3937
        %4023 = vmatpush1.msra.mxu0 %v3936
        %4024 = vmatprep.subr.mxu0 %v3933
        %4025 = vmatpush1.msra.mxu0 %v3932
        %4026 = vmatprep.subr.mxu0 %v3929
        %4027 = vmatpush1.msra.mxu0 %v3928
        %4028 = vmatprep.subr.mxu0 %v3925
        %4029 = vmatpush1.msra.mxu0 %v3924
        %4030 = vmatprep.subr.mxu0 %v3921
        %4031 = vmatpush1.msra.mxu0 %v3920
        %4032 = vmatprep.subr.mxu0 %v3917
        %4033 = vmatpush1.msra.mxu0 %v3916
        %4034 = vmatprep.subr.mxu0 %v3913
        %4035 = vmatpush1.msra.mxu0 %v3912
        %4036 = vmatprep.subr.mxu0 %v3909
        %4037 = vmatpush1.msra.mxu0 %v3908
        %4038 = vmatprep.subr.mxu0 %v3905
        %4039 = vmatpush1.msra.mxu0 %v3904
        %4040 = vmatprep.subr.mxu0 %v3901
        %4041 = vmatpush1.msra.mxu0 %v3900
        %4042 = vmatprep.subr.mxu0 %v3897
        %4043 = vmatpush1.msra.mxu0 %v3896
        %4044 = vmatprep.subr.mxu0 %v3893
        %4045 = vmatpush1.msra.mxu0 %v3892
        %4046 = vmatprep.subr.mxu0 0.0
        %4047 = vmatpush2.msra.mxu0 0.0
        %4048 = vmatprep.subr.mxu0 0.0
        %4049 = vmatpush2.msra.mxu0 0.0
        %4050 = vmatprep.subr.mxu0 0.0
        %4051 = vmatpush2.msra.mxu0 0.0
        %4052 = vmatprep.subr.mxu0 0.0
        %4053 = vmatpush2.msra.mxu0 0.0
        %4054 = vmatprep.subr.mxu0 0.0
        %4055 = vmatpush2.msra.mxu0 0.0
        %4056 = vmatprep.subr.mxu0 0.0
        %4057 = vmatpush2.msra.mxu0 0.0
        %4058 = vmatprep.subr.mxu0 0.0
        %4059 = vmatpush2.msra.mxu0 0.0
        %4060 = vmatprep.subr.mxu0 0.0
        %4061 = vmatpush2.msra.mxu0 0.0
        %4062 = vmatprep.subr.mxu0 0.0
        %4063 = vmatpush2.msra.mxu0 0.0
        %4064 = vmatprep.subr.mxu0 0.0
        %4065 = vmatpush2.msra.mxu0 0.0
        %4066 = vmatprep.subr.mxu0 0.0
        %4067 = vmatpush2.msra.mxu0 0.0
        %4068 = vmatprep.subr.mxu0 0.0
        %4069 = vmatpush2.msra.mxu0 0.0
        %4070 = vmatprep.subr.mxu0 0.0
        %4071 = vmatpush2.msra.mxu0 0.0
        %4072 = vmatprep.subr.mxu0 0.0
        %4073 = vmatpush2.msra.mxu0 0.0
        %4074 = vmatprep.subr.mxu0 0.0
        %4075 = vmatpush2.msra.mxu0 0.0
        %4076 = vmatprep.subr.mxu0 0.0
        %4077 = vmatpush2.msra.mxu0 0.0
        %4078 = vmatprep.mubr.f32.mxu0 0.0
        %4079 = vmatmul.mubr.f32.gmra.mxu0 %v4012
        %v4080 = vpop.f32.mrf.mxu0
        %v4081 = vadd.f32 0.0, %v4080
        %v4082 = vpop.f32.mrf.mxu0
        %v4083 = vadd.f32 0.0, %v4082
        %4084 = vdwg.mxu0
        %4085 = vmatprep.subr.mxu0 %v3955
        %4086 = vmatpush1.msra.mxu0 %v3954
        %4087 = vmatprep.subr.mxu0 %v3951
        %4088 = vmatpush1.msra.mxu0 %v3950
        %4089 = vmatprep.subr.mxu0 %v3947
        %4090 = vmatpush1.msra.mxu0 %v3946
        %4091 = vmatprep.subr.mxu0 %v3943
        %4092 = vmatpush1.msra.mxu0 %v3942
        %4093 = vmatprep.subr.mxu0 %v3939
        %4094 = vmatpush1.msra.mxu0 %v3938
        %4095 = vmatprep.subr.mxu0 %v3935
        %4096 = vmatpush1.msra.mxu0 %v3934
        %4097 = vmatprep.subr.mxu0 %v3931
        %4098 = vmatpush1.msra.mxu0 %v3930
        %4099 = vmatprep.subr.mxu0 %v3927
        %4100 = vmatpush1.msra.mxu0 %v3926
        %4101 = vmatprep.subr.mxu0 %v3923
        %4102 = vmatpush1.msra.mxu0 %v3922
        %4103 = vmatprep.subr.mxu0 %v3919
        %4104 = vmatpush1.msra.mxu0 %v3918
        %4105 = vmatprep.subr.mxu0 %v3915
        %4106 = vmatpush1.msra.mxu0 %v3914
        %4107 = vmatprep.subr.mxu0 %v3911
        %4108 = vmatpush1.msra.mxu0 %v3910
        %4109 = vmatprep.subr.mxu0 %v3907
        %4110 = vmatpush1.msra.mxu0 %v3906
        %4111 = vmatprep.subr.mxu0 %v3903
        %4112 = vmatpush1.msra.mxu0 %v3902
        %4113 = vmatprep.subr.mxu0 %v3899
        %4114 = vmatpush1.msra.mxu0 %v3898
        %4115 = vmatprep.subr.mxu0 %v3895
        %4116 = vmatpush1.msra.mxu0 %v3894
        %4117 = vmatprep.subr.mxu0 0.0
        %4118 = vmatpush2.msra.mxu0 0.0
        %4119 = vmatprep.subr.mxu0 0.0
        %4120 = vmatpush2.msra.mxu0 0.0
        %4121 = vmatprep.subr.mxu0 0.0
        %4122 = vmatpush2.msra.mxu0 0.0
        %4123 = vmatprep.subr.mxu0 0.0
        %4124 = vmatpush2.msra.mxu0 0.0
        %4125 = vmatprep.subr.mxu0 0.0
        %4126 = vmatpush2.msra.mxu0 0.0
        %4127 = vmatprep.subr.mxu0 0.0
        %4128 = vmatpush2.msra.mxu0 0.0
        %4129 = vmatprep.subr.mxu0 0.0
        %4130 = vmatpush2.msra.mxu0 0.0
        %4131 = vmatprep.subr.mxu0 0.0
        %4132 = vmatpush2.msra.mxu0 0.0
        %4133 = vmatprep.subr.mxu0 0.0
        %4134 = vmatpush2.msra.mxu0 0.0
        %4135 = vmatprep.subr.mxu0 0.0
        %4136 = vmatpush2.msra.mxu0 0.0
        %4137 = vmatprep.subr.mxu0 0.0
        %4138 = vmatpush2.msra.mxu0 0.0
        %4139 = vmatprep.subr.mxu0 0.0
        %4140 = vmatpush2.msra.mxu0 0.0
        %4141 = vmatprep.subr.mxu0 0.0
        %4142 = vmatpush2.msra.mxu0 0.0
        %4143 = vmatprep.subr.mxu0 0.0
        %4144 = vmatpush2.msra.mxu0 0.0
        %4145 = vmatprep.subr.mxu0 0.0
        %4146 = vmatpush2.msra.mxu0 0.0
        %4147 = vmatprep.subr.mxu0 0.0
        %4148 = vmatpush2.msra.mxu0 0.0
        %4149 = vmatprep.mubr.f32.mxu0 0.0
        %4150 = vmatmul.mubr.f32.gmra.mxu0 %v4012
        %v4151 = vpop.f32.mrf.mxu0
        %v4152 = vadd.f32 0.0, %v4151
        %v4153 = vpop.f32.mrf.mxu0
        %v4154 = vadd.f32 0.0, %v4153
        %4155 = vdwg.mxu0
        %v4160 = vcombine.low %v4081, %v4083
        %v4161 = vcombine.high %v4081, %v4083
        %v4162 = vcombine.low %v4152, %v4154
        %v4163 = vcombine.high %v4152, %v4154
        %v4165 = vunpack.c.l.s4 1966171168
        %v4166 = vunpack.c.0.s8 %v4165
        %v4167 = vlaneseq
        %v4168 = vshrl.u32 %v4167, 7
        %v4169 = vsub.s32 %v4166, %v4168
        %v4170 = vrot.slane %v4160, %v4169
        %v4172 = vunpack.c.l.s4 1966171168
        %v4173 = vunpack.c.0.s8 %v4172
        %v4174 = vlaneseq
        %v4175 = vshrl.u32 %v4174, 7
        %v4176 = vsub.s32 %v4173, %v4175
        %v4177 = vrot.slane %v4161, %v4176
        %v4179 = vunpack.c.l.s4 1966171168
        %v4180 = vunpack.c.0.s8 %v4179
        %v4181 = vlaneseq
        %v4182 = vshrl.u32 %v4181, 7
        %v4183 = vsub.s32 %v4180, %v4182
        %v4184 = vrot.slane %v4162, %v4183
        %v4186 = vunpack.c.l.s4 1966171168
        %v4187 = vunpack.c.0.s8 %v4186
        %v4188 = vlaneseq
        %v4189 = vshrl.u32 %v4188, 7
        %v4190 = vsub.s32 %v4187, %v4189
        %v4191 = vrot.slane %v4163, %v4190
        %v4192 = vcombine.low %v4170, %v4184
        %v4193 = vcombine.high %v4170, %v4184
        %v4194 = vcombine.low %v4177, %v4191
        %v4195 = vcombine.high %v4177, %v4191
        %v4197 = vunpack.c.l.s4 1966171168
        %v4198 = vunpack.c.0.s8 %v4197
        %v4199 = vlaneseq
        %v4200 = vshrl.u32 %v4199, 7
        %v4201 = vsub.s32 %v4198, %v4200
        %v4202 = vrot.slane %v4192, %v4201
        %v4204 = vunpack.c.l.s4 1966171168
        %v4205 = vunpack.c.0.s8 %v4204
        %v4206 = vlaneseq
        %v4207 = vshrl.u32 %v4206, 7
        %v4208 = vsub.s32 %v4205, %v4207
        %v4209 = vrot.slane %v4194, %v4208
        %v4211 = vunpack.c.l.s4 1966171168
        %v4212 = vunpack.c.0.s8 %v4211
        %v4213 = vlaneseq
        %v4214 = vshrl.u32 %v4213, 7
        %v4215 = vsub.s32 %v4212, %v4214
        %v4216 = vrot.slane %v4193, %v4215
        %v4218 = vunpack.c.l.s4 1966171168
        %v4219 = vunpack.c.0.s8 %v4218
        %v4220 = vlaneseq
        %v4221 = vshrl.u32 %v4220, 7
        %v4222 = vsub.s32 %v4219, %v4221
        %v4223 = vrot.slane %v4195, %v4222
        %v4224 = vcombine.high %v4202, %v4202
        %v4225 = vcombine.high %v4209, %v4209
        %v4226 = vcombine.high %v4216, %v4216
        %v4227 = vcombine.high %v4223, %v4223
        %v4236 = vadd.f32 %v3877, %v4202
        %v4237 = vadd.f32 %v3879, %v4216
        %v4238 = vadd.f32 %v3881, %v4224
        %v4239 = vadd.f32 %v3883, %v4226
        %v4240 = vadd.f32 %v3885, %v4209
        %v4241 = vadd.f32 %v3887, %v4223
        %v4242 = vadd.f32 %v3889, %v4225
        %v4243 = vadd.f32 %v3891, %v4227
        %v4244 = vxor.u32 %v4236, 2147483648
        %v4245 = vxor.u32 %v4237, 2147483648
        %v4246 = vxor.u32 %v4238, 2147483648
        %v4247 = vxor.u32 %v4239, 2147483648
        %v4248 = vxor.u32 %v4240, 2147483648
        %v4249 = vxor.u32 %v4241, 2147483648
        %v4250 = vxor.u32 %v4242, 2147483648
        %v4251 = vxor.u32 %v4243, 2147483648
        %v4252 = vmul.f32 %v4244, 1.442695
        %v4253 = vpow.pop %v4252
        %v4254 = vmul.f32 %v4245, 1.442695
        %v4255 = vpow.pop %v4254
        %v4256 = vmul.f32 %v4246, 1.442695
        %v4257 = vpow.pop %v4256
        %v4258 = vmul.f32 %v4247, 1.442695
        %v4259 = vpow.pop %v4258
        %v4260 = vmul.f32 %v4248, 1.442695
        %v4261 = vpow.pop %v4260
        %v4262 = vmul.f32 %v4249, 1.442695
        %v4263 = vpow.pop %v4262
        %v4264 = vmul.f32 %v4250, 1.442695
        %v4265 = vpow.pop %v4264
        %v4266 = vmul.f32 %v4251, 1.442695
        %v4267 = vpow.pop %v4266
        %v4268 = vadd.f32 %v4253, 1.0
        %v4269 = vadd.f32 %v4255, 1.0
        %v4270 = vadd.f32 %v4257, 1.0
        %v4271 = vadd.f32 %v4259, 1.0
        %v4272 = vadd.f32 %v4261, 1.0
        %v4273 = vadd.f32 %v4263, 1.0
        %v4274 = vadd.f32 %v4265, 1.0
        %v4275 = vadd.f32 %v4267, 1.0
        %v4276 = vrcp.pop %v4268
        %v4277 = vmul.f32 1.0, %v4276
        %v4278 = vrcp.pop %v4269
        %v4279 = vmul.f32 1.0, %v4278
        %v4280 = vrcp.pop %v4270
        %v4281 = vmul.f32 1.0, %v4280
        %v4282 = vrcp.pop %v4271
        %v4283 = vmul.f32 1.0, %v4282
        %v4284 = vrcp.pop %v4272
        %v4285 = vmul.f32 1.0, %v4284
        %v4286 = vrcp.pop %v4273
        %v4287 = vmul.f32 1.0, %v4286
        %v4288 = vrcp.pop %v4274
        %v4289 = vmul.f32 1.0, %v4288
        %v4290 = vrcp.pop %v4275
        %v4291 = vmul.f32 1.0, %v4290
        %v4300 = vrot.slane %v4236, 1
        %v4301 = vrot.slane %v4237, 1
        %v4302 = vrot.slane %v4238, 1
        %v4303 = vrot.slane %v4239, 1
        %v4304 = vrot.slane %v4240, 1
        %v4305 = vrot.slane %v4241, 1
        %v4306 = vrot.slane %v4242, 1
        %v4307 = vrot.slane %v4243, 1
        %v4316 = vxor.u32 %v4300, 2147483648
        %v4317 = vxor.u32 %v4301, 2147483648
        %v4318 = vxor.u32 %v4302, 2147483648
        %v4319 = vxor.u32 %v4303, 2147483648
        %v4320 = vxor.u32 %v4304, 2147483648
        %v4321 = vxor.u32 %v4305, 2147483648
        %v4322 = vxor.u32 %v4306, 2147483648
        %v4323 = vxor.u32 %v4307, 2147483648
        %v4324 = vmul.f32 %v4316, 1.442695
        %v4325 = vpow.pop %v4324
        %v4326 = vmul.f32 %v4317, 1.442695
        %v4327 = vpow.pop %v4326
        %v4328 = vmul.f32 %v4318, 1.442695
        %v4329 = vpow.pop %v4328
        %v4330 = vmul.f32 %v4319, 1.442695
        %v4331 = vpow.pop %v4330
        %v4332 = vmul.f32 %v4320, 1.442695
        %v4333 = vpow.pop %v4332
        %v4334 = vmul.f32 %v4321, 1.442695
        %v4335 = vpow.pop %v4334
        %v4336 = vmul.f32 %v4322, 1.442695
        %v4337 = vpow.pop %v4336
        %v4338 = vmul.f32 %v4323, 1.442695
        %v4339 = vpow.pop %v4338
        %v4340 = vadd.f32 %v4325, 1.0
        %v4341 = vadd.f32 %v4327, 1.0
        %v4342 = vadd.f32 %v4329, 1.0
        %v4343 = vadd.f32 %v4331, 1.0
        %v4344 = vadd.f32 %v4333, 1.0
        %v4345 = vadd.f32 %v4335, 1.0
        %v4346 = vadd.f32 %v4337, 1.0
        %v4347 = vadd.f32 %v4339, 1.0
        %v4348 = vrcp.pop %v4340
        %v4349 = vmul.f32 1.0, %v4348
        %v4350 = vrcp.pop %v4341
        %v4351 = vmul.f32 1.0, %v4350
        %v4352 = vrcp.pop %v4342
        %v4353 = vmul.f32 1.0, %v4352
        %v4354 = vrcp.pop %v4343
        %v4355 = vmul.f32 1.0, %v4354
        %v4356 = vrcp.pop %v4344
        %v4357 = vmul.f32 1.0, %v4356
        %v4358 = vrcp.pop %v4345
        %v4359 = vmul.f32 1.0, %v4358
        %v4360 = vrcp.pop %v4346
        %v4361 = vmul.f32 1.0, %v4360
        %v4362 = vrcp.pop %v4347
        %v4363 = vmul.f32 1.0, %v4362
        %v4364 = vrot.slane %v4236, 2
        %v4365 = vrot.slane %v4237, 2
        %v4366 = vrot.slane %v4238, 2
        %v4367 = vrot.slane %v4239, 2
        %v4368 = vrot.slane %v4240, 2
        %v4369 = vrot.slane %v4241, 2
        %v4370 = vrot.slane %v4242, 2
        %v4371 = vrot.slane %v4243, 2
        %v4380 = vtanh.pop %v4364
        %v4381 = vtanh.pop %v4365
        %v4382 = vtanh.pop %v4366
        %v4383 = vtanh.pop %v4367
        %v4384 = vtanh.pop %v4368
        %v4385 = vtanh.pop %v4369
        %v4386 = vtanh.pop %v4370
        %v4387 = vtanh.pop %v4371
        %v4388 = vrot.slane %v4236, 3
        %v4389 = vrot.slane %v4237, 3
        %v4390 = vrot.slane %v4238, 3
        %v4391 = vrot.slane %v4239, 3
        %v4392 = vrot.slane %v4240, 3
        %v4393 = vrot.slane %v4241, 3
        %v4394 = vrot.slane %v4242, 3
        %v4395 = vrot.slane %v4243, 3
        %v4404 = vxor.u32 %v4388, 2147483648
        %v4405 = vxor.u32 %v4389, 2147483648
        %v4406 = vxor.u32 %v4390, 2147483648
        %v4407 = vxor.u32 %v4391, 2147483648
        %v4408 = vxor.u32 %v4392, 2147483648
        %v4409 = vxor.u32 %v4393, 2147483648
        %v4410 = vxor.u32 %v4394, 2147483648
        %v4411 = vxor.u32 %v4395, 2147483648
        %v4412 = vmul.f32 %v4404, 1.442695
        %v4413 = vpow.pop %v4412
        %v4414 = vmul.f32 %v4405, 1.442695
        %v4415 = vpow.pop %v4414
        %v4416 = vmul.f32 %v4406, 1.442695
        %v4417 = vpow.pop %v4416
        %v4418 = vmul.f32 %v4407, 1.442695
        %v4419 = vpow.pop %v4418
        %v4420 = vmul.f32 %v4408, 1.442695
        %v4421 = vpow.pop %v4420
        %v4422 = vmul.f32 %v4409, 1.442695
        %v4423 = vpow.pop %v4422
        %v4424 = vmul.f32 %v4410, 1.442695
        %v4425 = vpow.pop %v4424
        %v4426 = vmul.f32 %v4411, 1.442695
        %v4427 = vpow.pop %v4426
        %v4428 = vadd.f32 %v4413, 1.0
        %v4429 = vadd.f32 %v4415, 1.0
        %v4430 = vadd.f32 %v4417, 1.0
        %v4431 = vadd.f32 %v4419, 1.0
        %v4432 = vadd.f32 %v4421, 1.0
        %v4433 = vadd.f32 %v4423, 1.0
        %v4434 = vadd.f32 %v4425, 1.0
        %v4435 = vadd.f32 %v4427, 1.0
        %v4436 = vrcp.pop %v4428
        %v4437 = vmul.f32 1.0, %v4436
        %v4438 = vrcp.pop %v4429
        %v4439 = vmul.f32 1.0, %v4438
        %v4440 = vrcp.pop %v4430
        %v4441 = vmul.f32 1.0, %v4440
        %v4442 = vrcp.pop %v4431
        %v4443 = vmul.f32 1.0, %v4442
        %v4444 = vrcp.pop %v4432
        %v4445 = vmul.f32 1.0, %v4444
        %v4446 = vrcp.pop %v4433
        %v4447 = vmul.f32 1.0, %v4446
        %v4448 = vrcp.pop %v4434
        %v4449 = vmul.f32 1.0, %v4448
        %v4450 = vrcp.pop %v4435
        %v4451 = vmul.f32 1.0, %v4450
        %v4452 = vmul.f32 %v4349, %v3844
        %v4453 = vmul.f32 %v4351, %v3845
        %v4454 = vmul.f32 %v4353, %v3846
        %v4455 = vmul.f32 %v4355, %v3847
        %v4456 = vmul.f32 %v4357, %v3848
        %v4457 = vmul.f32 %v4359, %v3849
        %v4458 = vmul.f32 %v4361, %v3850
        %v4459 = vmul.f32 %v4363, %v3851
        %v4460 = vmul.f32 %v4277, %v4380
        %v4461 = vmul.f32 %v4279, %v4381
        %v4462 = vmul.f32 %v4281, %v4382
        %v4463 = vmul.f32 %v4283, %v4383
        %v4464 = vmul.f32 %v4285, %v4384
        %v4465 = vmul.f32 %v4287, %v4385
        %v4466 = vmul.f32 %v4289, %v4386
        %v4467 = vmul.f32 %v4291, %v4387
        %v4468 = vadd.f32 %v4452, %v4460
        %v4469 = vadd.f32 %v4453, %v4461
        %v4470 = vadd.f32 %v4454, %v4462
        %v4471 = vadd.f32 %v4455, %v4463
        %v4472 = vadd.f32 %v4456, %v4464
        %v4473 = vadd.f32 %v4457, %v4465
        %v4474 = vadd.f32 %v4458, %v4466
        %v4475 = vadd.f32 %v4459, %v4467
        %v4476 = vtanh.pop %v4468
        %v4477 = vtanh.pop %v4469
        %v4478 = vtanh.pop %v4470
        %v4479 = vtanh.pop %v4471
        %v4480 = vtanh.pop %v4472
        %v4481 = vtanh.pop %v4473
        %v4482 = vtanh.pop %v4474
        %v4483 = vtanh.pop %v4475
        %v4484 = vmul.f32 %v4437, %v4476
        %v4485 = vmul.f32 %v4439, %v4477
        %v4486 = vmul.f32 %v4441, %v4478
        %v4487 = vmul.f32 %v4443, %v4479
        %v4488 = vmul.f32 %v4445, %v4480
        %v4489 = vmul.f32 %v4447, %v4481
        %v4490 = vmul.f32 %v4449, %v4482
        %v4491 = vmul.f32 %v4451, %v4483
        %4492 = vst [vmem:[%s411 + $0x5] sm:$0x1] %v4484
        %4493 = vst [vmem:[%s411 + $0xd] sm:$0x1] %v4485
        %4494 = vst [vmem:[%s411 + $0x15] sm:$0x1] %v4486
        %4495 = vst [vmem:[%s411 + $0x1d] sm:$0x1] %v4487
        %4496 = vst [vmem:[%s411 + $0x25] sm:$0x1] %v4488
        %4497 = vst [vmem:[%s411 + $0x2d] sm:$0x1] %v4489
        %4498 = vst [vmem:[%s411 + $0x35] sm:$0x1] %v4490
        %4499 = vst [vmem:[%s411 + $0x3d] sm:$0x1] %v4491
        %s4500 = scalar_lea.vmem [#allocation2], 6
        %v4501 = vld [vmem:[%s4500] ss:$8 sm:$0xf]
        %s4502 = scalar_lea.vmem [#allocation2], 38
        %v4503 = vld [vmem:[%s4502] ss:$8 sm:$0xf]
        %s4504 = scalar_lea.vmem [#allocation2], 70
        %v4505 = vld [vmem:[%s4504] ss:$8 sm:$0xf]
        %s4506 = scalar_lea.vmem [#allocation2], 102
        %v4507 = vld [vmem:[%s4506] ss:$8 sm:$0xf]
        %s4508 = scalar_lea.vmem [#allocation2], 134
        %v4509 = vld [vmem:[%s4508] ss:$8 sm:$0xf]
        %s4510 = scalar_lea.vmem [#allocation2], 166
        %v4511 = vld [vmem:[%s4510] ss:$8 sm:$0xf]
        %s4512 = scalar_lea.vmem [#allocation2], 198
        %v4513 = vld [vmem:[%s4512] ss:$8 sm:$0xf]
        %s4514 = scalar_lea.vmem [#allocation2], 230
        %v4515 = vld [vmem:[%s4514] ss:$8 sm:$0xf]
        %v4516 = vld [vmem:[#allocation11] sm:$0xff]
        %v4517 = vld [vmem:[#allocation11 + $0x8] sm:$0xff]
        %v4518 = vld [vmem:[#allocation11 + $0x10] sm:$0xff]
        %v4519 = vld [vmem:[#allocation11 + $0x18] sm:$0xff]
        %v4520 = vld [vmem:[#allocation11 + $0x20] sm:$0xff]
        %v4521 = vld [vmem:[#allocation11 + $0x28] sm:$0xff]
        %v4522 = vld [vmem:[#allocation11 + $0x30] sm:$0xff]
        %v4523 = vld [vmem:[#allocation11 + $0x38] sm:$0xff]
        %v4524 = vld [vmem:[#allocation11 + $0x40] sm:$0xff]
        %v4525 = vld [vmem:[#allocation11 + $0x48] sm:$0xff]
        %v4526 = vld [vmem:[#allocation11 + $0x50] sm:$0xff]
        %v4527 = vld [vmem:[#allocation11 + $0x58] sm:$0xff]
        %v4528 = vld [vmem:[#allocation11 + $0x60] sm:$0xff]
        %v4529 = vld [vmem:[#allocation11 + $0x68] sm:$0xff]
        %v4530 = vld [vmem:[#allocation11 + $0x70] sm:$0xff]
        %v4531 = vld [vmem:[#allocation11 + $0x78] sm:$0xff]
        %v4532 = vld [vmem:[#allocation11 + $0x80] sm:$0xff]
        %v4533 = vld [vmem:[#allocation11 + $0x88] sm:$0xff]
        %v4534 = vld [vmem:[#allocation11 + $0x90] sm:$0xff]
        %v4535 = vld [vmem:[#allocation11 + $0x98] sm:$0xff]
        %v4536 = vld [vmem:[#allocation11 + $0xa0] sm:$0xff]
        %v4537 = vld [vmem:[#allocation11 + $0xa8] sm:$0xff]
        %v4538 = vld [vmem:[#allocation11 + $0xb0] sm:$0xff]
        %v4539 = vld [vmem:[#allocation11 + $0xb8] sm:$0xff]
        %v4540 = vld [vmem:[#allocation11 + $0xc0] sm:$0xff]
        %v4541 = vld [vmem:[#allocation11 + $0xc8] sm:$0xff]
        %v4542 = vld [vmem:[#allocation11 + $0xd0] sm:$0xff]
        %v4543 = vld [vmem:[#allocation11 + $0xd8] sm:$0xff]
        %v4544 = vld [vmem:[#allocation11 + $0xe0] sm:$0xff]
        %v4545 = vld [vmem:[#allocation11 + $0xe8] sm:$0xff]
        %v4546 = vld [vmem:[#allocation11 + $0xf0] sm:$0xff]
        %v4547 = vld [vmem:[#allocation11 + $0xf8] sm:$0xff]
        %v4548 = vld [vmem:[#allocation11 + $0x100] sm:$0xff]
        %v4549 = vld [vmem:[#allocation11 + $0x108] sm:$0xff]
        %v4550 = vld [vmem:[#allocation11 + $0x110] sm:$0xff]
        %v4551 = vld [vmem:[#allocation11 + $0x118] sm:$0xff]
        %v4552 = vld [vmem:[#allocation11 + $0x120] sm:$0xff]
        %v4553 = vld [vmem:[#allocation11 + $0x128] sm:$0xff]
        %v4554 = vld [vmem:[#allocation11 + $0x130] sm:$0xff]
        %v4555 = vld [vmem:[#allocation11 + $0x138] sm:$0xff]
        %v4556 = vld [vmem:[#allocation11 + $0x140] sm:$0xff]
        %v4557 = vld [vmem:[#allocation11 + $0x148] sm:$0xff]
        %v4558 = vld [vmem:[#allocation11 + $0x150] sm:$0xff]
        %v4559 = vld [vmem:[#allocation11 + $0x158] sm:$0xff]
        %v4560 = vld [vmem:[#allocation11 + $0x160] sm:$0xff]
        %v4561 = vld [vmem:[#allocation11 + $0x168] sm:$0xff]
        %v4562 = vld [vmem:[#allocation11 + $0x170] sm:$0xff]
        %v4563 = vld [vmem:[#allocation11 + $0x178] sm:$0xff]
        %v4564 = vld [vmem:[#allocation11 + $0x180] sm:$0xff]
        %v4565 = vld [vmem:[#allocation11 + $0x188] sm:$0xff]
        %v4566 = vld [vmem:[#allocation11 + $0x190] sm:$0xff]
        %v4567 = vld [vmem:[#allocation11 + $0x198] sm:$0xff]
        %v4568 = vld [vmem:[#allocation11 + $0x1a0] sm:$0xff]
        %v4569 = vld [vmem:[#allocation11 + $0x1a8] sm:$0xff]
        %v4570 = vld [vmem:[#allocation11 + $0x1b0] sm:$0xff]
        %v4571 = vld [vmem:[#allocation11 + $0x1b8] sm:$0xff]
        %v4572 = vld [vmem:[#allocation11 + $0x1c0] sm:$0xff]
        %v4573 = vld [vmem:[#allocation11 + $0x1c8] sm:$0xff]
        %v4574 = vld [vmem:[#allocation11 + $0x1d0] sm:$0xff]
        %v4575 = vld [vmem:[#allocation11 + $0x1d8] sm:$0xff]
        %v4576 = vld [vmem:[#allocation11 + $0x1e0] sm:$0xff]
        %v4577 = vld [vmem:[#allocation11 + $0x1e8] sm:$0xff]
        %v4578 = vld [vmem:[#allocation11 + $0x1f0] sm:$0xff]
        %v4579 = vld [vmem:[#allocation11 + $0x1f8] sm:$0xff]
        %v4588 = vcombine.low %v4484, %v4485
        %v4589 = vcombine.low %v4486, %v4487
        %v4590 = vcombine.low %v4488, %v4489
        %v4591 = vcombine.low %v4490, %v4491
        %v4593 = vunpack.c.l.s4 1966171168
        %v4594 = vunpack.c.0.s8 %v4593
        %v4595 = vlaneseq
        %v4596 = vshrl.u32 %v4595, 7
        %v4597 = vsub.s32 %v4594, %v4596
        %v4598 = vrot.slane %v4588, %v4597
        %v4600 = vunpack.c.l.s4 1966171168
        %v4601 = vunpack.c.0.s8 %v4600
        %v4602 = vlaneseq
        %v4603 = vshrl.u32 %v4602, 7
        %v4604 = vsub.s32 %v4601, %v4603
        %v4605 = vrot.slane %v4589, %v4604
        %v4607 = vunpack.c.l.s4 1966171168
        %v4608 = vunpack.c.0.s8 %v4607
        %v4609 = vlaneseq
        %v4610 = vshrl.u32 %v4609, 7
        %v4611 = vsub.s32 %v4608, %v4610
        %v4612 = vrot.slane %v4590, %v4611
        %v4614 = vunpack.c.l.s4 1966171168
        %v4615 = vunpack.c.0.s8 %v4614
        %v4616 = vlaneseq
        %v4617 = vshrl.u32 %v4616, 7
        %v4618 = vsub.s32 %v4615, %v4617
        %v4619 = vrot.slane %v4591, %v4618
        %v4620 = vcombine.low %v4598, %v4605
        %v4621 = vcombine.low %v4612, %v4619
        %v4623 = vunpack.c.l.s4 1966171168
        %v4624 = vunpack.c.0.s8 %v4623
        %v4625 = vlaneseq
        %v4626 = vshrl.u32 %v4625, 7
        %v4627 = vsub.s32 %v4624, %v4626
        %v4628 = vrot.slane %v4620, %v4627
        %v4630 = vunpack.c.l.s4 1966171168
        %v4631 = vunpack.c.0.s8 %v4630
        %v4632 = vlaneseq
        %v4633 = vshrl.u32 %v4632, 7
        %v4634 = vsub.s32 %v4631, %v4633
        %v4635 = vrot.slane %v4621, %v4634
        %v4636 = vcombine.low %v4628, %v4635
        %4638 = vmatprep.subr.mxu0 %v4577
        %4639 = vmatpush1.msra.mxu0 %v4576
        %4640 = vmatprep.subr.mxu0 %v4573
        %4641 = vmatpush1.msra.mxu0 %v4572
        %4642 = vmatprep.subr.mxu0 %v4569
        %4643 = vmatpush1.msra.mxu0 %v4568
        %4644 = vmatprep.subr.mxu0 %v4565
        %4645 = vmatpush1.msra.mxu0 %v4564
        %4646 = vmatprep.subr.mxu0 %v4561
        %4647 = vmatpush1.msra.mxu0 %v4560
        %4648 = vmatprep.subr.mxu0 %v4557
        %4649 = vmatpush1.msra.mxu0 %v4556
        %4650 = vmatprep.subr.mxu0 %v4553
        %4651 = vmatpush1.msra.mxu0 %v4552
        %4652 = vmatprep.subr.mxu0 %v4549
        %4653 = vmatpush1.msra.mxu0 %v4548
        %4654 = vmatprep.subr.mxu0 %v4545
        %4655 = vmatpush1.msra.mxu0 %v4544
        %4656 = vmatprep.subr.mxu0 %v4541
        %4657 = vmatpush1.msra.mxu0 %v4540
        %4658 = vmatprep.subr.mxu0 %v4537
        %4659 = vmatpush1.msra.mxu0 %v4536
        %4660 = vmatprep.subr.mxu0 %v4533
        %4661 = vmatpush1.msra.mxu0 %v4532
        %4662 = vmatprep.subr.mxu0 %v4529
        %4663 = vmatpush1.msra.mxu0 %v4528
        %4664 = vmatprep.subr.mxu0 %v4525
        %4665 = vmatpush1.msra.mxu0 %v4524
        %4666 = vmatprep.subr.mxu0 %v4521
        %4667 = vmatpush1.msra.mxu0 %v4520
        %4668 = vmatprep.subr.mxu0 %v4517
        %4669 = vmatpush1.msra.mxu0 %v4516
        %4670 = vmatprep.subr.mxu0 0.0
        %4671 = vmatpush2.msra.mxu0 0.0
        %4672 = vmatprep.subr.mxu0 0.0
        %4673 = vmatpush2.msra.mxu0 0.0
        %4674 = vmatprep.subr.mxu0 0.0
        %4675 = vmatpush2.msra.mxu0 0.0
        %4676 = vmatprep.subr.mxu0 0.0
        %4677 = vmatpush2.msra.mxu0 0.0
        %4678 = vmatprep.subr.mxu0 0.0
        %4679 = vmatpush2.msra.mxu0 0.0
        %4680 = vmatprep.subr.mxu0 0.0
        %4681 = vmatpush2.msra.mxu0 0.0
        %4682 = vmatprep.subr.mxu0 0.0
        %4683 = vmatpush2.msra.mxu0 0.0
        %4684 = vmatprep.subr.mxu0 0.0
        %4685 = vmatpush2.msra.mxu0 0.0
        %4686 = vmatprep.subr.mxu0 0.0
        %4687 = vmatpush2.msra.mxu0 0.0
        %4688 = vmatprep.subr.mxu0 0.0
        %4689 = vmatpush2.msra.mxu0 0.0
        %4690 = vmatprep.subr.mxu0 0.0
        %4691 = vmatpush2.msra.mxu0 0.0
        %4692 = vmatprep.subr.mxu0 0.0
        %4693 = vmatpush2.msra.mxu0 0.0
        %4694 = vmatprep.subr.mxu0 0.0
        %4695 = vmatpush2.msra.mxu0 0.0
        %4696 = vmatprep.subr.mxu0 0.0
        %4697 = vmatpush2.msra.mxu0 0.0
        %4698 = vmatprep.subr.mxu0 0.0
        %4699 = vmatpush2.msra.mxu0 0.0
        %4700 = vmatprep.subr.mxu0 0.0
        %4701 = vmatpush2.msra.mxu0 0.0
        %4702 = vmatprep.mubr.f32.mxu0 0.0
        %4703 = vmatmul.mubr.f32.gmra.mxu0 %v4636
        %v4704 = vpop.f32.mrf.mxu0
        %v4705 = vadd.f32 0.0, %v4704
        %v4706 = vpop.f32.mrf.mxu0
        %v4707 = vadd.f32 0.0, %v4706
        %4708 = vdwg.mxu0
        %4709 = vmatprep.subr.mxu0 %v4579
        %4710 = vmatpush1.msra.mxu0 %v4578
        %4711 = vmatprep.subr.mxu0 %v4575
        %4712 = vmatpush1.msra.mxu0 %v4574
        %4713 = vmatprep.subr.mxu0 %v4571
        %4714 = vmatpush1.msra.mxu0 %v4570
        %4715 = vmatprep.subr.mxu0 %v4567
        %4716 = vmatpush1.msra.mxu0 %v4566
        %4717 = vmatprep.subr.mxu0 %v4563
        %4718 = vmatpush1.msra.mxu0 %v4562
        %4719 = vmatprep.subr.mxu0 %v4559
        %4720 = vmatpush1.msra.mxu0 %v4558
        %4721 = vmatprep.subr.mxu0 %v4555
        %4722 = vmatpush1.msra.mxu0 %v4554
        %4723 = vmatprep.subr.mxu0 %v4551
        %4724 = vmatpush1.msra.mxu0 %v4550
        %4725 = vmatprep.subr.mxu0 %v4547
        %4726 = vmatpush1.msra.mxu0 %v4546
        %4727 = vmatprep.subr.mxu0 %v4543
        %4728 = vmatpush1.msra.mxu0 %v4542
        %4729 = vmatprep.subr.mxu0 %v4539
        %4730 = vmatpush1.msra.mxu0 %v4538
        %4731 = vmatprep.subr.mxu0 %v4535
        %4732 = vmatpush1.msra.mxu0 %v4534
        %4733 = vmatprep.subr.mxu0 %v4531
        %4734 = vmatpush1.msra.mxu0 %v4530
        %4735 = vmatprep.subr.mxu0 %v4527
        %4736 = vmatpush1.msra.mxu0 %v4526
        %4737 = vmatprep.subr.mxu0 %v4523
        %4738 = vmatpush1.msra.mxu0 %v4522
        %4739 = vmatprep.subr.mxu0 %v4519
        %4740 = vmatpush1.msra.mxu0 %v4518
        %4741 = vmatprep.subr.mxu0 0.0
        %4742 = vmatpush2.msra.mxu0 0.0
        %4743 = vmatprep.subr.mxu0 0.0
        %4744 = vmatpush2.msra.mxu0 0.0
        %4745 = vmatprep.subr.mxu0 0.0
        %4746 = vmatpush2.msra.mxu0 0.0
        %4747 = vmatprep.subr.mxu0 0.0
        %4748 = vmatpush2.msra.mxu0 0.0
        %4749 = vmatprep.subr.mxu0 0.0
        %4750 = vmatpush2.msra.mxu0 0.0
        %4751 = vmatprep.subr.mxu0 0.0
        %4752 = vmatpush2.msra.mxu0 0.0
        %4753 = vmatprep.subr.mxu0 0.0
        %4754 = vmatpush2.msra.mxu0 0.0
        %4755 = vmatprep.subr.mxu0 0.0
        %4756 = vmatpush2.msra.mxu0 0.0
        %4757 = vmatprep.subr.mxu0 0.0
        %4758 = vmatpush2.msra.mxu0 0.0
        %4759 = vmatprep.subr.mxu0 0.0
        %4760 = vmatpush2.msra.mxu0 0.0
        %4761 = vmatprep.subr.mxu0 0.0
        %4762 = vmatpush2.msra.mxu0 0.0
        %4763 = vmatprep.subr.mxu0 0.0
        %4764 = vmatpush2.msra.mxu0 0.0
        %4765 = vmatprep.subr.mxu0 0.0
        %4766 = vmatpush2.msra.mxu0 0.0
        %4767 = vmatprep.subr.mxu0 0.0
        %4768 = vmatpush2.msra.mxu0 0.0
        %4769 = vmatprep.subr.mxu0 0.0
        %4770 = vmatpush2.msra.mxu0 0.0
        %4771 = vmatprep.subr.mxu0 0.0
        %4772 = vmatpush2.msra.mxu0 0.0
        %4773 = vmatprep.mubr.f32.mxu0 0.0
        %4774 = vmatmul.mubr.f32.gmra.mxu0 %v4636
        %v4775 = vpop.f32.mrf.mxu0
        %v4776 = vadd.f32 0.0, %v4775
        %v4777 = vpop.f32.mrf.mxu0
        %v4778 = vadd.f32 0.0, %v4777
        %4779 = vdwg.mxu0
        %v4784 = vcombine.low %v4705, %v4707
        %v4785 = vcombine.high %v4705, %v4707
        %v4786 = vcombine.low %v4776, %v4778
        %v4787 = vcombine.high %v4776, %v4778
        %v4789 = vunpack.c.l.s4 1966171168
        %v4790 = vunpack.c.0.s8 %v4789
        %v4791 = vlaneseq
        %v4792 = vshrl.u32 %v4791, 7
        %v4793 = vsub.s32 %v4790, %v4792
        %v4794 = vrot.slane %v4784, %v4793
        %v4796 = vunpack.c.l.s4 1966171168
        %v4797 = vunpack.c.0.s8 %v4796
        %v4798 = vlaneseq
        %v4799 = vshrl.u32 %v4798, 7
        %v4800 = vsub.s32 %v4797, %v4799
        %v4801 = vrot.slane %v4785, %v4800
        %v4803 = vunpack.c.l.s4 1966171168
        %v4804 = vunpack.c.0.s8 %v4803
        %v4805 = vlaneseq
        %v4806 = vshrl.u32 %v4805, 7
        %v4807 = vsub.s32 %v4804, %v4806
        %v4808 = vrot.slane %v4786, %v4807
        %v4810 = vunpack.c.l.s4 1966171168
        %v4811 = vunpack.c.0.s8 %v4810
        %v4812 = vlaneseq
        %v4813 = vshrl.u32 %v4812, 7
        %v4814 = vsub.s32 %v4811, %v4813
        %v4815 = vrot.slane %v4787, %v4814
        %v4816 = vcombine.low %v4794, %v4808
        %v4817 = vcombine.high %v4794, %v4808
        %v4818 = vcombine.low %v4801, %v4815
        %v4819 = vcombine.high %v4801, %v4815
        %v4821 = vunpack.c.l.s4 1966171168
        %v4822 = vunpack.c.0.s8 %v4821
        %v4823 = vlaneseq
        %v4824 = vshrl.u32 %v4823, 7
        %v4825 = vsub.s32 %v4822, %v4824
        %v4826 = vrot.slane %v4816, %v4825
        %v4828 = vunpack.c.l.s4 1966171168
        %v4829 = vunpack.c.0.s8 %v4828
        %v4830 = vlaneseq
        %v4831 = vshrl.u32 %v4830, 7
        %v4832 = vsub.s32 %v4829, %v4831
        %v4833 = vrot.slane %v4818, %v4832
        %v4835 = vunpack.c.l.s4 1966171168
        %v4836 = vunpack.c.0.s8 %v4835
        %v4837 = vlaneseq
        %v4838 = vshrl.u32 %v4837, 7
        %v4839 = vsub.s32 %v4836, %v4838
        %v4840 = vrot.slane %v4817, %v4839
        %v4842 = vunpack.c.l.s4 1966171168
        %v4843 = vunpack.c.0.s8 %v4842
        %v4844 = vlaneseq
        %v4845 = vshrl.u32 %v4844, 7
        %v4846 = vsub.s32 %v4843, %v4845
        %v4847 = vrot.slane %v4819, %v4846
        %v4848 = vcombine.high %v4826, %v4826
        %v4849 = vcombine.high %v4833, %v4833
        %v4850 = vcombine.high %v4840, %v4840
        %v4851 = vcombine.high %v4847, %v4847
        %v4860 = vadd.f32 %v4501, %v4826
        %v4861 = vadd.f32 %v4503, %v4840
        %v4862 = vadd.f32 %v4505, %v4848
        %v4863 = vadd.f32 %v4507, %v4850
        %v4864 = vadd.f32 %v4509, %v4833
        %v4865 = vadd.f32 %v4511, %v4847
        %v4866 = vadd.f32 %v4513, %v4849
        %v4867 = vadd.f32 %v4515, %v4851
        %v4868 = vxor.u32 %v4860, 2147483648
        %v4869 = vxor.u32 %v4861, 2147483648
        %v4870 = vxor.u32 %v4862, 2147483648
        %v4871 = vxor.u32 %v4863, 2147483648
        %v4872 = vxor.u32 %v4864, 2147483648
        %v4873 = vxor.u32 %v4865, 2147483648
        %v4874 = vxor.u32 %v4866, 2147483648
        %v4875 = vxor.u32 %v4867, 2147483648
        %v4876 = vmul.f32 %v4868, 1.442695
        %v4877 = vpow.pop %v4876
        %v4878 = vmul.f32 %v4869, 1.442695
        %v4879 = vpow.pop %v4878
        %v4880 = vmul.f32 %v4870, 1.442695
        %v4881 = vpow.pop %v4880
        %v4882 = vmul.f32 %v4871, 1.442695
        %v4883 = vpow.pop %v4882
        %v4884 = vmul.f32 %v4872, 1.442695
        %v4885 = vpow.pop %v4884
        %v4886 = vmul.f32 %v4873, 1.442695
        %v4887 = vpow.pop %v4886
        %v4888 = vmul.f32 %v4874, 1.442695
        %v4889 = vpow.pop %v4888
        %v4890 = vmul.f32 %v4875, 1.442695
        %v4891 = vpow.pop %v4890
        %v4892 = vadd.f32 %v4877, 1.0
        %v4893 = vadd.f32 %v4879, 1.0
        %v4894 = vadd.f32 %v4881, 1.0
        %v4895 = vadd.f32 %v4883, 1.0
        %v4896 = vadd.f32 %v4885, 1.0
        %v4897 = vadd.f32 %v4887, 1.0
        %v4898 = vadd.f32 %v4889, 1.0
        %v4899 = vadd.f32 %v4891, 1.0
        %v4900 = vrcp.pop %v4892
        %v4901 = vmul.f32 1.0, %v4900
        %v4902 = vrcp.pop %v4893
        %v4903 = vmul.f32 1.0, %v4902
        %v4904 = vrcp.pop %v4894
        %v4905 = vmul.f32 1.0, %v4904
        %v4906 = vrcp.pop %v4895
        %v4907 = vmul.f32 1.0, %v4906
        %v4908 = vrcp.pop %v4896
        %v4909 = vmul.f32 1.0, %v4908
        %v4910 = vrcp.pop %v4897
        %v4911 = vmul.f32 1.0, %v4910
        %v4912 = vrcp.pop %v4898
        %v4913 = vmul.f32 1.0, %v4912
        %v4914 = vrcp.pop %v4899
        %v4915 = vmul.f32 1.0, %v4914
        %v4924 = vrot.slane %v4860, 1
        %v4925 = vrot.slane %v4861, 1
        %v4926 = vrot.slane %v4862, 1
        %v4927 = vrot.slane %v4863, 1
        %v4928 = vrot.slane %v4864, 1
        %v4929 = vrot.slane %v4865, 1
        %v4930 = vrot.slane %v4866, 1
        %v4931 = vrot.slane %v4867, 1
        %v4940 = vxor.u32 %v4924, 2147483648
        %v4941 = vxor.u32 %v4925, 2147483648
        %v4942 = vxor.u32 %v4926, 2147483648
        %v4943 = vxor.u32 %v4927, 2147483648
        %v4944 = vxor.u32 %v4928, 2147483648
        %v4945 = vxor.u32 %v4929, 2147483648
        %v4946 = vxor.u32 %v4930, 2147483648
        %v4947 = vxor.u32 %v4931, 2147483648
        %v4948 = vmul.f32 %v4940, 1.442695
        %v4949 = vpow.pop %v4948
        %v4950 = vmul.f32 %v4941, 1.442695
        %v4951 = vpow.pop %v4950
        %v4952 = vmul.f32 %v4942, 1.442695
        %v4953 = vpow.pop %v4952
        %v4954 = vmul.f32 %v4943, 1.442695
        %v4955 = vpow.pop %v4954
        %v4956 = vmul.f32 %v4944, 1.442695
        %v4957 = vpow.pop %v4956
        %v4958 = vmul.f32 %v4945, 1.442695
        %v4959 = vpow.pop %v4958
        %v4960 = vmul.f32 %v4946, 1.442695
        %v4961 = vpow.pop %v4960
        %v4962 = vmul.f32 %v4947, 1.442695
        %v4963 = vpow.pop %v4962
        %v4964 = vadd.f32 %v4949, 1.0
        %v4965 = vadd.f32 %v4951, 1.0
        %v4966 = vadd.f32 %v4953, 1.0
        %v4967 = vadd.f32 %v4955, 1.0
        %v4968 = vadd.f32 %v4957, 1.0
        %v4969 = vadd.f32 %v4959, 1.0
        %v4970 = vadd.f32 %v4961, 1.0
        %v4971 = vadd.f32 %v4963, 1.0
        %v4972 = vrcp.pop %v4964
        %v4973 = vmul.f32 1.0, %v4972
        %v4974 = vrcp.pop %v4965
        %v4975 = vmul.f32 1.0, %v4974
        %v4976 = vrcp.pop %v4966
        %v4977 = vmul.f32 1.0, %v4976
        %v4978 = vrcp.pop %v4967
        %v4979 = vmul.f32 1.0, %v4978
        %v4980 = vrcp.pop %v4968
        %v4981 = vmul.f32 1.0, %v4980
        %v4982 = vrcp.pop %v4969
        %v4983 = vmul.f32 1.0, %v4982
        %v4984 = vrcp.pop %v4970
        %v4985 = vmul.f32 1.0, %v4984
        %v4986 = vrcp.pop %v4971
        %v4987 = vmul.f32 1.0, %v4986
        %v4988 = vrot.slane %v4860, 2
        %v4989 = vrot.slane %v4861, 2
        %v4990 = vrot.slane %v4862, 2
        %v4991 = vrot.slane %v4863, 2
        %v4992 = vrot.slane %v4864, 2
        %v4993 = vrot.slane %v4865, 2
        %v4994 = vrot.slane %v4866, 2
        %v4995 = vrot.slane %v4867, 2
        %v5004 = vtanh.pop %v4988
        %v5005 = vtanh.pop %v4989
        %v5006 = vtanh.pop %v4990
        %v5007 = vtanh.pop %v4991
        %v5008 = vtanh.pop %v4992
        %v5009 = vtanh.pop %v4993
        %v5010 = vtanh.pop %v4994
        %v5011 = vtanh.pop %v4995
        %v5012 = vrot.slane %v4860, 3
        %v5013 = vrot.slane %v4861, 3
        %v5014 = vrot.slane %v4862, 3
        %v5015 = vrot.slane %v4863, 3
        %v5016 = vrot.slane %v4864, 3
        %v5017 = vrot.slane %v4865, 3
        %v5018 = vrot.slane %v4866, 3
        %v5019 = vrot.slane %v4867, 3
        %v5028 = vxor.u32 %v5012, 2147483648
        %v5029 = vxor.u32 %v5013, 2147483648
        %v5030 = vxor.u32 %v5014, 2147483648
        %v5031 = vxor.u32 %v5015, 2147483648
        %v5032 = vxor.u32 %v5016, 2147483648
        %v5033 = vxor.u32 %v5017, 2147483648
        %v5034 = vxor.u32 %v5018, 2147483648
        %v5035 = vxor.u32 %v5019, 2147483648
        %v5036 = vmul.f32 %v5028, 1.442695
        %v5037 = vpow.pop %v5036
        %v5038 = vmul.f32 %v5029, 1.442695
        %v5039 = vpow.pop %v5038
        %v5040 = vmul.f32 %v5030, 1.442695
        %v5041 = vpow.pop %v5040
        %v5042 = vmul.f32 %v5031, 1.442695
        %v5043 = vpow.pop %v5042
        %v5044 = vmul.f32 %v5032, 1.442695
        %v5045 = vpow.pop %v5044
        %v5046 = vmul.f32 %v5033, 1.442695
        %v5047 = vpow.pop %v5046
        %v5048 = vmul.f32 %v5034, 1.442695
        %v5049 = vpow.pop %v5048
        %v5050 = vmul.f32 %v5035, 1.442695
        %v5051 = vpow.pop %v5050
        %v5052 = vadd.f32 %v5037, 1.0
        %v5053 = vadd.f32 %v5039, 1.0
        %v5054 = vadd.f32 %v5041, 1.0
        %v5055 = vadd.f32 %v5043, 1.0
        %v5056 = vadd.f32 %v5045, 1.0
        %v5057 = vadd.f32 %v5047, 1.0
        %v5058 = vadd.f32 %v5049, 1.0
        %v5059 = vadd.f32 %v5051, 1.0
        %v5060 = vrcp.pop %v5052
        %v5061 = vmul.f32 1.0, %v5060
        %v5062 = vrcp.pop %v5053
        %v5063 = vmul.f32 1.0, %v5062
        %v5064 = vrcp.pop %v5054
        %v5065 = vmul.f32 1.0, %v5064
        %v5066 = vrcp.pop %v5055
        %v5067 = vmul.f32 1.0, %v5066
        %v5068 = vrcp.pop %v5056
        %v5069 = vmul.f32 1.0, %v5068
        %v5070 = vrcp.pop %v5057
        %v5071 = vmul.f32 1.0, %v5070
        %v5072 = vrcp.pop %v5058
        %v5073 = vmul.f32 1.0, %v5072
        %v5074 = vrcp.pop %v5059
        %v5075 = vmul.f32 1.0, %v5074
        %v5076 = vmul.f32 %v4973, %v4468
        %v5077 = vmul.f32 %v4975, %v4469
        %v5078 = vmul.f32 %v4977, %v4470
        %v5079 = vmul.f32 %v4979, %v4471
        %v5080 = vmul.f32 %v4981, %v4472
        %v5081 = vmul.f32 %v4983, %v4473
        %v5082 = vmul.f32 %v4985, %v4474
        %v5083 = vmul.f32 %v4987, %v4475
        %v5084 = vmul.f32 %v4901, %v5004
        %v5085 = vmul.f32 %v4903, %v5005
        %v5086 = vmul.f32 %v4905, %v5006
        %v5087 = vmul.f32 %v4907, %v5007
        %v5088 = vmul.f32 %v4909, %v5008
        %v5089 = vmul.f32 %v4911, %v5009
        %v5090 = vmul.f32 %v4913, %v5010
        %v5091 = vmul.f32 %v4915, %v5011
        %v5092 = vadd.f32 %v5076, %v5084
        %v5093 = vadd.f32 %v5077, %v5085
        %v5094 = vadd.f32 %v5078, %v5086
        %v5095 = vadd.f32 %v5079, %v5087
        %v5096 = vadd.f32 %v5080, %v5088
        %v5097 = vadd.f32 %v5081, %v5089
        %v5098 = vadd.f32 %v5082, %v5090
        %v5099 = vadd.f32 %v5083, %v5091
        %v5100 = vtanh.pop %v5092
        %v5101 = vtanh.pop %v5093
        %v5102 = vtanh.pop %v5094
        %v5103 = vtanh.pop %v5095
        %v5104 = vtanh.pop %v5096
        %v5105 = vtanh.pop %v5097
        %v5106 = vtanh.pop %v5098
        %v5107 = vtanh.pop %v5099
        %v5108 = vmul.f32 %v5061, %v5100
        %v5109 = vmul.f32 %v5063, %v5101
        %v5110 = vmul.f32 %v5065, %v5102
        %v5111 = vmul.f32 %v5067, %v5103
        %v5112 = vmul.f32 %v5069, %v5104
        %v5113 = vmul.f32 %v5071, %v5105
        %v5114 = vmul.f32 %v5073, %v5106
        %v5115 = vmul.f32 %v5075, %v5107
        %5116 = vst [vmem:[%s411 + $0x6] sm:$0x1] %v5108
        %5117 = vst [vmem:[%s411 + $0xe] sm:$0x1] %v5109
        %5118 = vst [vmem:[%s411 + $0x16] sm:$0x1] %v5110
        %5119 = vst [vmem:[%s411 + $0x1e] sm:$0x1] %v5111
        %5120 = vst [vmem:[%s411 + $0x26] sm:$0x1] %v5112
        %5121 = vst [vmem:[%s411 + $0x2e] sm:$0x1] %v5113
        %5122 = vst [vmem:[%s411 + $0x36] sm:$0x1] %v5114
        %5123 = vst [vmem:[%s411 + $0x3e] sm:$0x1] %v5115
        %s5124 = scalar_lea.vmem [#allocation2], 7
        %v5125 = vld [vmem:[%s5124] ss:$8 sm:$0xf]
        %s5126 = scalar_lea.vmem [#allocation2], 39
        %v5127 = vld [vmem:[%s5126] ss:$8 sm:$0xf]
        %s5128 = scalar_lea.vmem [#allocation2], 71
        %v5129 = vld [vmem:[%s5128] ss:$8 sm:$0xf]
        %s5130 = scalar_lea.vmem [#allocation2], 103
        %v5131 = vld [vmem:[%s5130] ss:$8 sm:$0xf]
        %s5132 = scalar_lea.vmem [#allocation2], 135
        %v5133 = vld [vmem:[%s5132] ss:$8 sm:$0xf]
        %s5134 = scalar_lea.vmem [#allocation2], 167
        %v5135 = vld [vmem:[%s5134] ss:$8 sm:$0xf]
        %s5136 = scalar_lea.vmem [#allocation2], 199
        %v5137 = vld [vmem:[%s5136] ss:$8 sm:$0xf]
        %s5138 = scalar_lea.vmem [#allocation2], 231
        %v5139 = vld [vmem:[%s5138] ss:$8 sm:$0xf]
        %v5140 = vld [vmem:[#allocation11] sm:$0xff]
        %v5141 = vld [vmem:[#allocation11 + $0x8] sm:$0xff]
        %v5142 = vld [vmem:[#allocation11 + $0x10] sm:$0xff]
        %v5143 = vld [vmem:[#allocation11 + $0x18] sm:$0xff]
        %v5144 = vld [vmem:[#allocation11 + $0x20] sm:$0xff]
        %v5145 = vld [vmem:[#allocation11 + $0x28] sm:$0xff]
        %v5146 = vld [vmem:[#allocation11 + $0x30] sm:$0xff]
        %v5147 = vld [vmem:[#allocation11 + $0x38] sm:$0xff]
        %v5148 = vld [vmem:[#allocation11 + $0x40] sm:$0xff]
        %v5149 = vld [vmem:[#allocation11 + $0x48] sm:$0xff]
        %v5150 = vld [vmem:[#allocation11 + $0x50] sm:$0xff]
        %v5151 = vld [vmem:[#allocation11 + $0x58] sm:$0xff]
        %v5152 = vld [vmem:[#allocation11 + $0x60] sm:$0xff]
        %v5153 = vld [vmem:[#allocation11 + $0x68] sm:$0xff]
        %v5154 = vld [vmem:[#allocation11 + $0x70] sm:$0xff]
        %v5155 = vld [vmem:[#allocation11 + $0x78] sm:$0xff]
        %v5156 = vld [vmem:[#allocation11 + $0x80] sm:$0xff]
        %v5157 = vld [vmem:[#allocation11 + $0x88] sm:$0xff]
        %v5158 = vld [vmem:[#allocation11 + $0x90] sm:$0xff]
        %v5159 = vld [vmem:[#allocation11 + $0x98] sm:$0xff]
        %v5160 = vld [vmem:[#allocation11 + $0xa0] sm:$0xff]
        %v5161 = vld [vmem:[#allocation11 + $0xa8] sm:$0xff]
        %v5162 = vld [vmem:[#allocation11 + $0xb0] sm:$0xff]
        %v5163 = vld [vmem:[#allocation11 + $0xb8] sm:$0xff]
        %v5164 = vld [vmem:[#allocation11 + $0xc0] sm:$0xff]
        %v5165 = vld [vmem:[#allocation11 + $0xc8] sm:$0xff]
        %v5166 = vld [vmem:[#allocation11 + $0xd0] sm:$0xff]
        %v5167 = vld [vmem:[#allocation11 + $0xd8] sm:$0xff]
        %v5168 = vld [vmem:[#allocation11 + $0xe0] sm:$0xff]
        %v5169 = vld [vmem:[#allocation11 + $0xe8] sm:$0xff]
        %v5170 = vld [vmem:[#allocation11 + $0xf0] sm:$0xff]
        %v5171 = vld [vmem:[#allocation11 + $0xf8] sm:$0xff]
        %v5172 = vld [vmem:[#allocation11 + $0x100] sm:$0xff]
        %v5173 = vld [vmem:[#allocation11 + $0x108] sm:$0xff]
        %v5174 = vld [vmem:[#allocation11 + $0x110] sm:$0xff]
        %v5175 = vld [vmem:[#allocation11 + $0x118] sm:$0xff]
        %v5176 = vld [vmem:[#allocation11 + $0x120] sm:$0xff]
        %v5177 = vld [vmem:[#allocation11 + $0x128] sm:$0xff]
        %v5178 = vld [vmem:[#allocation11 + $0x130] sm:$0xff]
        %v5179 = vld [vmem:[#allocation11 + $0x138] sm:$0xff]
        %v5180 = vld [vmem:[#allocation11 + $0x140] sm:$0xff]
        %v5181 = vld [vmem:[#allocation11 + $0x148] sm:$0xff]
        %v5182 = vld [vmem:[#allocation11 + $0x150] sm:$0xff]
        %v5183 = vld [vmem:[#allocation11 + $0x158] sm:$0xff]
        %v5184 = vld [vmem:[#allocation11 + $0x160] sm:$0xff]
        %v5185 = vld [vmem:[#allocation11 + $0x168] sm:$0xff]
        %v5186 = vld [vmem:[#allocation11 + $0x170] sm:$0xff]
        %v5187 = vld [vmem:[#allocation11 + $0x178] sm:$0xff]
        %v5188 = vld [vmem:[#allocation11 + $0x180] sm:$0xff]
        %v5189 = vld [vmem:[#allocation11 + $0x188] sm:$0xff]
        %v5190 = vld [vmem:[#allocation11 + $0x190] sm:$0xff]
        %v5191 = vld [vmem:[#allocation11 + $0x198] sm:$0xff]
        %v5192 = vld [vmem:[#allocation11 + $0x1a0] sm:$0xff]
        %v5193 = vld [vmem:[#allocation11 + $0x1a8] sm:$0xff]
        %v5194 = vld [vmem:[#allocation11 + $0x1b0] sm:$0xff]
        %v5195 = vld [vmem:[#allocation11 + $0x1b8] sm:$0xff]
        %v5196 = vld [vmem:[#allocation11 + $0x1c0] sm:$0xff]
        %v5197 = vld [vmem:[#allocation11 + $0x1c8] sm:$0xff]
        %v5198 = vld [vmem:[#allocation11 + $0x1d0] sm:$0xff]
        %v5199 = vld [vmem:[#allocation11 + $0x1d8] sm:$0xff]
        %v5200 = vld [vmem:[#allocation11 + $0x1e0] sm:$0xff]
        %v5201 = vld [vmem:[#allocation11 + $0x1e8] sm:$0xff]
        %v5202 = vld [vmem:[#allocation11 + $0x1f0] sm:$0xff]
        %v5203 = vld [vmem:[#allocation11 + $0x1f8] sm:$0xff]
        %v5212 = vcombine.low %v5108, %v5109
        %v5213 = vcombine.low %v5110, %v5111
        %v5214 = vcombine.low %v5112, %v5113
        %v5215 = vcombine.low %v5114, %v5115
        %v5217 = vunpack.c.l.s4 1966171168
        %v5218 = vunpack.c.0.s8 %v5217
        %v5219 = vlaneseq
        %v5220 = vshrl.u32 %v5219, 7
        %v5221 = vsub.s32 %v5218, %v5220
        %v5222 = vrot.slane %v5212, %v5221
        %v5224 = vunpack.c.l.s4 1966171168
        %v5225 = vunpack.c.0.s8 %v5224
        %v5226 = vlaneseq
        %v5227 = vshrl.u32 %v5226, 7
        %v5228 = vsub.s32 %v5225, %v5227
        %v5229 = vrot.slane %v5213, %v5228
        %v5231 = vunpack.c.l.s4 1966171168
        %v5232 = vunpack.c.0.s8 %v5231
        %v5233 = vlaneseq
        %v5234 = vshrl.u32 %v5233, 7
        %v5235 = vsub.s32 %v5232, %v5234
        %v5236 = vrot.slane %v5214, %v5235
        %v5238 = vunpack.c.l.s4 1966171168
        %v5239 = vunpack.c.0.s8 %v5238
        %v5240 = vlaneseq
        %v5241 = vshrl.u32 %v5240, 7
        %v5242 = vsub.s32 %v5239, %v5241
        %v5243 = vrot.slane %v5215, %v5242
        %v5244 = vcombine.low %v5222, %v5229
        %v5245 = vcombine.low %v5236, %v5243
        %v5247 = vunpack.c.l.s4 1966171168
        %v5248 = vunpack.c.0.s8 %v5247
        %v5249 = vlaneseq
        %v5250 = vshrl.u32 %v5249, 7
        %v5251 = vsub.s32 %v5248, %v5250
        %v5252 = vrot.slane %v5244, %v5251
        %v5254 = vunpack.c.l.s4 1966171168
        %v5255 = vunpack.c.0.s8 %v5254
        %v5256 = vlaneseq
        %v5257 = vshrl.u32 %v5256, 7
        %v5258 = vsub.s32 %v5255, %v5257
        %v5259 = vrot.slane %v5245, %v5258
        %v5260 = vcombine.low %v5252, %v5259
        %5262 = vmatprep.subr.mxu0 %v5201
        %5263 = vmatpush1.msra.mxu0 %v5200
        %5264 = vmatprep.subr.mxu0 %v5197
        %5265 = vmatpush1.msra.mxu0 %v5196
        %5266 = vmatprep.subr.mxu0 %v5193
        %5267 = vmatpush1.msra.mxu0 %v5192
        %5268 = vmatprep.subr.mxu0 %v5189
        %5269 = vmatpush1.msra.mxu0 %v5188
        %5270 = vmatprep.subr.mxu0 %v5185
        %5271 = vmatpush1.msra.mxu0 %v5184
        %5272 = vmatprep.subr.mxu0 %v5181
        %5273 = vmatpush1.msra.mxu0 %v5180
        %5274 = vmatprep.subr.mxu0 %v5177
        %5275 = vmatpush1.msra.mxu0 %v5176
        %5276 = vmatprep.subr.mxu0 %v5173
        %5277 = vmatpush1.msra.mxu0 %v5172
        %5278 = vmatprep.subr.mxu0 %v5169
        %5279 = vmatpush1.msra.mxu0 %v5168
        %5280 = vmatprep.subr.mxu0 %v5165
        %5281 = vmatpush1.msra.mxu0 %v5164
        %5282 = vmatprep.subr.mxu0 %v5161
        %5283 = vmatpush1.msra.mxu0 %v5160
        %5284 = vmatprep.subr.mxu0 %v5157
        %5285 = vmatpush1.msra.mxu0 %v5156
        %5286 = vmatprep.subr.mxu0 %v5153
        %5287 = vmatpush1.msra.mxu0 %v5152
        %5288 = vmatprep.subr.mxu0 %v5149
        %5289 = vmatpush1.msra.mxu0 %v5148
        %5290 = vmatprep.subr.mxu0 %v5145
        %5291 = vmatpush1.msra.mxu0 %v5144
        %5292 = vmatprep.subr.mxu0 %v5141
        %5293 = vmatpush1.msra.mxu0 %v5140
        %5294 = vmatprep.subr.mxu0 0.0
        %5295 = vmatpush2.msra.mxu0 0.0
        %5296 = vmatprep.subr.mxu0 0.0
        %5297 = vmatpush2.msra.mxu0 0.0
        %5298 = vmatprep.subr.mxu0 0.0
        %5299 = vmatpush2.msra.mxu0 0.0
        %5300 = vmatprep.subr.mxu0 0.0
        %5301 = vmatpush2.msra.mxu0 0.0
        %5302 = vmatprep.subr.mxu0 0.0
        %5303 = vmatpush2.msra.mxu0 0.0
        %5304 = vmatprep.subr.mxu0 0.0
        %5305 = vmatpush2.msra.mxu0 0.0
        %5306 = vmatprep.subr.mxu0 0.0
        %5307 = vmatpush2.msra.mxu0 0.0
        %5308 = vmatprep.subr.mxu0 0.0
        %5309 = vmatpush2.msra.mxu0 0.0
        %5310 = vmatprep.subr.mxu0 0.0
        %5311 = vmatpush2.msra.mxu0 0.0
        %5312 = vmatprep.subr.mxu0 0.0
        %5313 = vmatpush2.msra.mxu0 0.0
        %5314 = vmatprep.subr.mxu0 0.0
        %5315 = vmatpush2.msra.mxu0 0.0
        %5316 = vmatprep.subr.mxu0 0.0
        %5317 = vmatpush2.msra.mxu0 0.0
        %5318 = vmatprep.subr.mxu0 0.0
        %5319 = vmatpush2.msra.mxu0 0.0
        %5320 = vmatprep.subr.mxu0 0.0
        %5321 = vmatpush2.msra.mxu0 0.0
        %5322 = vmatprep.subr.mxu0 0.0
        %5323 = vmatpush2.msra.mxu0 0.0
        %5324 = vmatprep.subr.mxu0 0.0
        %5325 = vmatpush2.msra.mxu0 0.0
        %5326 = vmatprep.mubr.f32.mxu0 0.0
        %5327 = vmatmul.mubr.f32.gmra.mxu0 %v5260
        %v5328 = vpop.f32.mrf.mxu0
        %v5329 = vadd.f32 0.0, %v5328
        %v5330 = vpop.f32.mrf.mxu0
        %v5331 = vadd.f32 0.0, %v5330
        %5332 = vdwg.mxu0
        %5333 = vmatprep.subr.mxu0 %v5203
        %5334 = vmatpush1.msra.mxu0 %v5202
        %5335 = vmatprep.subr.mxu0 %v5199
        %5336 = vmatpush1.msra.mxu0 %v5198
        %5337 = vmatprep.subr.mxu0 %v5195
        %5338 = vmatpush1.msra.mxu0 %v5194
        %5339 = vmatprep.subr.mxu0 %v5191
        %5340 = vmatpush1.msra.mxu0 %v5190
        %5341 = vmatprep.subr.mxu0 %v5187
        %5342 = vmatpush1.msra.mxu0 %v5186
        %5343 = vmatprep.subr.mxu0 %v5183
        %5344 = vmatpush1.msra.mxu0 %v5182
        %5345 = vmatprep.subr.mxu0 %v5179
        %5346 = vmatpush1.msra.mxu0 %v5178
        %5347 = vmatprep.subr.mxu0 %v5175
        %5348 = vmatpush1.msra.mxu0 %v5174
        %5349 = vmatprep.subr.mxu0 %v5171
        %5350 = vmatpush1.msra.mxu0 %v5170
        %5351 = vmatprep.subr.mxu0 %v5167
        %5352 = vmatpush1.msra.mxu0 %v5166
        %5353 = vmatprep.subr.mxu0 %v5163
        %5354 = vmatpush1.msra.mxu0 %v5162
        %5355 = vmatprep.subr.mxu0 %v5159
        %5356 = vmatpush1.msra.mxu0 %v5158
        %5357 = vmatprep.subr.mxu0 %v5155
        %5358 = vmatpush1.msra.mxu0 %v5154
        %5359 = vmatprep.subr.mxu0 %v5151
        %5360 = vmatpush1.msra.mxu0 %v5150
        %5361 = vmatprep.subr.mxu0 %v5147
        %5362 = vmatpush1.msra.mxu0 %v5146
        %5363 = vmatprep.subr.mxu0 %v5143
        %5364 = vmatpush1.msra.mxu0 %v5142
        %5365 = vmatprep.subr.mxu0 0.0
        %5366 = vmatpush2.msra.mxu0 0.0
        %5367 = vmatprep.subr.mxu0 0.0
        %5368 = vmatpush2.msra.mxu0 0.0
        %5369 = vmatprep.subr.mxu0 0.0
        %5370 = vmatpush2.msra.mxu0 0.0
        %5371 = vmatprep.subr.mxu0 0.0
        %5372 = vmatpush2.msra.mxu0 0.0
        %5373 = vmatprep.subr.mxu0 0.0
        %5374 = vmatpush2.msra.mxu0 0.0
        %5375 = vmatprep.subr.mxu0 0.0
        %5376 = vmatpush2.msra.mxu0 0.0
        %5377 = vmatprep.subr.mxu0 0.0
        %5378 = vmatpush2.msra.mxu0 0.0
        %5379 = vmatprep.subr.mxu0 0.0
        %5380 = vmatpush2.msra.mxu0 0.0
        %5381 = vmatprep.subr.mxu0 0.0
        %5382 = vmatpush2.msra.mxu0 0.0
        %5383 = vmatprep.subr.mxu0 0.0
        %5384 = vmatpush2.msra.mxu0 0.0
        %5385 = vmatprep.subr.mxu0 0.0
        %5386 = vmatpush2.msra.mxu0 0.0
        %5387 = vmatprep.subr.mxu0 0.0
        %5388 = vmatpush2.msra.mxu0 0.0
        %5389 = vmatprep.subr.mxu0 0.0
        %5390 = vmatpush2.msra.mxu0 0.0
        %5391 = vmatprep.subr.mxu0 0.0
        %5392 = vmatpush2.msra.mxu0 0.0
        %5393 = vmatprep.subr.mxu0 0.0
        %5394 = vmatpush2.msra.mxu0 0.0
        %5395 = vmatprep.subr.mxu0 0.0
        %5396 = vmatpush2.msra.mxu0 0.0
        %5397 = vmatprep.mubr.f32.mxu0 0.0
        %5398 = vmatmul.mubr.f32.gmra.mxu0 %v5260
        %v5399 = vpop.f32.mrf.mxu0
        %v5400 = vadd.f32 0.0, %v5399
        %v5401 = vpop.f32.mrf.mxu0
        %v5402 = vadd.f32 0.0, %v5401
        %5403 = vdwg.mxu0
        %v5408 = vcombine.low %v5329, %v5331
        %v5409 = vcombine.high %v5329, %v5331
        %v5410 = vcombine.low %v5400, %v5402
        %v5411 = vcombine.high %v5400, %v5402
        %v5413 = vunpack.c.l.s4 1966171168
        %v5414 = vunpack.c.0.s8 %v5413
        %v5415 = vlaneseq
        %v5416 = vshrl.u32 %v5415, 7
        %v5417 = vsub.s32 %v5414, %v5416
        %v5418 = vrot.slane %v5408, %v5417
        %v5420 = vunpack.c.l.s4 1966171168
        %v5421 = vunpack.c.0.s8 %v5420
        %v5422 = vlaneseq
        %v5423 = vshrl.u32 %v5422, 7
        %v5424 = vsub.s32 %v5421, %v5423
        %v5425 = vrot.slane %v5409, %v5424
        %v5427 = vunpack.c.l.s4 1966171168
        %v5428 = vunpack.c.0.s8 %v5427
        %v5429 = vlaneseq
        %v5430 = vshrl.u32 %v5429, 7
        %v5431 = vsub.s32 %v5428, %v5430
        %v5432 = vrot.slane %v5410, %v5431
        %v5434 = vunpack.c.l.s4 1966171168
        %v5435 = vunpack.c.0.s8 %v5434
        %v5436 = vlaneseq
        %v5437 = vshrl.u32 %v5436, 7
        %v5438 = vsub.s32 %v5435, %v5437
        %v5439 = vrot.slane %v5411, %v5438
        %v5440 = vcombine.low %v5418, %v5432
        %v5441 = vcombine.high %v5418, %v5432
        %v5442 = vcombine.low %v5425, %v5439
        %v5443 = vcombine.high %v5425, %v5439
        %v5445 = vunpack.c.l.s4 1966171168
        %v5446 = vunpack.c.0.s8 %v5445
        %v5447 = vlaneseq
        %v5448 = vshrl.u32 %v5447, 7
        %v5449 = vsub.s32 %v5446, %v5448
        %v5450 = vrot.slane %v5440, %v5449
        %v5452 = vunpack.c.l.s4 1966171168
        %v5453 = vunpack.c.0.s8 %v5452
        %v5454 = vlaneseq
        %v5455 = vshrl.u32 %v5454, 7
        %v5456 = vsub.s32 %v5453, %v5455
        %v5457 = vrot.slane %v5442, %v5456
        %v5459 = vunpack.c.l.s4 1966171168
        %v5460 = vunpack.c.0.s8 %v5459
        %v5461 = vlaneseq
        %v5462 = vshrl.u32 %v5461, 7
        %v5463 = vsub.s32 %v5460, %v5462
        %v5464 = vrot.slane %v5441, %v5463
        %v5466 = vunpack.c.l.s4 1966171168
        %v5467 = vunpack.c.0.s8 %v5466
        %v5468 = vlaneseq
        %v5469 = vshrl.u32 %v5468, 7
        %v5470 = vsub.s32 %v5467, %v5469
        %v5471 = vrot.slane %v5443, %v5470
        %v5472 = vcombine.high %v5450, %v5450
        %v5473 = vcombine.high %v5457, %v5457
        %v5474 = vcombine.high %v5464, %v5464
        %v5475 = vcombine.high %v5471, %v5471
        %v5484 = vadd.f32 %v5125, %v5450
        %v5485 = vadd.f32 %v5127, %v5464
        %v5486 = vadd.f32 %v5129, %v5472
        %v5487 = vadd.f32 %v5131, %v5474
        %v5488 = vadd.f32 %v5133, %v5457
        %v5489 = vadd.f32 %v5135, %v5471
        %v5490 = vadd.f32 %v5137, %v5473
        %v5491 = vadd.f32 %v5139, %v5475
        %v5492 = vxor.u32 %v5484, 2147483648
        %v5493 = vxor.u32 %v5485, 2147483648
        %v5494 = vxor.u32 %v5486, 2147483648
        %v5495 = vxor.u32 %v5487, 2147483648
        %v5496 = vxor.u32 %v5488, 2147483648
        %v5497 = vxor.u32 %v5489, 2147483648
        %v5498 = vxor.u32 %v5490, 2147483648
        %v5499 = vxor.u32 %v5491, 2147483648
        %v5500 = vmul.f32 %v5492, 1.442695
        %v5501 = vpow.pop %v5500
        %v5502 = vmul.f32 %v5493, 1.442695
        %v5503 = vpow.pop %v5502
        %v5504 = vmul.f32 %v5494, 1.442695
        %v5505 = vpow.pop %v5504
        %v5506 = vmul.f32 %v5495, 1.442695
        %v5507 = vpow.pop %v5506
        %v5508 = vmul.f32 %v5496, 1.442695
        %v5509 = vpow.pop %v5508
        %v5510 = vmul.f32 %v5497, 1.442695
        %v5511 = vpow.pop %v5510
        %v5512 = vmul.f32 %v5498, 1.442695
        %v5513 = vpow.pop %v5512
        %v5514 = vmul.f32 %v5499, 1.442695
        %v5515 = vpow.pop %v5514
        %v5516 = vadd.f32 %v5501, 1.0
        %v5517 = vadd.f32 %v5503, 1.0
        %v5518 = vadd.f32 %v5505, 1.0
        %v5519 = vadd.f32 %v5507, 1.0
        %v5520 = vadd.f32 %v5509, 1.0
        %v5521 = vadd.f32 %v5511, 1.0
        %v5522 = vadd.f32 %v5513, 1.0
        %v5523 = vadd.f32 %v5515, 1.0
        %v5524 = vrcp.pop %v5516
        %v5525 = vmul.f32 1.0, %v5524
        %v5526 = vrcp.pop %v5517
        %v5527 = vmul.f32 1.0, %v5526
        %v5528 = vrcp.pop %v5518
        %v5529 = vmul.f32 1.0, %v5528
        %v5530 = vrcp.pop %v5519
        %v5531 = vmul.f32 1.0, %v5530
        %v5532 = vrcp.pop %v5520
        %v5533 = vmul.f32 1.0, %v5532
        %v5534 = vrcp.pop %v5521
        %v5535 = vmul.f32 1.0, %v5534
        %v5536 = vrcp.pop %v5522
        %v5537 = vmul.f32 1.0, %v5536
        %v5538 = vrcp.pop %v5523
        %v5539 = vmul.f32 1.0, %v5538
        %v5548 = vrot.slane %v5484, 1
        %v5549 = vrot.slane %v5485, 1
        %v5550 = vrot.slane %v5486, 1
        %v5551 = vrot.slane %v5487, 1
        %v5552 = vrot.slane %v5488, 1
        %v5553 = vrot.slane %v5489, 1
        %v5554 = vrot.slane %v5490, 1
        %v5555 = vrot.slane %v5491, 1
        %v5564 = vxor.u32 %v5548, 2147483648
        %v5565 = vxor.u32 %v5549, 2147483648
        %v5566 = vxor.u32 %v5550, 2147483648
        %v5567 = vxor.u32 %v5551, 2147483648
        %v5568 = vxor.u32 %v5552, 2147483648
        %v5569 = vxor.u32 %v5553, 2147483648
        %v5570 = vxor.u32 %v5554, 2147483648
        %v5571 = vxor.u32 %v5555, 2147483648
        %v5572 = vmul.f32 %v5564, 1.442695
        %v5573 = vpow.pop %v5572
        %v5574 = vmul.f32 %v5565, 1.442695
        %v5575 = vpow.pop %v5574
        %v5576 = vmul.f32 %v5566, 1.442695
        %v5577 = vpow.pop %v5576
        %v5578 = vmul.f32 %v5567, 1.442695
        %v5579 = vpow.pop %v5578
        %v5580 = vmul.f32 %v5568, 1.442695
        %v5581 = vpow.pop %v5580
        %v5582 = vmul.f32 %v5569, 1.442695
        %v5583 = vpow.pop %v5582
        %v5584 = vmul.f32 %v5570, 1.442695
        %v5585 = vpow.pop %v5584
        %v5586 = vmul.f32 %v5571, 1.442695
        %v5587 = vpow.pop %v5586
        %v5588 = vadd.f32 %v5573, 1.0
        %v5589 = vadd.f32 %v5575, 1.0
        %v5590 = vadd.f32 %v5577, 1.0
        %v5591 = vadd.f32 %v5579, 1.0
        %v5592 = vadd.f32 %v5581, 1.0
        %v5593 = vadd.f32 %v5583, 1.0
        %v5594 = vadd.f32 %v5585, 1.0
        %v5595 = vadd.f32 %v5587, 1.0
        %v5596 = vrcp.pop %v5588
        %v5597 = vmul.f32 1.0, %v5596
        %v5598 = vrcp.pop %v5589
        %v5599 = vmul.f32 1.0, %v5598
        %v5600 = vrcp.pop %v5590
        %v5601 = vmul.f32 1.0, %v5600
        %v5602 = vrcp.pop %v5591
        %v5603 = vmul.f32 1.0, %v5602
        %v5604 = vrcp.pop %v5592
        %v5605 = vmul.f32 1.0, %v5604
        %v5606 = vrcp.pop %v5593
        %v5607 = vmul.f32 1.0, %v5606
        %v5608 = vrcp.pop %v5594
        %v5609 = vmul.f32 1.0, %v5608
        %v5610 = vrcp.pop %v5595
        %v5611 = vmul.f32 1.0, %v5610
        %v5612 = vrot.slane %v5484, 2
        %v5613 = vrot.slane %v5485, 2
        %v5614 = vrot.slane %v5486, 2
        %v5615 = vrot.slane %v5487, 2
        %v5616 = vrot.slane %v5488, 2
        %v5617 = vrot.slane %v5489, 2
        %v5618 = vrot.slane %v5490, 2
        %v5619 = vrot.slane %v5491, 2
        %v5628 = vtanh.pop %v5612
        %v5629 = vtanh.pop %v5613
        %v5630 = vtanh.pop %v5614
        %v5631 = vtanh.pop %v5615
        %v5632 = vtanh.pop %v5616
        %v5633 = vtanh.pop %v5617
        %v5634 = vtanh.pop %v5618
        %v5635 = vtanh.pop %v5619
        %v5636 = vrot.slane %v5484, 3
        %v5637 = vrot.slane %v5485, 3
        %v5638 = vrot.slane %v5486, 3
        %v5639 = vrot.slane %v5487, 3
        %v5640 = vrot.slane %v5488, 3
        %v5641 = vrot.slane %v5489, 3
        %v5642 = vrot.slane %v5490, 3
        %v5643 = vrot.slane %v5491, 3
        %v5652 = vxor.u32 %v5636, 2147483648
        %v5653 = vxor.u32 %v5637, 2147483648
        %v5654 = vxor.u32 %v5638, 2147483648
        %v5655 = vxor.u32 %v5639, 2147483648
        %v5656 = vxor.u32 %v5640, 2147483648
        %v5657 = vxor.u32 %v5641, 2147483648
        %v5658 = vxor.u32 %v5642, 2147483648
        %v5659 = vxor.u32 %v5643, 2147483648
        %v5660 = vmul.f32 %v5652, 1.442695
        %v5661 = vpow.pop %v5660
        %v5662 = vmul.f32 %v5653, 1.442695
        %v5663 = vpow.pop %v5662
        %v5664 = vmul.f32 %v5654, 1.442695
        %v5665 = vpow.pop %v5664
        %v5666 = vmul.f32 %v5655, 1.442695
        %v5667 = vpow.pop %v5666
        %v5668 = vmul.f32 %v5656, 1.442695
        %v5669 = vpow.pop %v5668
        %v5670 = vmul.f32 %v5657, 1.442695
        %v5671 = vpow.pop %v5670
        %v5672 = vmul.f32 %v5658, 1.442695
        %v5673 = vpow.pop %v5672
        %v5674 = vmul.f32 %v5659, 1.442695
        %v5675 = vpow.pop %v5674
        %v5676 = vadd.f32 %v5661, 1.0
        %v5677 = vadd.f32 %v5663, 1.0
        %v5678 = vadd.f32 %v5665, 1.0
        %v5679 = vadd.f32 %v5667, 1.0
        %v5680 = vadd.f32 %v5669, 1.0
        %v5681 = vadd.f32 %v5671, 1.0
        %v5682 = vadd.f32 %v5673, 1.0
        %v5683 = vadd.f32 %v5675, 1.0
        %v5684 = vrcp.pop %v5676
        %v5685 = vmul.f32 1.0, %v5684
        %v5686 = vrcp.pop %v5677
        %v5687 = vmul.f32 1.0, %v5686
        %v5688 = vrcp.pop %v5678
        %v5689 = vmul.f32 1.0, %v5688
        %v5690 = vrcp.pop %v5679
        %v5691 = vmul.f32 1.0, %v5690
        %v5692 = vrcp.pop %v5680
        %v5693 = vmul.f32 1.0, %v5692
        %v5694 = vrcp.pop %v5681
        %v5695 = vmul.f32 1.0, %v5694
        %v5696 = vrcp.pop %v5682
        %v5697 = vmul.f32 1.0, %v5696
        %v5698 = vrcp.pop %v5683
        %v5699 = vmul.f32 1.0, %v5698
        %v5700 = vmul.f32 %v5597, %v5092
        %v5701 = vmul.f32 %v5599, %v5093
        %v5702 = vmul.f32 %v5601, %v5094
        %v5703 = vmul.f32 %v5603, %v5095
        %v5704 = vmul.f32 %v5605, %v5096
        %v5705 = vmul.f32 %v5607, %v5097
        %v5706 = vmul.f32 %v5609, %v5098
        %v5707 = vmul.f32 %v5611, %v5099
        %v5708 = vmul.f32 %v5525, %v5628
        %v5709 = vmul.f32 %v5527, %v5629
        %v5710 = vmul.f32 %v5529, %v5630
        %v5711 = vmul.f32 %v5531, %v5631
        %v5712 = vmul.f32 %v5533, %v5632
        %v5713 = vmul.f32 %v5535, %v5633
        %v5714 = vmul.f32 %v5537, %v5634
        %v5715 = vmul.f32 %v5539, %v5635
        %v5716 = vadd.f32 %v5700, %v5708
        %v5717 = vadd.f32 %v5701, %v5709
        %v5718 = vadd.f32 %v5702, %v5710
        %v5719 = vadd.f32 %v5703, %v5711
        %v5720 = vadd.f32 %v5704, %v5712
        %v5721 = vadd.f32 %v5705, %v5713
        %v5722 = vadd.f32 %v5706, %v5714
        %v5723 = vadd.f32 %v5707, %v5715
        %v5724 = vtanh.pop %v5716
        %v5725 = vtanh.pop %v5717
        %v5726 = vtanh.pop %v5718
        %v5727 = vtanh.pop %v5719
        %v5728 = vtanh.pop %v5720
        %v5729 = vtanh.pop %v5721
        %v5730 = vtanh.pop %v5722
        %v5731 = vtanh.pop %v5723
        %v5732 = vmul.f32 %v5685, %v5724
        %v5733 = vmul.f32 %v5687, %v5725
        %v5734 = vmul.f32 %v5689, %v5726
        %v5735 = vmul.f32 %v5691, %v5727
        %v5736 = vmul.f32 %v5693, %v5728
        %v5737 = vmul.f32 %v5695, %v5729
        %v5738 = vmul.f32 %v5697, %v5730
        %v5739 = vmul.f32 %v5699, %v5731
        %5740 = vst [vmem:[%s411 + $0x7] sm:$0x1] %v5732
        %5741 = vst [vmem:[%s411 + $0xf] sm:$0x1] %v5733
        %5742 = vst [vmem:[%s411 + $0x17] sm:$0x1] %v5734
        %5743 = vst [vmem:[%s411 + $0x1f] sm:$0x1] %v5735
        %5744 = vst [vmem:[%s411 + $0x27] sm:$0x1] %v5736
        %5745 = vst [vmem:[%s411 + $0x2f] sm:$0x1] %v5737
        %5746 = vst [vmem:[%s411 + $0x37] sm:$0x1] %v5738
        %5747 = vst [vmem:[%s411 + $0x3f] sm:$0x1] %v5739
        %v5756 = vcombine.low %v5732, %v5733
        %v5757 = vcombine.low %v5734, %v5735
        %v5758 = vcombine.low %v5736, %v5737
        %v5759 = vcombine.low %v5738, %v5739
        %v5761 = vunpack.c.l.s4 1966171168
        %v5762 = vunpack.c.0.s8 %v5761
        %v5763 = vlaneseq
        %v5764 = vshrl.u32 %v5763, 7
        %v5765 = vsub.s32 %v5762, %v5764
        %v5766 = vrot.slane %v5756, %v5765
        %v5768 = vunpack.c.l.s4 1966171168
        %v5769 = vunpack.c.0.s8 %v5768
        %v5770 = vlaneseq
        %v5771 = vshrl.u32 %v5770, 7
        %v5772 = vsub.s32 %v5769, %v5771
        %v5773 = vrot.slane %v5757, %v5772
        %v5775 = vunpack.c.l.s4 1966171168
        %v5776 = vunpack.c.0.s8 %v5775
        %v5777 = vlaneseq
        %v5778 = vshrl.u32 %v5777, 7
        %v5779 = vsub.s32 %v5776, %v5778
        %v5780 = vrot.slane %v5758, %v5779
        %v5782 = vunpack.c.l.s4 1966171168
        %v5783 = vunpack.c.0.s8 %v5782
        %v5784 = vlaneseq
        %v5785 = vshrl.u32 %v5784, 7
        %v5786 = vsub.s32 %v5783, %v5785
        %v5787 = vrot.slane %v5759, %v5786
        %v5788 = vcombine.low %v5766, %v5773
        %v5789 = vcombine.low %v5780, %v5787
        %v5791 = vunpack.c.l.s4 1966171168
        %v5792 = vunpack.c.0.s8 %v5791
        %v5793 = vlaneseq
        %v5794 = vshrl.u32 %v5793, 7
        %v5795 = vsub.s32 %v5792, %v5794
        %v5796 = vrot.slane %v5788, %v5795
        %v5798 = vunpack.c.l.s4 1966171168
        %v5799 = vunpack.c.0.s8 %v5798
        %v5800 = vlaneseq
        %v5801 = vshrl.u32 %v5800, 7
        %v5802 = vsub.s32 %v5799, %v5801
        %v5803 = vrot.slane %v5789, %v5802
        %v5804 = vcombine.low %v5796, %v5803
        %5806 = vst [vmem:[#allocation13] sm:$0xff] %v5804
        %v5815 = vcombine.low %v5716, %v5717
        %v5816 = vcombine.low %v5718, %v5719
        %v5817 = vcombine.low %v5720, %v5721
        %v5818 = vcombine.low %v5722, %v5723
        %v5820 = vunpack.c.l.s4 1966171168
        %v5821 = vunpack.c.0.s8 %v5820
        %v5822 = vlaneseq
        %v5823 = vshrl.u32 %v5822, 7
        %v5824 = vsub.s32 %v5821, %v5823
        %v5825 = vrot.slane %v5815, %v5824
        %v5827 = vunpack.c.l.s4 1966171168
        %v5828 = vunpack.c.0.s8 %v5827
        %v5829 = vlaneseq
        %v5830 = vshrl.u32 %v5829, 7
        %v5831 = vsub.s32 %v5828, %v5830
        %v5832 = vrot.slane %v5816, %v5831
        %v5834 = vunpack.c.l.s4 1966171168
        %v5835 = vunpack.c.0.s8 %v5834
        %v5836 = vlaneseq
        %v5837 = vshrl.u32 %v5836, 7
        %v5838 = vsub.s32 %v5835, %v5837
        %v5839 = vrot.slane %v5817, %v5838
        %v5841 = vunpack.c.l.s4 1966171168
        %v5842 = vunpack.c.0.s8 %v5841
        %v5843 = vlaneseq
        %v5844 = vshrl.u32 %v5843, 7
        %v5845 = vsub.s32 %v5842, %v5844
        %v5846 = vrot.slane %v5818, %v5845
        %v5847 = vcombine.low %v5825, %v5832
        %v5848 = vcombine.low %v5839, %v5846
        %v5850 = vunpack.c.l.s4 1966171168
        %v5851 = vunpack.c.0.s8 %v5850
        %v5852 = vlaneseq
        %v5853 = vshrl.u32 %v5852, 7
        %v5854 = vsub.s32 %v5851, %v5853
        %v5855 = vrot.slane %v5847, %v5854
        %v5857 = vunpack.c.l.s4 1966171168
        %v5858 = vunpack.c.0.s8 %v5857
        %v5859 = vlaneseq
        %v5860 = vshrl.u32 %v5859, 7
        %v5861 = vsub.s32 %v5858, %v5860
        %v5862 = vrot.slane %v5848, %v5861
        %v5863 = vcombine.low %v5855, %v5862
        %5865 = vst [vmem:[#allocation15] sm:$0xff] %v5863
        %s5866 = sand.u32 %s194, 1
        %s5867 = scalar_lea.sflag [#allocation5], %s5866
        %s5868 = sand.u32 %s194, 1
        %s5869 = smul.addr %s5868, 64
        %s5870 = scalar_lea.vmem [#allocation12], %s5869
        // Predicated region
        $region69: #{tpu_custom_call.1} parent=43 // pred_check
          %p5871 = pneg %p204
        $region70: #{tpu_custom_call.1} parent=43 // pred_check_branch
          %5873 = sbr.rel (%p5871) target = $region72
        $region71: #{tpu_custom_call.1} parent=43 // pred_region
          %s5874 = smul.u32 8, %s33
          %s5876 = ssub.s32 1024, 1024
          %5877 = vsyncadd %s5867, %s5876
          %s5878 = smul.addr %s5874, 2
          %s5879 = sadd.s32 %s34, %s5878
          %s5880 = smul.addr %s5879, 128
          %s5881 = scalar_lea.hbm %s6, %s5880
          %s5882 = sshll.u32 %s5870, 4
          %s5883 = int_to_ptr.vmem [resolvable:$true] %s5882
          %5888 = dma.vmem_to_hbm [thread:$0]  %s5883, 1024, %s5881, %s5867, 128, 256, 8
        $region72: #{tpu_custom_call.1} parent=43 // pred_fallthru
          _
        // Predicated region
        $region73: #{tpu_custom_call.1} parent=43 // pred_check
          %p5889 = pneg %p230
        $region74: #{tpu_custom_call.1} parent=43 // pred_check_branch
          %5891 = sbr.rel (%p5889) target = $region76
        $region75: #{tpu_custom_call.1} parent=43 // pred_region
          %s5893 = ssub.s32 128, 128
          %5894 = vsyncadd [#allocation14], %s5893
          %s5895 = smul.addr %s33, 128
          %s5896 = scalar_lea.hbm %s7, %s5895
          %s5898 = sshll.u32 [#allocation13], 4
          %s5899 = int_to_ptr.vmem [resolvable:$true] %s5898
          %5901 = dma.vmem_to_hbm [thread:$0]  %s5899, 128, %s5896, [#allocation14]
        $region76: #{tpu_custom_call.1} parent=43 // pred_fallthru
          _
        // Predicated region
        $region77: #{tpu_custom_call.1} parent=43 // pred_check
          %p5902 = pneg %p256
        $region78: #{tpu_custom_call.1} parent=43 // pred_check_branch
          %5904 = sbr.rel (%p5902) target = $region80
        $region79: #{tpu_custom_call.1} parent=43 // pred_region
          %s5906 = ssub.s32 128, 128
          %5907 = vsyncadd [#allocation14], %s5906
          %s5908 = smul.addr %s33, 128
          %s5909 = scalar_lea.hbm %s8, %s5908
          %s5911 = sshll.u32 [#allocation15], 4
          %s5912 = int_to_ptr.vmem [resolvable:$true] %s5911
          %5914 = dma.vmem_to_hbm [thread:$0]  %s5912, 128, %s5909, [#allocation14]
        $region80: #{tpu_custom_call.1} parent=43 // pred_fallthru
          _
        // Predicated region
        $region81: #{tpu_custom_call.1} parent=43 // pred_check
          %p5915 = pneg %p230
        $region82: #{tpu_custom_call.1} parent=43 // pred_check_branch
          %5917 = sbr.rel (%p5915) target = $region84
        $region83: #{tpu_custom_call.1} parent=43 // pred_region
          %5918 = dma.done [#allocation14], 128
        $region84: #{tpu_custom_call.1} parent=43 // pred_fallthru
          _
        // Predicated region
        $region85: #{tpu_custom_call.1} parent=43 // pred_check
          %p5919 = pneg %p256
        $region86: #{tpu_custom_call.1} parent=43 // pred_check_branch
          %5921 = sbr.rel (%p5919) target = $region88
        $region87: #{tpu_custom_call.1} parent=43 // pred_region
          %5922 = dma.done [#allocation14], 128
        $region88: #{tpu_custom_call.1} parent=43 // pred_fallthru
          _
      $region44: #{tpu_custom_call.1} parent=5 // pred_fallthru
        _
      %p5923 = scmp.le.s32.totalorder 2, %s24
      // Predicated region
      $region89: #{tpu_custom_call.1} parent=5 // pred_check
        %p5924 = pneg %p5923
      $region90: #{tpu_custom_call.1} parent=5 // pred_check_branch
        %5926 = sbr.rel (%p5924) target = $region92
      $region91: #{tpu_custom_call.1} parent=5 // pred_region
        %s5927 = ssub.s32 %s24, 2
        // Predicated region
        $region93: #{tpu_custom_call.1} parent=91 // pred_check
          %p5928 = pneg %p210
        $region94: #{tpu_custom_call.1} parent=91 // pred_check_branch
          %5930 = sbr.rel (%p5928) target = $region96
        $region95: #{tpu_custom_call.1} parent=91 // pred_region
          %s5931 = sand.u32 %s195, 1
          %s5932 = scalar_lea.sflag [#allocation5], %s5931
          %s5933 = sand.u32 %s195, 1
          %s5934 = smul.addr %s5933, 64
          %s5935 = scalar_lea.vmem [#allocation12], %s5934
          %5936 = dma.done %s5932, 1024
        $region96: #{tpu_custom_call.1} parent=91 // pred_fallthru
          _
      $region92: #{tpu_custom_call.1} parent=5 // pred_fallthru
        _
    $region6: #{tpu_custom_call.1} parent=1 // loop_footer
      %s28 = sadd.s32 1, %s24
    $region7: #{tpu_custom_call.1} parent=1 // loop_footer_branch
      %23 = sbr.rel target = $region3
    $region8: #{tpu_custom_call.1} parent=1 // loop_exit
      _
    %5937 = vsyncpa [#allocation4], 1
    %s5938 = scalar_lea.sflag [#allocation4], 1
    %5939 = vsyncpa %s5938, 1
    %5940 = vsyncpa [#allocation7], 1
    %5941 = vsyncpa [#allocation10], 1
    %5942 = vsyncpa [#allocation5], 1
    %s5943 = scalar_lea.sflag [#allocation5], 1
    %5944 = vsyncpa %s5943, 1
    %5945 = vsyncpa [#allocation14], 1

</llo_original>
